<compile_context>
chip_gen: v7x
topology: tpu7x:2x2x1
jax: 0.10.0
libtpu: 0.0.40
codegen_flags: <defaults>
</compile_context>

<pallas_src>
import functools

import jax
import jax.numpy as jnp
from jax import lax
from jax.experimental import pallas as pl
from jax.experimental.pallas import tpu as pltpu


# ---------------------------------------------------------------------------
# Trace-time helpers (all shapes / offsets are Python ints).
# ---------------------------------------------------------------------------
def _pad_rows(v, lo, hi):
    """Zero-pad a (L, C) activation along the row (time) axis."""
    parts = []
    if lo > 0:
        parts.append(jnp.zeros((lo, v.shape[1]), v.dtype))
    parts.append(v)
    if hi > 0:
        parts.append(jnp.zeros((hi, v.shape[1]), v.dtype))
    return jnp.concatenate(parts, axis=0) if len(parts) > 1 else v


def _convT_taps(*, K, stride, pad):
    """Polyphase tap structure of a ConvTranspose1d (length-independent)."""
    phases = []
    for r in range(stride):
        taps = []
        for k in range(K):
            t = r + pad - k
            if t % stride == 0:
                taps.append((t // stride, k))        # (input offset d, tap k)
        taps.sort()
        assert taps, "transposed-conv phase with no taps is unsupported"
        phases.append(tuple(taps))
    return tuple(phases)


def _convT_meta(*, K, stride, pad, out_pad, n_in):
    """Static polyphase decomposition metadata for a given input length."""
    tap_struct = _convT_taps(K=K, stride=stride, pad=pad)
    n_out = (n_in - 1) * stride - 2 * pad + K + out_pad
    phases, lo, hi = [], 0, 0
    for r, taps in enumerate(tap_struct):
        n_rows = (n_out - r + stride - 1) // stride
        ds = [d for d, _ in taps]
        lo = max(lo, -min(ds))
        hi = max(hi, max(ds) + n_rows - n_in)
        phases.append(dict(n_rows=n_rows, taps=taps))
    return dict(K=K, stride=stride, n_in=n_in, n_out=n_out,
                lo=max(lo, 0), hi=max(hi, 0), phases=tuple(phases))


# ---------------------------------------------------------------------------
# In-kernel building blocks.
# ---------------------------------------------------------------------------
def _zero_rows(ref, start, n):
    if n > 0:
        ref[start:start + n, :] = jnp.zeros((n, ref.shape[1]), ref.dtype)


def _conv1d(x, w_flat, bias, *, K, pad, relu):
    """Stride-1 Conv1d via im2col + single bf16 matmul (f32 accumulation)."""
    n_out = x.shape[0] + 2 * pad - K + 1
    xp = _pad_rows(x.astype(jnp.bfloat16), pad, pad)
    slabs = [xp[k:k + n_out, :] for k in range(K)]
    slab = slabs[0] if K == 1 else jnp.concatenate(slabs, axis=1)
    y = jnp.dot(slab, w_flat, preferred_element_type=jnp.float32)
    if bias is not None:
        y = y + bias
    if relu:
        y = jnp.maximum(y, 0.0)
    return y


def _strided_conv(x, pad_ref, w_flat, bias, *, K, pad, stride, relu):
    """Strided Conv1d: stage the padded input in VMEM, gather each tap with a
    strided sublane read (space-to-depth), one im2col matmul."""
    L, _ = x.shape
    n_out = (L + 2 * pad - K) // stride + 1
    _zero_rows(pad_ref, 0, pad)
    _zero_rows(pad_ref, pad + L, pad)
    pad_ref[pad:pad + L, :] = x
    slabs = [pad_ref[pl.ds(k, n_out, stride=stride), :] for k in range(K)]
    slab = jnp.concatenate(slabs, axis=1).astype(jnp.bfloat16)
    y = jnp.dot(slab, w_flat, preferred_element_type=jnp.float32) + bias
    if relu:
        y = jnp.maximum(y, 0.0)
    return y


def _group_norm(v, proj, gamma, beta, *, group_size, eps):
    """GroupNorm via column sums + one (C, C) same-group 0/1 projection."""
    cnt = float(v.shape[0] * group_size)
    s1 = jnp.sum(v, axis=0, keepdims=True)
    s2 = jnp.sum(v * v, axis=0, keepdims=True)
    mean = jnp.dot(s1, proj, preferred_element_type=jnp.float32) / cnt
    msq = jnp.dot(s2, proj, preferred_element_type=jnp.float32) / cnt
    var = jnp.maximum(msq - mean * mean, 0.0)
    return (v - mean) * lax.rsqrt(var + eps) * gamma + beta


def _conv_transpose(xp, phase_ws, bias, out_ref, *, out_off, meta, relu):
    """Polyphase ConvTranspose1d: one im2col matmul per phase, phase rows
    interleaved into `out_ref` with strided stores (no zero-stuffing)."""
    lo, stride = meta["lo"], meta["stride"]
    for r, ph in enumerate(meta["phases"]):
        n_rows = ph["n_rows"]
        slabs = [xp[d + lo:d + lo + n_rows, :] for d, _ in ph["taps"]]
        slab = slabs[0] if len(slabs) == 1 else jnp.concatenate(slabs, axis=1)
        y = jnp.dot(slab, phase_ws[r], preferred_element_type=jnp.float32) + bias
        if relu:
            y = jnp.maximum(y, 0.0)
        out_ref[pl.ds(out_off + r, n_rows, stride=stride), :] = y


# ---------------------------------------------------------------------------
# Fully fused per-batch kernel: encoder -> VQ -> behavior head -> decoder.
# ---------------------------------------------------------------------------
def _vqvae_kernel(
    x_ref,
    ew1, eb1, ew2, eb2, ew3, eb3,
    rg1, rb1, rw1, rg2, rb2, rw2, p1, p2, pvq_w, pvq_b,
    emb, e2,
    t1p0, t1p1, t1b, t2p0, t2p1, t2b, dw3, db3,
    bw1, bb1, bw2, bb2, bw3, bb3,
    xr_ref, qout_ref, enc_ref, bh_ref, losssum_ref, cnt_ref,
    s_e1, s_e2, s_d1, s_d2,
    *, n_res, groups, eps, meta_t1, meta_t2):
    # ---------------- encoder ----------------
    x = jnp.transpose(x_ref[0])                                    # (T, Cn)
    h = _conv1d(x, ew1[...], eb1[...], K=7, pad=3, relu=True)      # (T, H/4)
    h = _strided_conv(h, s_e1, ew2[...], eb2[...],
                      K=5, pad=2, stride=2, relu=True)             # (T/2, H/2)
    h = _strided_conv(h, s_e2, ew3[...], eb3[...],
                      K=3, pad=1, stride=2, relu=False)            # (T/4, H)

    proj1, proj2 = p1[...], p2[...]
    H = h.shape[1]
    for i in range(n_res):
        t = jnp.maximum(_group_norm(h, proj1, rg1[i], rb1[i],
                                    group_size=H // groups, eps=eps), 0.0)
        t = _conv1d(t, rw1[i], None, K=3, pad=1, relu=False)       # (T/4, R)
        t = jnp.maximum(_group_norm(t, proj2, rg2[i], rb2[i],
                                    group_size=t.shape[1] // groups, eps=eps),
                        0.0)
        t = jnp.dot(t.astype(jnp.bfloat16), rw2[i],
                    preferred_element_type=jnp.float32)            # (T/4, H)
        h = h + t

    # pre-VQ 1x1 conv (Dropout1d == identity in eval mode)
    z = jnp.dot(h.astype(jnp.bfloat16), pvq_w[...],
                preferred_element_type=jnp.float32) + pvq_b[...]   # (T/4, D)

    # ---------------- vector quantizer ----------------
    e = emb[...]                                                   # (Kc, D)
    n_codes = e.shape[0]
    x2 = jnp.sum(z * z, axis=1, keepdims=True)
    xe = lax.dot_general(z, e, (((1,), (1,)), ((), ())),
                         preferred_element_type=jnp.float32)       # (T/4, Kc)
    d = x2 + e2[...] - 2.0 * xe
    dmin = jnp.min(d, axis=1, keepdims=True)
    col = lax.broadcasted_iota(jnp.int32, d.shape, 1).astype(jnp.float32)
    idx = jnp.min(jnp.where(d == dmin, col, float(n_codes)),
                  axis=1, keepdims=True)
    enc = (col == idx).astype(jnp.float32)                         # one-hot
    q = jnp.dot(enc, e, preferred_element_type=jnp.float32)        # ST forward
    diff = q - z
    losssum_ref[0] = jnp.sum(jnp.sum(diff * diff, axis=1, keepdims=True),
                             axis=0, keepdims=True)                # (1, 1)
    cnt_ref[0] = jnp.sum(enc, axis=0, keepdims=True)               # (1, Kc)
    enc_ref[0] = enc
    qout_ref[0] = jnp.transpose(q)                                 # (D, T/4)
    # TODO(synk): training-mode EMA codebook / cluster-size / codebook-usage
    # buffer updates are not implemented (forward outputs unaffected).

    # ---------------- behavior head (Dropout == identity) ----------------
    pooled = jnp.mean(q, axis=0, keepdims=True)                    # (1, D)
    hb = jnp.maximum(jnp.dot(pooled, bw1[...],
                             preferred_element_type=jnp.float32) + bb1[...], 0.0)
    hb = jnp.maximum(jnp.dot(hb, bw2[...],
                             preferred_element_type=jnp.float32) + bb2[...], 0.0)
    bh_ref[0] = jnp.dot(hb, bw3[...],
                        preferred_element_type=jnp.float32) + bb3[...]

    # ---------------- decoder ----------------
    L2 = meta_t1["n_out"]                 # T/2
    Td = meta_t2["n_out"]                 # T
    # ConvT(k3,s2,p1,op1) + ReLU, interleaved straight into the padded staging
    # buffer that the next transposed conv reads.
    _zero_rows(s_d1, 0, meta_t2["lo"])
    _zero_rows(s_d1, meta_t2["lo"] + L2, meta_t2["hi"])
    qp = _pad_rows(q.astype(jnp.bfloat16), meta_t1["lo"], meta_t1["hi"])
    _conv_transpose(qp, [t1p0[...], t1p1[...]], t1b[...], s_d1,
                    out_off=meta_t2["lo"], meta=meta_t1, relu=True)

    # ConvT(k5,s2,p2,op1) + ReLU, interleaved into the padded staging buffer
    # for the final K=7 conv (pad 3 each side).
    _zero_rows(s_d2, 0, 3)
    _zero_rows(s_d2, 3 + Td, 3)
    _conv_transpose(s_d1[...].astype(jnp.bfloat16), [t2p0[...], t2p1[...]],
                    t2b[...], s_d2, out_off=3, meta=meta_t2, relu=True)

    # Final Conv1d(k7, s1, p3); store channel-major (lane-dense).
    d2p = s_d2[...].astype(jnp.bfloat16)                           # (T+6, H/2)
    slab = jnp.concatenate([d2p[k:k + Td, :] for k in range(7)], axis=1)
    xr = jnp.dot(slab, dw3[...], preferred_element_type=jnp.float32) + db3[...]
    xr_ref[0] = jnp.transpose(xr)                                  # (Cn, T)


# ---------------------------------------------------------------------------
# Full forward pass (single pallas_call + trivial wrapper reductions).
# ---------------------------------------------------------------------------
def forward(packed, x_ncl, *, commitment_cost):
    B, Cn, T = x_ncl.shape
    # TODO(synk): F.interpolate fallback for T % 4 != 0 is not implemented.
    assert T % 4 == 0
    L4 = T // 4
    Kc, D = packed["embedding"].shape
    Bdim = packed["bh_b3"].shape[1]
    n_res = packed["rw1"].shape[0]
    H4 = packed["enc_w1"].shape[1]
    H2 = packed["enc_w2"].shape[1]
    H = packed["enc_w3"].shape[1]

    meta_t1 = _convT_meta(K=3, stride=2, pad=1, out_pad=1, n_in=L4)
    meta_t2 = _convT_meta(K=5, stride=2, pad=2, out_pad=1, n_in=meta_t1["n_out"])
    assert meta_t2["n_out"] == T

    weights = (
        packed["enc_w1"], packed["enc_b1"], packed["enc_w2"], packed["enc_b2"],
        packed["enc_w3"], packed["enc_b3"],
        packed["rg1"], packed["rbe1"], packed["rw1"],
        packed["rg2"], packed["rbe2"], packed["rw2"],
        packed["P1"], packed["P2"], packed["pvq_w"], packed["pvq_b"],
        packed["embedding"], packed["e2"],
        packed["dt1_p0"], packed["dt1_p1"], packed["dt1_b"],
        packed["dt2_p0"], packed["dt2_p1"], packed["dt2_b"],
        packed["dec_w3"], packed["dec_b3"],
        packed["bh_w1"], packed["bh_b1"], packed["bh_w2"], packed["bh_b2"],
        packed["bh_w3"], packed["bh_b3"],
    )

    def wspec(a):
        return pl.BlockSpec(a.shape, lambda b, _n=a.ndim: (0,) * _n)

    out_shape = (
        jax.ShapeDtypeStruct((B, Cn, T), jnp.float32),    # x_recon (channel-major)
        jax.ShapeDtypeStruct((B, D, L4), jnp.float32),    # quantized (channel-major)
        jax.ShapeDtypeStruct((B, L4, Kc), jnp.float32),   # one-hot encodings
        jax.ShapeDtypeStruct((B, 1, Bdim), jnp.float32),  # behavior head
        jax.ShapeDtypeStruct((B, 1, 1), jnp.float32),     # per-batch sum((q-z)^2)
        jax.ShapeDtypeStruct((B, 1, Kc), jnp.float32),    # per-batch code counts
    )
    out_specs = (
        pl.BlockSpec((1, Cn, T), lambda b: (b, 0, 0)),
        pl.BlockSpec((1, D, L4), lambda b: (b, 0, 0)),
        pl.BlockSpec((1, L4, Kc), lambda b: (b, 0, 0)),
        pl.BlockSpec((1, 1, Bdim), lambda b: (b, 0, 0)),
        pl.BlockSpec((1, 1, 1), lambda b: (b, 0, 0)),
        pl.BlockSpec((1, 1, Kc), lambda b: (b, 0, 0)),
    )
    # TODO(synk): for very long T, add a time grid axis with (K-1)-row halos so
    # per-step blocks stay a few MiB on v7x (64 MiB VMEM/TC).
    scratch_shapes = [
        pltpu.VMEM((T + 4, H4), jnp.float32),                                 # conv2 stage
        pltpu.VMEM((T // 2 + 2, H2), jnp.float32),                            # conv3 stage
        pltpu.VMEM((meta_t1["n_out"] + meta_t2["lo"] + meta_t2["hi"], H),
                   jnp.float32),                                              # convT2 stage
        pltpu.VMEM((T + 6, H2), jnp.float32),                                 # final conv stage
    ]

    kernel = functools.partial(_vqvae_kernel, n_res=n_res, groups=8, eps=1e-5,
                               meta_t1=meta_t1, meta_t2=meta_t2)
    outs = pl.pallas_call(
        kernel,
        out_shape=out_shape,
        grid=(B,),
        in_specs=[pl.BlockSpec((1, Cn, T), lambda b: (b, 0, 0))]
                 + [wspec(a) for a in weights],
        out_specs=out_specs,
        scratch_shapes=scratch_shapes,
        compiler_params=pltpu.CompilerParams(
            dimension_semantics=("parallel",),
            vmem_limit_bytes=32 * 1024 * 1024),
    )(x_ncl, *weights)

    x_recon, quantized, enc_b, bh_b, losssum_b, cnt_b = outs

    n_flat = B * L4
    loss = commitment_cost * jnp.sum(losssum_b) / (n_flat * D)
    avg = jnp.sum(cnt_b, axis=(0, 1)) / n_flat
    perplexity = jnp.exp(-jnp.sum(avg * jnp.log(avg + 1e-10)))
    encodings = enc_b.reshape(n_flat, Kc)
    behavior_pred = bh_b.reshape(B, Bdim)
    return loss, x_recon, perplexity, quantized, encodings, behavior_pred


# ---------------------------------------------------------------------------
# Parameter construction (synthetic, deterministic) and kernel-ready packing.
# ---------------------------------------------------------------------------
def init_params(key, *, num_neurons, num_hiddens, num_residual_layers,
                num_residual_hiddens, num_embeddings, embedding_dim,
                behavior_dim):
    keys = iter(jax.random.split(key, 64))

    def nrm(shape, scale=0.1):
        return scale * jax.random.normal(next(keys), shape, jnp.float32)

    H4, H2, H = num_hiddens // 4, num_hiddens // 2, num_hiddens
    R = num_residual_hiddens
    D = embedding_dim

    p = dict(
        enc_w1=nrm((7, num_neurons, H4)), enc_b1=nrm((H4,)),
        enc_w2=nrm((5, H4, H2)), enc_b2=nrm((H2,)),
        enc_w3=nrm((3, H2, H)), enc_b3=nrm((H,)),
        prevq_w=nrm((1, H, D)), prevq_b=nrm((D,)),
        embedding=jax.random.normal(next(keys), (num_embeddings, D), jnp.float32),
        dec_wt1=nrm((D, H, 3)), dec_bt1=nrm((H,)),      # ConvTranspose1d (Cin,Cout,K)
        dec_wt2=nrm((H, H2, 5)), dec_bt2=nrm((H2,)),
        dec_w3=nrm((7, H2, num_neurons)), dec_b3=nrm((num_neurons,)),
        bh_w1=nrm((D, 128)), bh_b1=nrm((1, 128)),
        bh_w2=nrm((128, 64)), bh_b2=nrm((1, 64)),
        bh_w3=nrm((64, behavior_dim)), bh_b3=nrm((1, behavior_dim)),
    )
    res = []
    for _ in range(num_residual_layers):
        res.append(dict(
            g1=1.0 + nrm((1, H)), b1=nrm((1, H)),
            w1=nrm((3, H, R)),
            g2=1.0 + nrm((1, R)), b2=nrm((1, R)),
            w2=nrm((1, R, H)),
        ))
    p["res_blocks"] = res
    return p


def pack_params(p):
    """Convert PyTorch-layout params to kernel-ready arrays: conv weights
    flattened to (K*Cin, Cout) and pre-cast to bf16, transposed-conv weights
    split into per-phase (taps*Cin, Cout) bf16 blocks, resblock params stacked
    per layer, GroupNorm same-group projections and codebook ||e||^2
    precomputed.  Biases / GN / codebook / MLP weights stay f32."""
    def flat_conv(w):                       # (K, Cin, Cout) -> (K*Cin, Cout)
        K, ci, co = w.shape
        return w.reshape(K * ci, co).astype(jnp.bfloat16)

    def convT_phase_w(w, *, K, stride, pad):  # (Cin, Cout, K) -> per-phase bf16
        return [jnp.concatenate([w[:, :, k] for _, k in taps],
                                axis=0).astype(jnp.bfloat16)
                for taps in _convT_taps(K=K, stride=stride, pad=pad)]

    def gproj(C, G=8):                      # (C, C) same-group 0/1 projection
        g = jnp.arange(C) // (C // G)
        return (g[:, None] == g[None, :]).astype(jnp.float32)

    H = p["enc_w3"].shape[2]
    R = p["res_blocks"][0]["w1"].shape[2]
    rbs = p["res_blocks"]
    t1 = convT_phase_w(p["dec_wt1"], K=3, stride=2, pad=1)
    t2 = convT_phase_w(p["dec_wt2"], K=5, stride=2, pad=2)
    return dict(
        enc_w1=flat_conv(p["enc_w1"]), enc_b1=p["enc_b1"].reshape(1, -1),
        enc_w2=flat_conv(p["enc_w2"]), enc_b2=p["enc_b2"].reshape(1, -1),
        enc_w3=flat_conv(p["enc_w3"]), enc_b3=p["enc_b3"].reshape(1, -1),
        pvq_w=p["prevq_w"][0].astype(jnp.bfloat16),
        pvq_b=p["prevq_b"].reshape(1, -1),
        embedding=p["embedding"],
        e2=jnp.sum(p["embedding"] * p["embedding"], axis=1).reshape(1, -1),
        dt1_p0=t1[0], dt1_p1=t1[1], dt1_b=p["dec_bt1"].reshape(1, -1),
        dt2_p0=t2[0], dt2_p1=t2[1], dt2_b=p["dec_bt2"].reshape(1, -1),
        dec_w3=flat_conv(p["dec_w3"]), dec_b3=p["dec_b3"].reshape(1, -1),
        bh_w1=p["bh_w1"], bh_b1=p["bh_b1"], bh_w2=p["bh_w2"],
        bh_b2=p["bh_b2"], bh_w3=p["bh_w3"], bh_b3=p["bh_b3"],
        P1=gproj(H), P2=gproj(R),
        rg1=jnp.stack([r["g1"] for r in rbs]),                 # (n, 1, H)
        rbe1=jnp.stack([r["b1"] for r in rbs]),
        rw1=jnp.stack([flat_conv(r["w1"]) for r in rbs]),      # (n, 3H, R) bf16
        rg2=jnp.stack([r["g2"] for r in rbs]),                 # (n, 1, R)
        rbe2=jnp.stack([r["b2"] for r in rbs]),
        rw2=jnp.stack([r["w2"][0].astype(jnp.bfloat16)
                       for r in rbs]),                         # (n, R, H) bf16
    )


if __name__ == "__main__":
    B, num_neurons, T = 2, 16, 16
    num_hiddens, num_residual_layers, num_residual_hiddens = 32, 2, 16
    num_embeddings, embedding_dim = 32, 16
    commitment_cost, behavior_dim = 0.25, 4

    key = jax.random.PRNGKey(0)
    kp, kx = jax.random.split(key)
    params = init_params(
        kp, num_neurons=num_neurons, num_hiddens=num_hiddens,
        num_residual_layers=num_residual_layers,
        num_residual_hiddens=num_residual_hiddens,
        num_embeddings=num_embeddings, embedding_dim=embedding_dim,
        behavior_dim=behavior_dim)
    packed = pack_params(params)
    x = jax.random.normal(kx, (B, num_neurons, T), jnp.float32)

    fwd = jax.jit(functools.partial(forward, commitment_cost=commitment_cost))
    out = jax.block_until_ready(fwd(packed, x))
    loss, x_recon, perplexity, quantized, encodings, behavior_pred = out

    assert x_recon.shape == (B, num_neurons, T)
    assert quantized.shape == (B, embedding_dim, T // 4)
    assert encodings.shape == (B * (T // 4), num_embeddings)
    assert behavior_pred.shape == (B, behavior_dim)
    assert bool(jnp.isfinite(loss)) and bool(jnp.isfinite(perplexity))
    assert bool(jnp.all(jnp.isfinite(x_recon)))
    assert bool(jnp.all(jnp.sum(encodings, axis=1) == 1.0))
    print("KERNEL_OK")
</pallas_src>

<mosaic_0001>
module attributes {stable_mosaic.version = 11 : i64} {
  func.func @_vqvae_kernel(%arg0: i32, %arg1: memref<1x16x16xf32, #tpu.memory_space<vmem>>, %arg2: memref<112x8xbf16, #tpu.memory_space<vmem>>, %arg3: memref<1x8xf32, #tpu.memory_space<vmem>>, %arg4: memref<40x16xbf16, #tpu.memory_space<vmem>>, %arg5: memref<1x16xf32, #tpu.memory_space<vmem>>, %arg6: memref<48x32xbf16, #tpu.memory_space<vmem>>, %arg7: memref<1x32xf32, #tpu.memory_space<vmem>>, %arg8: memref<2x1x32xf32, #tpu.memory_space<vmem>>, %arg9: memref<2x1x32xf32, #tpu.memory_space<vmem>>, %arg10: memref<2x96x16xbf16, #tpu.memory_space<vmem>>, %arg11: memref<2x1x16xf32, #tpu.memory_space<vmem>>, %arg12: memref<2x1x16xf32, #tpu.memory_space<vmem>>, %arg13: memref<2x16x32xbf16, #tpu.memory_space<vmem>>, %arg14: memref<32x32xf32, #tpu.memory_space<vmem>>, %arg15: memref<16x16xf32, #tpu.memory_space<vmem>>, %arg16: memref<32x16xbf16, #tpu.memory_space<vmem>>, %arg17: memref<1x16xf32, #tpu.memory_space<vmem>>, %arg18: memref<32x16xf32, #tpu.memory_space<vmem>>, %arg19: memref<1x32xf32, #tpu.memory_space<vmem>>, %arg20: memref<16x32xbf16, #tpu.memory_space<vmem>>, %arg21: memref<32x32xbf16, #tpu.memory_space<vmem>>, %arg22: memref<1x32xf32, #tpu.memory_space<vmem>>, %arg23: memref<96x16xbf16, #tpu.memory_space<vmem>>, %arg24: memref<64x16xbf16, #tpu.memory_space<vmem>>, %arg25: memref<1x16xf32, #tpu.memory_space<vmem>>, %arg26: memref<112x16xbf16, #tpu.memory_space<vmem>>, %arg27: memref<1x16xf32, #tpu.memory_space<vmem>>, %arg28: memref<16x128xf32, #tpu.memory_space<vmem>>, %arg29: memref<1x128xf32, #tpu.memory_space<vmem>>, %arg30: memref<128x64xf32, #tpu.memory_space<vmem>>, %arg31: memref<1x64xf32, #tpu.memory_space<vmem>>, %arg32: memref<64x4xf32, #tpu.memory_space<vmem>>, %arg33: memref<1x4xf32, #tpu.memory_space<vmem>>, %arg34: memref<1x16x16xf32, #tpu.memory_space<vmem>>, %arg35: memref<1x16x4xf32, #tpu.memory_space<vmem>>, %arg36: memref<1x4x32xf32, #tpu.memory_space<vmem>>, %arg37: memref<1x1x4xf32, #tpu.memory_space<vmem>>, %arg38: memref<1x1x1xf32, #tpu.memory_space<vmem>>, %arg39: memref<1x1x32xf32, #tpu.memory_space<vmem>>, %arg40: memref<20x8xf32, #tpu.memory_space<vmem>>, %arg41: memref<10x16xf32, #tpu.memory_space<vmem>>, %arg42: memref<10x32xf32, #tpu.memory_space<vmem>>, %arg43: memref<22x16xf32, #tpu.memory_space<vmem>>) attributes {dimension_semantics = [#tpu.dimension_semantics<parallel>], iteration_bounds = array<i64: 2>, scalar_prefetch = 0 : i64, scratch_operands = 4 : i64, tpu.core_type = #tpu.core_type<tc>, window_params = [{transform_indices = @transform_0, window_bounds = array<i64: 1, 16, 16>}, {pipeline_mode = #tpu.pipeline_mode<synchronous>, transform_indices = @transform_1, window_bounds = array<i64: 112, 8>}, {pipeline_mode = #tpu.pipeline_mode<synchronous>, transform_indices = @transform_2, window_bounds = array<i64: 1, 8>}, {pipeline_mode = #tpu.pipeline_mode<synchronous>, transform_indices = @transform_3, window_bounds = array<i64: 40, 16>}, {pipeline_mode = #tpu.pipeline_mode<synchronous>, transform_indices = @transform_4, window_bounds = array<i64: 1, 16>}, {pipeline_mode = #tpu.pipeline_mode<synchronous>, transform_indices = @transform_5, window_bounds = array<i64: 48, 32>}, {pipeline_mode = #tpu.pipeline_mode<synchronous>, transform_indices = @transform_6, window_bounds = array<i64: 1, 32>}, {pipeline_mode = #tpu.pipeline_mode<synchronous>, transform_indices = @transform_7, window_bounds = array<i64: 2, 1, 32>}, {pipeline_mode = #tpu.pipeline_mode<synchronous>, transform_indices = @transform_8, window_bounds = array<i64: 2, 1, 32>}, {pipeline_mode = #tpu.pipeline_mode<synchronous>, transform_indices = @transform_9, window_bounds = array<i64: 2, 96, 16>}, {pipeline_mode = #tpu.pipeline_mode<synchronous>, transform_indices = @transform_10, window_bounds = array<i64: 2, 1, 16>}, {pipeline_mode = #tpu.pipeline_mode<synchronous>, transform_indices = @transform_11, window_bounds = array<i64: 2, 1, 16>}, {pipeline_mode = #tpu.pipeline_mode<synchronous>, transform_indices = @transform_12, window_bounds = array<i64: 2, 16, 32>}, {pipeline_mode = #tpu.pipeline_mode<synchronous>, transform_indices = @transform_13, window_bounds = array<i64: 32, 32>}, {pipeline_mode = #tpu.pipeline_mode<synchronous>, transform_indices = @transform_14, window_bounds = array<i64: 16, 16>}, {pipeline_mode = #tpu.pipeline_mode<synchronous>, transform_indices = @transform_15, window_bounds = array<i64: 32, 16>}, {pipeline_mode = #tpu.pipeline_mode<synchronous>, transform_indices = @transform_16, window_bounds = array<i64: 1, 16>}, {pipeline_mode = #tpu.pipeline_mode<synchronous>, transform_indices = @transform_17, window_bounds = array<i64: 32, 16>}, {pipeline_mode = #tpu.pipeline_mode<synchronous>, transform_indices = @transform_18, window_bounds = array<i64: 1, 32>}, {pipeline_mode = #tpu.pipeline_mode<synchronous>, transform_indices = @transform_19, window_bounds = array<i64: 16, 32>}, {pipeline_mode = #tpu.pipeline_mode<synchronous>, transform_indices = @transform_20, window_bounds = array<i64: 32, 32>}, {pipeline_mode = #tpu.pipeline_mode<synchronous>, transform_indices = @transform_21, window_bounds = array<i64: 1, 32>}, {pipeline_mode = #tpu.pipeline_mode<synchronous>, transform_indices = @transform_22, window_bounds = array<i64: 96, 16>}, {pipeline_mode = #tpu.pipeline_mode<synchronous>, transform_indices = @transform_23, window_bounds = array<i64: 64, 16>}, {pipeline_mode = #tpu.pipeline_mode<synchronous>, transform_indices = @transform_24, window_bounds = array<i64: 1, 16>}, {pipeline_mode = #tpu.pipeline_mode<synchronous>, transform_indices = @transform_25, window_bounds = array<i64: 112, 16>}, {pipeline_mode = #tpu.pipeline_mode<synchronous>, transform_indices = @transform_26, window_bounds = array<i64: 1, 16>}, {pipeline_mode = #tpu.pipeline_mode<synchronous>, transform_indices = @transform_27, window_bounds = array<i64: 16, 128>}, {pipeline_mode = #tpu.pipeline_mode<synchronous>, transform_indices = @transform_28, window_bounds = array<i64: 1, 128>}, {pipeline_mode = #tpu.pipeline_mode<synchronous>, transform_indices = @transform_29, window_bounds = array<i64: 128, 64>}, {pipeline_mode = #tpu.pipeline_mode<synchronous>, transform_indices = @transform_30, window_bounds = array<i64: 1, 64>}, {pipeline_mode = #tpu.pipeline_mode<synchronous>, transform_indices = @transform_31, window_bounds = array<i64: 64, 4>}, {pipeline_mode = #tpu.pipeline_mode<synchronous>, transform_indices = @transform_32, window_bounds = array<i64: 1, 4>}, {transform_indices = @transform_33, window_bounds = array<i64: 1, 16, 16>}, {transform_indices = @transform_34, window_bounds = array<i64: 1, 16, 4>}, {transform_indices = @transform_35, window_bounds = array<i64: 1, 4, 32>}, {transform_indices = @transform_36, window_bounds = array<i64: 1, 1, 4>}, {transform_indices = @transform_37, window_bounds = array<i64: 1, 1, 1>}, {transform_indices = @transform_38, window_bounds = array<i64: 1, 1, 32>}]} {
    %c0 = arith.constant 0 : index
    %c0_0 = arith.constant 0 : index
    %c0_1 = arith.constant 0 : index
    %0 = vector.load %arg1[%c0, %c0_0, %c0_1] : memref<1x16x16xf32, #tpu.memory_space<vmem>>, vector<1x16x16xf32>
    %1 = vector.shape_cast %0 : vector<1x16x16xf32> to vector<16x16xf32>
    %2 = tpu.transpose %1, [1, 0] : vector<16x16xf32> -> vector<16x16xf32>
    %c0_2 = arith.constant 0 : index
    %c0_3 = arith.constant 0 : index
    %3 = vector.load %arg2[%c0_2, %c0_3] : memref<112x8xbf16, #tpu.memory_space<vmem>>, vector<112x8xbf16>
    %c0_4 = arith.constant 0 : index
    %c0_5 = arith.constant 0 : index
    %4 = vector.load %arg3[%c0_4, %c0_5] : memref<1x8xf32, #tpu.memory_space<vmem>>, vector<1x8xf32>
    %5 = arith.truncf %2 : vector<16x16xf32> to vector<16x16xbf16>
    %cst = arith.constant 0.000000e+00 : bf16
    %6 = vector.broadcast %cst : bf16 to vector<3x16xbf16>
    %cst_6 = arith.constant 0.000000e+00 : bf16
    %7 = vector.broadcast %cst_6 : bf16 to vector<3x16xbf16>
    %8 = tpu.concatenate %6, %5, %7 in 0 : vector<3x16xbf16>, vector<16x16xbf16>, vector<3x16xbf16> -> vector<22x16xbf16>
    %9 = vector.extract_strided_slice %8 {offsets = [0, 0], sizes = [16, 16], strides = [1, 1]} : vector<22x16xbf16> to vector<16x16xbf16>
    %10 = vector.extract_strided_slice %8 {offsets = [1, 0], sizes = [16, 16], strides = [1, 1]} : vector<22x16xbf16> to vector<16x16xbf16>
    %11 = vector.extract_strided_slice %8 {offsets = [2, 0], sizes = [16, 16], strides = [1, 1]} : vector<22x16xbf16> to vector<16x16xbf16>
    %12 = vector.extract_strided_slice %8 {offsets = [3, 0], sizes = [16, 16], strides = [1, 1]} : vector<22x16xbf16> to vector<16x16xbf16>
    %13 = vector.extract_strided_slice %8 {offsets = [4, 0], sizes = [16, 16], strides = [1, 1]} : vector<22x16xbf16> to vector<16x16xbf16>
    %14 = vector.extract_strided_slice %8 {offsets = [5, 0], sizes = [16, 16], strides = [1, 1]} : vector<22x16xbf16> to vector<16x16xbf16>
    %15 = vector.extract_strided_slice %8 {offsets = [6, 0], sizes = [16, 16], strides = [1, 1]} : vector<22x16xbf16> to vector<16x16xbf16>
    %16 = tpu.concatenate %9, %10, %11, %12, %13, %14, %15 in 1 : vector<16x16xbf16>, vector<16x16xbf16>, vector<16x16xbf16>, vector<16x16xbf16>, vector<16x16xbf16>, vector<16x16xbf16>, vector<16x16xbf16> -> vector<16x112xbf16>
    %cst_7 = arith.constant dense<0.000000e+00> : vector<16x8xf32>
    %17 = tpu.matmul %16, %3, %cst_7 {dimension_numbers = #tpu.dot_dimension_numbers<[1], [0], [0], [1], [0, 0, 1, 1], [], []>} : vector<16x112xbf16>, vector<112x8xbf16>, vector<16x8xf32> -> vector<16x8xf32>
    %18 = vector.broadcast %4 : vector<1x8xf32> to vector<16x8xf32>
    %19 = arith.addf %17, %18 : vector<16x8xf32>
    %cst_8 = arith.constant 0.000000e+00 : f32
    %20 = vector.broadcast %cst_8 : f32 to vector<16x8xf32>
    %21 = arith.maximumf %19, %20 : vector<16x8xf32>
    %c0_9 = arith.constant 0 : index
    %c0_10 = arith.constant 0 : index
    %22 = vector.load %arg4[%c0_9, %c0_10] : memref<40x16xbf16, #tpu.memory_space<vmem>>, vector<40x16xbf16>
    %c0_11 = arith.constant 0 : index
    %c0_12 = arith.constant 0 : index
    %23 = vector.load %arg5[%c0_11, %c0_12] : memref<1x16xf32, #tpu.memory_space<vmem>>, vector<1x16xf32>
    %cst_13 = arith.constant 0.000000e+00 : f32
    %24 = vector.broadcast %cst_13 : f32 to vector<2x8xf32>
    %c0_14 = arith.constant 0 : index
    %c0_15 = arith.constant 0 : index
    %25 = vector.load %arg40[%c0_14, %c0_15] : memref<20x8xf32, #tpu.memory_space<vmem>>, vector<2x8xf32>
    tpu.vector_store %arg40[%c0_14, %c0_15], %24 {strides = array<i32>} : memref<20x8xf32, #tpu.memory_space<vmem>>, vector<2x8xf32>,
    %cst_16 = arith.constant 0.000000e+00 : f32
    %26 = vector.broadcast %cst_16 : f32 to vector<2x8xf32>
    %c18 = arith.constant 18 : index
    %c0_17 = arith.constant 0 : index
    %27 = vector.load %arg40[%c18, %c0_17] : memref<20x8xf32, #tpu.memory_space<vmem>>, vector<2x8xf32>
    tpu.vector_store %arg40[%c18, %c0_17], %26 {strides = array<i32>} : memref<20x8xf32, #tpu.memory_space<vmem>>, vector<2x8xf32>,
    %c2 = arith.constant 2 : index
    %c0_18 = arith.constant 0 : index
    %28 = vector.load %arg40[%c2, %c0_18] : memref<20x8xf32, #tpu.memory_space<vmem>>, vector<16x8xf32>
    tpu.vector_store %arg40[%c2, %c0_18], %21 {strides = array<i32>} : memref<20x8xf32, #tpu.memory_space<vmem>>, vector<16x8xf32>,
    %c0_19 = arith.constant 0 : index
    %c0_20 = arith.constant 0 : index
    %29 = tpu.strided_load %arg40[%c0_19, %c0_20] {strides = array<i32: 2, 1>} : memref<20x8xf32, #tpu.memory_space<vmem>>, vector<8x8xf32>
    %c1 = arith.constant 1 : index
    %c0_21 = arith.constant 0 : index
    %30 = tpu.strided_load %arg40[%c1, %c0_21] {strides = array<i32: 2, 1>} : memref<20x8xf32, #tpu.memory_space<vmem>>, vector<8x8xf32>
    %c2_22 = arith.constant 2 : index
    %c0_23 = arith.constant 0 : index
    %31 = tpu.strided_load %arg40[%c2_22, %c0_23] {strides = array<i32: 2, 1>} : memref<20x8xf32, #tpu.memory_space<vmem>>, vector<8x8xf32>
    %c3 = arith.constant 3 : index
    %c0_24 = arith.constant 0 : index
    %32 = tpu.strided_load %arg40[%c3, %c0_24] {strides = array<i32: 2, 1>} : memref<20x8xf32, #tpu.memory_space<vmem>>, vector<8x8xf32>
    %c4 = arith.constant 4 : index
    %c0_25 = arith.constant 0 : index
    %33 = tpu.strided_load %arg40[%c4, %c0_25] {strides = array<i32: 2, 1>} : memref<20x8xf32, #tpu.memory_space<vmem>>, vector<8x8xf32>
    %34 = tpu.concatenate %29, %30, %31, %32, %33 in 1 : vector<8x8xf32>, vector<8x8xf32>, vector<8x8xf32>, vector<8x8xf32>, vector<8x8xf32> -> vector<8x40xf32>
    %35 = arith.truncf %34 : vector<8x40xf32> to vector<8x40xbf16>
    %cst_26 = arith.constant dense<0.000000e+00> : vector<8x16xf32>
    %36 = tpu.matmul %35, %22, %cst_26 {dimension_numbers = #tpu.dot_dimension_numbers<[1], [0], [0], [1], [0, 0, 1, 1], [], []>} : vector<8x40xbf16>, vector<40x16xbf16>, vector<8x16xf32> -> vector<8x16xf32>
    %37 = vector.broadcast %23 : vector<1x16xf32> to vector<8x16xf32>
    %38 = arith.addf %36, %37 : vector<8x16xf32>
    %cst_27 = arith.constant 0.000000e+00 : f32
    %39 = vector.broadcast %cst_27 : f32 to vector<8x16xf32>
    %40 = arith.maximumf %38, %39 : vector<8x16xf32>
    %c0_28 = arith.constant 0 : index
    %c0_29 = arith.constant 0 : index
    %41 = vector.load %arg6[%c0_28, %c0_29] : memref<48x32xbf16, #tpu.memory_space<vmem>>, vector<48x32xbf16>
    %c0_30 = arith.constant 0 : index
    %c0_31 = arith.constant 0 : index
    %42 = vector.load %arg7[%c0_30, %c0_31] : memref<1x32xf32, #tpu.memory_space<vmem>>, vector<1x32xf32>
    %cst_32 = arith.constant 0.000000e+00 : f32
    %43 = vector.broadcast %cst_32 : f32 to vector<1x16xf32>
    %c0_33 = arith.constant 0 : index
    %c0_34 = arith.constant 0 : index
    %44 = vector.load %arg41[%c0_33, %c0_34] : memref<10x16xf32, #tpu.memory_space<vmem>>, vector<1x16xf32>
    tpu.vector_store %arg41[%c0_33, %c0_34], %43 {strides = array<i32>} : memref<10x16xf32, #tpu.memory_space<vmem>>, vector<1x16xf32>,
    %cst_35 = arith.constant 0.000000e+00 : f32
    %45 = vector.broadcast %cst_35 : f32 to vector<1x16xf32>
    %c9 = arith.constant 9 : index
    %c0_36 = arith.constant 0 : index
    %46 = vector.load %arg41[%c9, %c0_36] : memref<10x16xf32, #tpu.memory_space<vmem>>, vector<1x16xf32>
    tpu.vector_store %arg41[%c9, %c0_36], %45 {strides = array<i32>} : memref<10x16xf32, #tpu.memory_space<vmem>>, vector<1x16xf32>,
    %c1_37 = arith.constant 1 : index
    %c0_38 = arith.constant 0 : index
    %47 = vector.load %arg41[%c1_37, %c0_38] : memref<10x16xf32, #tpu.memory_space<vmem>>, vector<8x16xf32>
    tpu.vector_store %arg41[%c1_37, %c0_38], %40 {strides = array<i32>} : memref<10x16xf32, #tpu.memory_space<vmem>>, vector<8x16xf32>,
    %c0_39 = arith.constant 0 : index
    %c0_40 = arith.constant 0 : index
    %48 = tpu.strided_load %arg41[%c0_39, %c0_40] {strides = array<i32: 2, 1>} : memref<10x16xf32, #tpu.memory_space<vmem>>, vector<4x16xf32>
    %c1_41 = arith.constant 1 : index
    %c0_42 = arith.constant 0 : index
    %49 = tpu.strided_load %arg41[%c1_41, %c0_42] {strides = array<i32: 2, 1>} : memref<10x16xf32, #tpu.memory_space<vmem>>, vector<4x16xf32>
    %c2_43 = arith.constant 2 : index
    %c0_44 = arith.constant 0 : index
    %50 = tpu.strided_load %arg41[%c2_43, %c0_44] {strides = array<i32: 2, 1>} : memref<10x16xf32, #tpu.memory_space<vmem>>, vector<4x16xf32>
    %51 = tpu.concatenate %48, %49, %50 in 1 : vector<4x16xf32>, vector<4x16xf32>, vector<4x16xf32> -> vector<4x48xf32>
    %52 = arith.truncf %51 : vector<4x48xf32> to vector<4x48xbf16>
    %cst_45 = arith.constant dense<0.000000e+00> : vector<4x32xf32>
    %53 = tpu.matmul %52, %41, %cst_45 {dimension_numbers = #tpu.dot_dimension_numbers<[1], [0], [0], [1], [0, 0, 1, 1], [], []>} : vector<4x48xbf16>, vector<48x32xbf16>, vector<4x32xf32> -> vector<4x32xf32>
    %54 = vector.broadcast %42 : vector<1x32xf32> to vector<4x32xf32>
    %55 = arith.addf %53, %54 : vector<4x32xf32>
    %c0_46 = arith.constant 0 : index
    %c0_47 = arith.constant 0 : index
    %56 = vector.load %arg14[%c0_46, %c0_47] : memref<32x32xf32, #tpu.memory_space<vmem>>, vector<32x32xf32>
    %c0_48 = arith.constant 0 : index
    %c0_49 = arith.constant 0 : index
    %57 = vector.load %arg15[%c0_48, %c0_49] : memref<16x16xf32, #tpu.memory_space<vmem>>, vector<16x16xf32>
    %c0_50 = arith.constant 0 : index
    %c0_51 = arith.constant 0 : index
    %c0_52 = arith.constant 0 : index
    %58 = vector.load %arg8[%c0_50, %c0_51, %c0_52] : memref<2x1x32xf32, #tpu.memory_space<vmem>>, vector<1x1x32xf32>
    %59 = vector.shape_cast %58 : vector<1x1x32xf32> to vector<1x32xf32>
    %c0_53 = arith.constant 0 : index
    %c0_54 = arith.constant 0 : index
    %c0_55 = arith.constant 0 : index
    %60 = vector.load %arg9[%c0_53, %c0_54, %c0_55] : memref<2x1x32xf32, #tpu.memory_space<vmem>>, vector<1x1x32xf32>
    %61 = vector.shape_cast %60 : vector<1x1x32xf32> to vector<1x32xf32>
    %cst_56 = arith.constant dense<0.000000e+00> : vector<32xf32>
    %62 = vector.multi_reduction <add>, %55, %cst_56 [0] : vector<4x32xf32> to vector<32xf32>
    %63 = vector.shape_cast %62 : vector<32xf32> to vector<1x32xf32>
    %64 = arith.mulf %55, %55 : vector<4x32xf32>
    %cst_57 = arith.constant dense<0.000000e+00> : vector<32xf32>
    %65 = vector.multi_reduction <add>, %64, %cst_57 [0] : vector<4x32xf32> to vector<32xf32>
    %66 = vector.shape_cast %65 : vector<32xf32> to vector<1x32xf32>
    %cst_58 = arith.constant dense<0.000000e+00> : vector<1x32xf32>
    %67 = tpu.matmul %63, %56, %cst_58 {dimension_numbers = #tpu.dot_dimension_numbers<[1], [0], [0], [1], [0, 0, 1, 1], [], []>} : vector<1x32xf32>, vector<32x32xf32>, vector<1x32xf32> -> vector<1x32xf32>
    %cst_59 = arith.constant 1.600000e+01 : f32
    %68 = vector.broadcast %cst_59 : f32 to vector<1x32xf32>
    %69 = arith.divf %67, %68 : vector<1x32xf32>
    %cst_60 = arith.constant dense<0.000000e+00> : vector<1x32xf32>
    %70 = tpu.matmul %66, %56, %cst_60 {dimension_numbers = #tpu.dot_dimension_numbers<[1], [0], [0], [1], [0, 0, 1, 1], [], []>} : vector<1x32xf32>, vector<32x32xf32>, vector<1x32xf32> -> vector<1x32xf32>
    %cst_61 = arith.constant 1.600000e+01 : f32
    %71 = vector.broadcast %cst_61 : f32 to vector<1x32xf32>
    %72 = arith.divf %70, %71 : vector<1x32xf32>
    %73 = arith.mulf %69, %69 : vector<1x32xf32>
    %74 = arith.subf %72, %73 : vector<1x32xf32>
    %cst_62 = arith.constant 0.000000e+00 : f32
    %75 = vector.broadcast %cst_62 : f32 to vector<1x32xf32>
    %76 = arith.maximumf %74, %75 : vector<1x32xf32>
    %77 = vector.broadcast %69 : vector<1x32xf32> to vector<4x32xf32>
    %78 = arith.subf %55, %77 : vector<4x32xf32>
    %cst_63 = arith.constant 9.99999974E-6 : f32
    %79 = vector.broadcast %cst_63 : f32 to vector<1x32xf32>
    %80 = arith.addf %76, %79 : vector<1x32xf32>
    %81 = math.rsqrt %80 : vector<1x32xf32>
    %82 = vector.broadcast %81 : vector<1x32xf32> to vector<4x32xf32>
    %83 = arith.mulf %78, %82 : vector<4x32xf32>
    %84 = vector.broadcast %59 : vector<1x32xf32> to vector<4x32xf32>
    %85 = arith.mulf %83, %84 : vector<4x32xf32>
    %86 = vector.broadcast %61 : vector<1x32xf32> to vector<4x32xf32>
    %87 = arith.addf %85, %86 : vector<4x32xf32>
    %cst_64 = arith.constant 0.000000e+00 : f32
    %88 = vector.broadcast %cst_64 : f32 to vector<4x32xf32>
    %89 = arith.maximumf %87, %88 : vector<4x32xf32>
    %c0_65 = arith.constant 0 : index
    %c0_66 = arith.constant 0 : index
    %c0_67 = arith.constant 0 : index
    %90 = vector.load %arg10[%c0_65, %c0_66, %c0_67] : memref<2x96x16xbf16, #tpu.memory_space<vmem>>, vector<1x96x16xbf16>
    %91 = vector.shape_cast %90 : vector<1x96x16xbf16> to vector<96x16xbf16>
    %92 = arith.truncf %89 : vector<4x32xf32> to vector<4x32xbf16>
    %cst_68 = arith.constant 0.000000e+00 : bf16
    %93 = vector.broadcast %cst_68 : bf16 to vector<1x32xbf16>
    %cst_69 = arith.constant 0.000000e+00 : bf16
    %94 = vector.broadcast %cst_69 : bf16 to vector<1x32xbf16>
    %95 = tpu.concatenate %93, %92, %94 in 0 : vector<1x32xbf16>, vector<4x32xbf16>, vector<1x32xbf16> -> vector<6x32xbf16>
    %96 = vector.extract_strided_slice %95 {offsets = [0, 0], sizes = [4, 32], strides = [1, 1]} : vector<6x32xbf16> to vector<4x32xbf16>
    %97 = vector.extract_strided_slice %95 {offsets = [1, 0], sizes = [4, 32], strides = [1, 1]} : vector<6x32xbf16> to vector<4x32xbf16>
    %98 = vector.extract_strided_slice %95 {offsets = [2, 0], sizes = [4, 32], strides = [1, 1]} : vector<6x32xbf16> to vector<4x32xbf16>
    %99 = tpu.concatenate %96, %97, %98 in 1 : vector<4x32xbf16>, vector<4x32xbf16>, vector<4x32xbf16> -> vector<4x96xbf16>
    %cst_70 = arith.constant dense<0.000000e+00> : vector<4x16xf32>
    %100 = tpu.matmul %99, %91, %cst_70 {dimension_numbers = #tpu.dot_dimension_numbers<[1], [0], [0], [1], [0, 0, 1, 1], [], []>} : vector<4x96xbf16>, vector<96x16xbf16>, vector<4x16xf32> -> vector<4x16xf32>
    %c0_71 = arith.constant 0 : index
    %c0_72 = arith.constant 0 : index
    %c0_73 = arith.constant 0 : index
    %101 = vector.load %arg11[%c0_71, %c0_72, %c0_73] : memref<2x1x16xf32, #tpu.memory_space<vmem>>, vector<1x1x16xf32>
    %102 = vector.shape_cast %101 : vector<1x1x16xf32> to vector<1x16xf32>
    %c0_74 = arith.constant 0 : index
    %c0_75 = arith.constant 0 : index
    %c0_76 = arith.constant 0 : index
    %103 = vector.load %arg12[%c0_74, %c0_75, %c0_76] : memref<2x1x16xf32, #tpu.memory_space<vmem>>, vector<1x1x16xf32>
    %104 = vector.shape_cast %103 : vector<1x1x16xf32> to vector<1x16xf32>
    %cst_77 = arith.constant dense<0.000000e+00> : vector<16xf32>
    %105 = vector.multi_reduction <add>, %100, %cst_77 [0] : vector<4x16xf32> to vector<16xf32>
    %106 = vector.shape_cast %105 : vector<16xf32> to vector<1x16xf32>
    %107 = arith.mulf %100, %100 : vector<4x16xf32>
    %cst_78 = arith.constant dense<0.000000e+00> : vector<16xf32>
    %108 = vector.multi_reduction <add>, %107, %cst_78 [0] : vector<4x16xf32> to vector<16xf32>
    %109 = vector.shape_cast %108 : vector<16xf32> to vector<1x16xf32>
    %cst_79 = arith.constant dense<0.000000e+00> : vector<1x16xf32>
    %110 = tpu.matmul %106, %57, %cst_79 {dimension_numbers = #tpu.dot_dimension_numbers<[1], [0], [0], [1], [0, 0, 1, 1], [], []>} : vector<1x16xf32>, vector<16x16xf32>, vector<1x16xf32> -> vector<1x16xf32>
    %cst_80 = arith.constant 8.000000e+00 : f32
    %111 = vector.broadcast %cst_80 : f32 to vector<1x16xf32>
    %112 = arith.divf %110, %111 : vector<1x16xf32>
    %cst_81 = arith.constant dense<0.000000e+00> : vector<1x16xf32>
    %113 = tpu.matmul %109, %57, %cst_81 {dimension_numbers = #tpu.dot_dimension_numbers<[1], [0], [0], [1], [0, 0, 1, 1], [], []>} : vector<1x16xf32>, vector<16x16xf32>, vector<1x16xf32> -> vector<1x16xf32>
    %cst_82 = arith.constant 8.000000e+00 : f32
    %114 = vector.broadcast %cst_82 : f32 to vector<1x16xf32>
    %115 = arith.divf %113, %114 : vector<1x16xf32>
    %116 = arith.mulf %112, %112 : vector<1x16xf32>
    %117 = arith.subf %115, %116 : vector<1x16xf32>
    %cst_83 = arith.constant 0.000000e+00 : f32
    %118 = vector.broadcast %cst_83 : f32 to vector<1x16xf32>
    %119 = arith.maximumf %117, %118 : vector<1x16xf32>
    %120 = vector.broadcast %112 : vector<1x16xf32> to vector<4x16xf32>
    %121 = arith.subf %100, %120 : vector<4x16xf32>
    %cst_84 = arith.constant 9.99999974E-6 : f32
    %122 = vector.broadcast %cst_84 : f32 to vector<1x16xf32>
    %123 = arith.addf %119, %122 : vector<1x16xf32>
    %124 = math.rsqrt %123 : vector<1x16xf32>
    %125 = vector.broadcast %124 : vector<1x16xf32> to vector<4x16xf32>
    %126 = arith.mulf %121, %125 : vector<4x16xf32>
    %127 = vector.broadcast %102 : vector<1x16xf32> to vector<4x16xf32>
    %128 = arith.mulf %126, %127 : vector<4x16xf32>
    %129 = vector.broadcast %104 : vector<1x16xf32> to vector<4x16xf32>
    %130 = arith.addf %128, %129 : vector<4x16xf32>
    %cst_85 = arith.constant 0.000000e+00 : f32
    %131 = vector.broadcast %cst_85 : f32 to vector<4x16xf32>
    %132 = arith.maximumf %130, %131 : vector<4x16xf32>
    %133 = arith.truncf %132 : vector<4x16xf32> to vector<4x16xbf16>
    %c0_86 = arith.constant 0 : index
    %c0_87 = arith.constant 0 : index
    %c0_88 = arith.constant 0 : index
    %134 = vector.load %arg13[%c0_86, %c0_87, %c0_88] : memref<2x16x32xbf16, #tpu.memory_space<vmem>>, vector<1x16x32xbf16>
    %135 = vector.shape_cast %134 : vector<1x16x32xbf16> to vector<16x32xbf16>
    %cst_89 = arith.constant dense<0.000000e+00> : vector<4x32xf32>
    %136 = tpu.matmul %133, %135, %cst_89 {dimension_numbers = #tpu.dot_dimension_numbers<[1], [0], [0], [1], [0, 0, 1, 1], [], []>} : vector<4x16xbf16>, vector<16x32xbf16>, vector<4x32xf32> -> vector<4x32xf32>
    %137 = arith.addf %55, %136 : vector<4x32xf32>
    %c1_90 = arith.constant 1 : index
    %c0_91 = arith.constant 0 : index
    %c0_92 = arith.constant 0 : index
    %138 = vector.load %arg8[%c1_90, %c0_91, %c0_92] : memref<2x1x32xf32, #tpu.memory_space<vmem>>, vector<1x1x32xf32>
    %139 = vector.shape_cast %138 : vector<1x1x32xf32> to vector<1x32xf32>
    %c1_93 = arith.constant 1 : index
    %c0_94 = arith.constant 0 : index
    %c0_95 = arith.constant 0 : index
    %140 = vector.load %arg9[%c1_93, %c0_94, %c0_95] : memref<2x1x32xf32, #tpu.memory_space<vmem>>, vector<1x1x32xf32>
    %141 = vector.shape_cast %140 : vector<1x1x32xf32> to vector<1x32xf32>
    %cst_96 = arith.constant dense<0.000000e+00> : vector<32xf32>
    %142 = vector.multi_reduction <add>, %137, %cst_96 [0] : vector<4x32xf32> to vector<32xf32>
    %143 = vector.shape_cast %142 : vector<32xf32> to vector<1x32xf32>
    %144 = arith.mulf %137, %137 : vector<4x32xf32>
    %cst_97 = arith.constant dense<0.000000e+00> : vector<32xf32>
    %145 = vector.multi_reduction <add>, %144, %cst_97 [0] : vector<4x32xf32> to vector<32xf32>
    %146 = vector.shape_cast %145 : vector<32xf32> to vector<1x32xf32>
    %cst_98 = arith.constant dense<0.000000e+00> : vector<1x32xf32>
    %147 = tpu.matmul %143, %56, %cst_98 {dimension_numbers = #tpu.dot_dimension_numbers<[1], [0], [0], [1], [0, 0, 1, 1], [], []>} : vector<1x32xf32>, vector<32x32xf32>, vector<1x32xf32> -> vector<1x32xf32>
    %cst_99 = arith.constant 1.600000e+01 : f32
    %148 = vector.broadcast %cst_99 : f32 to vector<1x32xf32>
    %149 = arith.divf %147, %148 : vector<1x32xf32>
    %cst_100 = arith.constant dense<0.000000e+00> : vector<1x32xf32>
    %150 = tpu.matmul %146, %56, %cst_100 {dimension_numbers = #tpu.dot_dimension_numbers<[1], [0], [0], [1], [0, 0, 1, 1], [], []>} : vector<1x32xf32>, vector<32x32xf32>, vector<1x32xf32> -> vector<1x32xf32>
    %cst_101 = arith.constant 1.600000e+01 : f32
    %151 = vector.broadcast %cst_101 : f32 to vector<1x32xf32>
    %152 = arith.divf %150, %151 : vector<1x32xf32>
    %153 = arith.mulf %149, %149 : vector<1x32xf32>
    %154 = arith.subf %152, %153 : vector<1x32xf32>
    %cst_102 = arith.constant 0.000000e+00 : f32
    %155 = vector.broadcast %cst_102 : f32 to vector<1x32xf32>
    %156 = arith.maximumf %154, %155 : vector<1x32xf32>
    %157 = vector.broadcast %149 : vector<1x32xf32> to vector<4x32xf32>
    %158 = arith.subf %137, %157 : vector<4x32xf32>
    %cst_103 = arith.constant 9.99999974E-6 : f32
    %159 = vector.broadcast %cst_103 : f32 to vector<1x32xf32>
    %160 = arith.addf %156, %159 : vector<1x32xf32>
    %161 = math.rsqrt %160 : vector<1x32xf32>
    %162 = vector.broadcast %161 : vector<1x32xf32> to vector<4x32xf32>
    %163 = arith.mulf %158, %162 : vector<4x32xf32>
    %164 = vector.broadcast %139 : vector<1x32xf32> to vector<4x32xf32>
    %165 = arith.mulf %163, %164 : vector<4x32xf32>
    %166 = vector.broadcast %141 : vector<1x32xf32> to vector<4x32xf32>
    %167 = arith.addf %165, %166 : vector<4x32xf32>
    %cst_104 = arith.constant 0.000000e+00 : f32
    %168 = vector.broadcast %cst_104 : f32 to vector<4x32xf32>
    %169 = arith.maximumf %167, %168 : vector<4x32xf32>
    %c1_105 = arith.constant 1 : index
    %c0_106 = arith.constant 0 : index
    %c0_107 = arith.constant 0 : index
    %170 = vector.load %arg10[%c1_105, %c0_106, %c0_107] : memref<2x96x16xbf16, #tpu.memory_space<vmem>>, vector<1x96x16xbf16>
    %171 = vector.shape_cast %170 : vector<1x96x16xbf16> to vector<96x16xbf16>
    %172 = arith.truncf %169 : vector<4x32xf32> to vector<4x32xbf16>
    %cst_108 = arith.constant 0.000000e+00 : bf16
    %173 = vector.broadcast %cst_108 : bf16 to vector<1x32xbf16>
    %cst_109 = arith.constant 0.000000e+00 : bf16
    %174 = vector.broadcast %cst_109 : bf16 to vector<1x32xbf16>
    %175 = tpu.concatenate %173, %172, %174 in 0 : vector<1x32xbf16>, vector<4x32xbf16>, vector<1x32xbf16> -> vector<6x32xbf16>
    %176 = vector.extract_strided_slice %175 {offsets = [0, 0], sizes = [4, 32], strides = [1, 1]} : vector<6x32xbf16> to vector<4x32xbf16>
    %177 = vector.extract_strided_slice %175 {offsets = [1, 0], sizes = [4, 32], strides = [1, 1]} : vector<6x32xbf16> to vector<4x32xbf16>
    %178 = vector.extract_strided_slice %175 {offsets = [2, 0], sizes = [4, 32], strides = [1, 1]} : vector<6x32xbf16> to vector<4x32xbf16>
    %179 = tpu.concatenate %176, %177, %178 in 1 : vector<4x32xbf16>, vector<4x32xbf16>, vector<4x32xbf16> -> vector<4x96xbf16>
    %cst_110 = arith.constant dense<0.000000e+00> : vector<4x16xf32>
    %180 = tpu.matmul %179, %171, %cst_110 {dimension_numbers = #tpu.dot_dimension_numbers<[1], [0], [0], [1], [0, 0, 1, 1], [], []>} : vector<4x96xbf16>, vector<96x16xbf16>, vector<4x16xf32> -> vector<4x16xf32>
    %c1_111 = arith.constant 1 : index
    %c0_112 = arith.constant 0 : index
    %c0_113 = arith.constant 0 : index
    %181 = vector.load %arg11[%c1_111, %c0_112, %c0_113] : memref<2x1x16xf32, #tpu.memory_space<vmem>>, vector<1x1x16xf32>
    %182 = vector.shape_cast %181 : vector<1x1x16xf32> to vector<1x16xf32>
    %c1_114 = arith.constant 1 : index
    %c0_115 = arith.constant 0 : index
    %c0_116 = arith.constant 0 : index
    %183 = vector.load %arg12[%c1_114, %c0_115, %c0_116] : memref<2x1x16xf32, #tpu.memory_space<vmem>>, vector<1x1x16xf32>
    %184 = vector.shape_cast %183 : vector<1x1x16xf32> to vector<1x16xf32>
    %cst_117 = arith.constant dense<0.000000e+00> : vector<16xf32>
    %185 = vector.multi_reduction <add>, %180, %cst_117 [0] : vector<4x16xf32> to vector<16xf32>
    %186 = vector.shape_cast %185 : vector<16xf32> to vector<1x16xf32>
    %187 = arith.mulf %180, %180 : vector<4x16xf32>
    %cst_118 = arith.constant dense<0.000000e+00> : vector<16xf32>
    %188 = vector.multi_reduction <add>, %187, %cst_118 [0] : vector<4x16xf32> to vector<16xf32>
    %189 = vector.shape_cast %188 : vector<16xf32> to vector<1x16xf32>
    %cst_119 = arith.constant dense<0.000000e+00> : vector<1x16xf32>
    %190 = tpu.matmul %186, %57, %cst_119 {dimension_numbers = #tpu.dot_dimension_numbers<[1], [0], [0], [1], [0, 0, 1, 1], [], []>} : vector<1x16xf32>, vector<16x16xf32>, vector<1x16xf32> -> vector<1x16xf32>
    %cst_120 = arith.constant 8.000000e+00 : f32
    %191 = vector.broadcast %cst_120 : f32 to vector<1x16xf32>
    %192 = arith.divf %190, %191 : vector<1x16xf32>
    %cst_121 = arith.constant dense<0.000000e+00> : vector<1x16xf32>
    %193 = tpu.matmul %189, %57, %cst_121 {dimension_numbers = #tpu.dot_dimension_numbers<[1], [0], [0], [1], [0, 0, 1, 1], [], []>} : vector<1x16xf32>, vector<16x16xf32>, vector<1x16xf32> -> vector<1x16xf32>
    %cst_122 = arith.constant 8.000000e+00 : f32
    %194 = vector.broadcast %cst_122 : f32 to vector<1x16xf32>
    %195 = arith.divf %193, %194 : vector<1x16xf32>
    %196 = arith.mulf %192, %192 : vector<1x16xf32>
    %197 = arith.subf %195, %196 : vector<1x16xf32>
    %cst_123 = arith.constant 0.000000e+00 : f32
    %198 = vector.broadcast %cst_123 : f32 to vector<1x16xf32>
    %199 = arith.maximumf %197, %198 : vector<1x16xf32>
    %200 = vector.broadcast %192 : vector<1x16xf32> to vector<4x16xf32>
    %201 = arith.subf %180, %200 : vector<4x16xf32>
    %cst_124 = arith.constant 9.99999974E-6 : f32
    %202 = vector.broadcast %cst_124 : f32 to vector<1x16xf32>
    %203 = arith.addf %199, %202 : vector<1x16xf32>
    %204 = math.rsqrt %203 : vector<1x16xf32>
    %205 = vector.broadcast %204 : vector<1x16xf32> to vector<4x16xf32>
    %206 = arith.mulf %201, %205 : vector<4x16xf32>
    %207 = vector.broadcast %182 : vector<1x16xf32> to vector<4x16xf32>
    %208 = arith.mulf %206, %207 : vector<4x16xf32>
    %209 = vector.broadcast %184 : vector<1x16xf32> to vector<4x16xf32>
    %210 = arith.addf %208, %209 : vector<4x16xf32>
    %cst_125 = arith.constant 0.000000e+00 : f32
    %211 = vector.broadcast %cst_125 : f32 to vector<4x16xf32>
    %212 = arith.maximumf %210, %211 : vector<4x16xf32>
    %213 = arith.truncf %212 : vector<4x16xf32> to vector<4x16xbf16>
    %c1_126 = arith.constant 1 : index
    %c0_127 = arith.constant 0 : index
    %c0_128 = arith.constant 0 : index
    %214 = vector.load %arg13[%c1_126, %c0_127, %c0_128] : memref<2x16x32xbf16, #tpu.memory_space<vmem>>, vector<1x16x32xbf16>
    %215 = vector.shape_cast %214 : vector<1x16x32xbf16> to vector<16x32xbf16>
    %cst_129 = arith.constant dense<0.000000e+00> : vector<4x32xf32>
    %216 = tpu.matmul %213, %215, %cst_129 {dimension_numbers = #tpu.dot_dimension_numbers<[1], [0], [0], [1], [0, 0, 1, 1], [], []>} : vector<4x16xbf16>, vector<16x32xbf16>, vector<4x32xf32> -> vector<4x32xf32>
    %217 = arith.addf %137, %216 : vector<4x32xf32>
    %218 = arith.truncf %217 : vector<4x32xf32> to vector<4x32xbf16>
    %c0_130 = arith.constant 0 : index
    %c0_131 = arith.constant 0 : index
    %219 = vector.load %arg16[%c0_130, %c0_131] : memref<32x16xbf16, #tpu.memory_space<vmem>>, vector<32x16xbf16>
    %cst_132 = arith.constant dense<0.000000e+00> : vector<4x16xf32>
    %220 = tpu.matmul %218, %219, %cst_132 {dimension_numbers = #tpu.dot_dimension_numbers<[1], [0], [0], [1], [0, 0, 1, 1], [], []>} : vector<4x32xbf16>, vector<32x16xbf16>, vector<4x16xf32> -> vector<4x16xf32>
    %c0_133 = arith.constant 0 : index
    %c0_134 = arith.constant 0 : index
    %221 = vector.load %arg17[%c0_133, %c0_134] : memref<1x16xf32, #tpu.memory_space<vmem>>, vector<1x16xf32>
    %222 = vector.broadcast %221 : vector<1x16xf32> to vector<4x16xf32>
    %223 = arith.addf %220, %222 : vector<4x16xf32>
    %c0_135 = arith.constant 0 : index
    %c0_136 = arith.constant 0 : index
    %224 = vector.load %arg18[%c0_135, %c0_136] : memref<32x16xf32, #tpu.memory_space<vmem>>, vector<32x16xf32>
    %225 = arith.mulf %223, %223 : vector<4x16xf32>
    %cst_137 = arith.constant dense<0.000000e+00> : vector<4xf32>
    %226 = vector.multi_reduction <add>, %225, %cst_137 [1] : vector<4x16xf32> to vector<4xf32>
    %227 = vector.shape_cast %226 : vector<4xf32> to vector<4x1xf32>
    %cst_138 = arith.constant dense<0.000000e+00> : vector<4x32xf32>
    %228 = tpu.matmul %223, %224, %cst_138 {dimension_numbers = #tpu.dot_dimension_numbers<[1], [1], [0], [0], [0, 0, 1, 0], [], []>} : vector<4x16xf32>, vector<32x16xf32>, vector<4x32xf32> -> vector<4x32xf32>
    %c0_139 = arith.constant 0 : index
    %c0_140 = arith.constant 0 : index
    %229 = vector.load %arg19[%c0_139, %c0_140] : memref<1x32xf32, #tpu.memory_space<vmem>>, vector<1x32xf32>
    %230 = vector.broadcast %227 : vector<4x1xf32> to vector<4x32xf32>
    %231 = vector.broadcast %229 : vector<1x32xf32> to vector<4x32xf32>
    %232 = arith.addf %230, %231 : vector<4x32xf32>
    %cst_141 = arith.constant 2.000000e+00 : f32
    %233 = vector.broadcast %cst_141 : f32 to vector<4x32xf32>
    %234 = arith.mulf %233, %228 : vector<4x32xf32>
    %235 = arith.subf %232, %234 : vector<4x32xf32>
    %cst_142 = arith.constant dense<0x7F800000> : vector<4xf32>
    %236 = vector.multi_reduction <minimumf>, %235, %cst_142 [1] : vector<4x32xf32> to vector<4xf32>
    %237 = vector.shape_cast %236 : vector<4xf32> to vector<4x1xf32>
    %238 = tpu.iota {dimensions = array<i32: 1>} : vector<4x32xi32>
    %239 = arith.sitofp %238 : vector<4x32xi32> to vector<4x32xf32>
    %240 = vector.broadcast %237 : vector<4x1xf32> to vector<4x32xf32>
    %241 = arith.cmpf oeq, %235, %240 : vector<4x32xf32>
    %cst_143 = arith.constant 3.200000e+01 : f32
    %242 = vector.broadcast %cst_143 : f32 to vector<4x32xf32>
    %243 = arith.select %241, %239, %242 : vector<4x32xi1>, vector<4x32xf32>
    %cst_144 = arith.constant dense<0x7F800000> : vector<4xf32>
    %244 = vector.multi_reduction <minimumf>, %243, %cst_144 [1] : vector<4x32xf32> to vector<4xf32>
    %245 = vector.shape_cast %244 : vector<4xf32> to vector<4x1xf32>
    %246 = vector.broadcast %245 : vector<4x1xf32> to vector<4x32xf32>
    %247 = arith.cmpf oeq, %239, %246 : vector<4x32xf32>
    %248 = arith.extui %247 : vector<4x32xi1> to vector<4x32xi32>
    %249 = arith.sitofp %248 : vector<4x32xi32> to vector<4x32xf32>
    %cst_145 = arith.constant dense<0.000000e+00> : vector<4x16xf32>
    %250 = tpu.matmul %249, %224, %cst_145 {dimension_numbers = #tpu.dot_dimension_numbers<[1], [0], [0], [1], [0, 0, 1, 1], [], []>} : vector<4x32xf32>, vector<32x16xf32>, vector<4x16xf32> -> vector<4x16xf32>
    %251 = arith.subf %250, %223 : vector<4x16xf32>
    %252 = arith.mulf %251, %251 : vector<4x16xf32>
    %cst_146 = arith.constant dense<0.000000e+00> : vector<4xf32>
    %253 = vector.multi_reduction <add>, %252, %cst_146 [1] : vector<4x16xf32> to vector<4xf32>
    %254 = vector.shape_cast %253 : vector<4xf32> to vector<4x1xf32>
    %cst_147 = arith.constant dense<0.000000e+00> : vector<1xf32>
    %255 = vector.multi_reduction <add>, %254, %cst_147 [0] : vector<4x1xf32> to vector<1xf32>
    %256 = vector.shape_cast %255 : vector<1xf32> to vector<1x1xf32>
    %c0_148 = arith.constant 0 : index
    %c0_149 = arith.constant 0 : index
    %c0_150 = arith.constant 0 : index
    %257 = vector.load %arg38[%c0_148, %c0_149, %c0_150] : memref<1x1x1xf32, #tpu.memory_space<vmem>>, vector<1x1x1xf32>
    %258 = vector.shape_cast %257 : vector<1x1x1xf32> to vector<1x1xf32>
    %259 = vector.shape_cast %256 : vector<1x1xf32> to vector<1x1x1xf32>
    tpu.vector_store %arg38[%c0_148, %c0_149, %c0_150], %259 {strides = array<i32>} : memref<1x1x1xf32, #tpu.memory_space<vmem>>, vector<1x1x1xf32>,
    %cst_151 = arith.constant dense<0.000000e+00> : vector<32xf32>
    %260 = vector.multi_reduction <add>, %249, %cst_151 [0] : vector<4x32xf32> to vector<32xf32>
    %261 = vector.shape_cast %260 : vector<32xf32> to vector<1x32xf32>
    %c0_152 = arith.constant 0 : index
    %c0_153 = arith.constant 0 : index
    %c0_154 = arith.constant 0 : index
    %262 = vector.load %arg39[%c0_152, %c0_153, %c0_154] : memref<1x1x32xf32, #tpu.memory_space<vmem>>, vector<1x1x32xf32>
    %263 = vector.shape_cast %262 : vector<1x1x32xf32> to vector<1x32xf32>
    %264 = vector.shape_cast %261 : vector<1x32xf32> to vector<1x1x32xf32>
    tpu.vector_store %arg39[%c0_152, %c0_153, %c0_154], %264 {strides = array<i32>} : memref<1x1x32xf32, #tpu.memory_space<vmem>>, vector<1x1x32xf32>,
    %c0_155 = arith.constant 0 : index
    %c0_156 = arith.constant 0 : index
    %c0_157 = arith.constant 0 : index
    %265 = vector.load %arg36[%c0_155, %c0_156, %c0_157] : memref<1x4x32xf32, #tpu.memory_space<vmem>>, vector<1x4x32xf32>
    %266 = vector.shape_cast %265 : vector<1x4x32xf32> to vector<4x32xf32>
    %267 = vector.shape_cast %249 : vector<4x32xf32> to vector<1x4x32xf32>
    tpu.vector_store %arg36[%c0_155, %c0_156, %c0_157], %267 {strides = array<i32>} : memref<1x4x32xf32, #tpu.memory_space<vmem>>, vector<1x4x32xf32>,
    %268 = tpu.transpose %250, [1, 0] : vector<4x16xf32> -> vector<16x4xf32>
    %c0_158 = arith.constant 0 : index
    %c0_159 = arith.constant 0 : index
    %c0_160 = arith.constant 0 : index
    %269 = vector.load %arg35[%c0_158, %c0_159, %c0_160] : memref<1x16x4xf32, #tpu.memory_space<vmem>>, vector<1x16x4xf32>
    %270 = vector.shape_cast %269 : vector<1x16x4xf32> to vector<16x4xf32>
    %271 = vector.shape_cast %268 : vector<16x4xf32> to vector<1x16x4xf32>
    tpu.vector_store %arg35[%c0_158, %c0_159, %c0_160], %271 {strides = array<i32>} : memref<1x16x4xf32, #tpu.memory_space<vmem>>, vector<1x16x4xf32>,
    %cst_161 = arith.constant dense<0.000000e+00> : vector<16xf32>
    %272 = vector.multi_reduction <add>, %250, %cst_161 [0] : vector<4x16xf32> to vector<16xf32>
    %273 = vector.shape_cast %272 : vector<16xf32> to vector<1x16xf32>
    %cst_162 = arith.constant 4.000000e+00 : f32
    %274 = vector.broadcast %cst_162 : f32 to vector<1x16xf32>
    %275 = arith.divf %273, %274 : vector<1x16xf32>
    %c0_163 = arith.constant 0 : index
    %c0_164 = arith.constant 0 : index
    %276 = vector.load %arg28[%c0_163, %c0_164] : memref<16x128xf32, #tpu.memory_space<vmem>>, vector<16x128xf32>
    %cst_165 = arith.constant dense<0.000000e+00> : vector<1x128xf32>
    %277 = tpu.matmul %275, %276, %cst_165 {dimension_numbers = #tpu.dot_dimension_numbers<[1], [0], [0], [1], [0, 0, 1, 1], [], []>} : vector<1x16xf32>, vector<16x128xf32>, vector<1x128xf32> -> vector<1x128xf32>
    %c0_166 = arith.constant 0 : index
    %c0_167 = arith.constant 0 : index
    %278 = vector.load %arg29[%c0_166, %c0_167] : memref<1x128xf32, #tpu.memory_space<vmem>>, vector<1x128xf32>
    %279 = arith.addf %277, %278 : vector<1x128xf32>
    %cst_168 = arith.constant 0.000000e+00 : f32
    %280 = vector.broadcast %cst_168 : f32 to vector<1x128xf32>
    %281 = arith.maximumf %279, %280 : vector<1x128xf32>
    %c0_169 = arith.constant 0 : index
    %c0_170 = arith.constant 0 : index
    %282 = vector.load %arg30[%c0_169, %c0_170] : memref<128x64xf32, #tpu.memory_space<vmem>>, vector<128x64xf32>
    %cst_171 = arith.constant dense<0.000000e+00> : vector<1x64xf32>
    %283 = tpu.matmul %281, %282, %cst_171 {dimension_numbers = #tpu.dot_dimension_numbers<[1], [0], [0], [1], [0, 0, 1, 1], [], []>} : vector<1x128xf32>, vector<128x64xf32>, vector<1x64xf32> -> vector<1x64xf32>
    %c0_172 = arith.constant 0 : index
    %c0_173 = arith.constant 0 : index
    %284 = vector.load %arg31[%c0_172, %c0_173] : memref<1x64xf32, #tpu.memory_space<vmem>>, vector<1x64xf32>
    %285 = arith.addf %283, %284 : vector<1x64xf32>
    %cst_174 = arith.constant 0.000000e+00 : f32
    %286 = vector.broadcast %cst_174 : f32 to vector<1x64xf32>
    %287 = arith.maximumf %285, %286 : vector<1x64xf32>
    %c0_175 = arith.constant 0 : index
    %c0_176 = arith.constant 0 : index
    %288 = vector.load %arg32[%c0_175, %c0_176] : memref<64x4xf32, #tpu.memory_space<vmem>>, vector<64x4xf32>
    %cst_177 = arith.constant dense<0.000000e+00> : vector<1x4xf32>
    %289 = tpu.matmul %287, %288, %cst_177 {dimension_numbers = #tpu.dot_dimension_numbers<[1], [0], [0], [1], [0, 0, 1, 1], [], []>} : vector<1x64xf32>, vector<64x4xf32>, vector<1x4xf32> -> vector<1x4xf32>
    %c0_178 = arith.constant 0 : index
    %c0_179 = arith.constant 0 : index
    %290 = vector.load %arg33[%c0_178, %c0_179] : memref<1x4xf32, #tpu.memory_space<vmem>>, vector<1x4xf32>
    %291 = arith.addf %289, %290 : vector<1x4xf32>
    %c0_180 = arith.constant 0 : index
    %c0_181 = arith.constant 0 : index
    %c0_182 = arith.constant 0 : index
    %292 = vector.load %arg37[%c0_180, %c0_181, %c0_182] : memref<1x1x4xf32, #tpu.memory_space<vmem>>, vector<1x1x4xf32>
    %293 = vector.shape_cast %292 : vector<1x1x4xf32> to vector<1x4xf32>
    %294 = vector.shape_cast %291 : vector<1x4xf32> to vector<1x1x4xf32>
    tpu.vector_store %arg37[%c0_180, %c0_181, %c0_182], %294 {strides = array<i32>} : memref<1x1x4xf32, #tpu.memory_space<vmem>>, vector<1x1x4xf32>,
    %cst_183 = arith.constant 0.000000e+00 : f32
    %295 = vector.broadcast %cst_183 : f32 to vector<1x32xf32>
    %c0_184 = arith.constant 0 : index
    %c0_185 = arith.constant 0 : index
    %296 = vector.load %arg42[%c0_184, %c0_185] : memref<10x32xf32, #tpu.memory_space<vmem>>, vector<1x32xf32>
    tpu.vector_store %arg42[%c0_184, %c0_185], %295 {strides = array<i32>} : memref<10x32xf32, #tpu.memory_space<vmem>>, vector<1x32xf32>,
    %cst_186 = arith.constant 0.000000e+00 : f32
    %297 = vector.broadcast %cst_186 : f32 to vector<1x32xf32>
    %c9_187 = arith.constant 9 : index
    %c0_188 = arith.constant 0 : index
    %298 = vector.load %arg42[%c9_187, %c0_188] : memref<10x32xf32, #tpu.memory_space<vmem>>, vector<1x32xf32>
    tpu.vector_store %arg42[%c9_187, %c0_188], %297 {strides = array<i32>} : memref<10x32xf32, #tpu.memory_space<vmem>>, vector<1x32xf32>,
    %299 = arith.truncf %250 : vector<4x16xf32> to vector<4x16xbf16>
    %cst_189 = arith.constant 0.000000e+00 : bf16
    %300 = vector.broadcast %cst_189 : bf16 to vector<1x16xbf16>
    %301 = tpu.concatenate %299, %300 in 0 : vector<4x16xbf16>, vector<1x16xbf16> -> vector<5x16xbf16>
    %c0_190 = arith.constant 0 : index
    %c0_191 = arith.constant 0 : index
    %302 = vector.load %arg20[%c0_190, %c0_191] : memref<16x32xbf16, #tpu.memory_space<vmem>>, vector<16x32xbf16>
    %c0_192 = arith.constant 0 : index
    %c0_193 = arith.constant 0 : index
    %303 = vector.load %arg21[%c0_192, %c0_193] : memref<32x32xbf16, #tpu.memory_space<vmem>>, vector<32x32xbf16>
    %c0_194 = arith.constant 0 : index
    %c0_195 = arith.constant 0 : index
    %304 = vector.load %arg22[%c0_194, %c0_195] : memref<1x32xf32, #tpu.memory_space<vmem>>, vector<1x32xf32>
    %305 = vector.extract_strided_slice %301 {offsets = [0, 0], sizes = [4, 16], strides = [1, 1]} : vector<5x16xbf16> to vector<4x16xbf16>
    %cst_196 = arith.constant dense<0.000000e+00> : vector<4x32xf32>
    %306 = tpu.matmul %305, %302, %cst_196 {dimension_numbers = #tpu.dot_dimension_numbers<[1], [0], [0], [1], [0, 0, 1, 1], [], []>} : vector<4x16xbf16>, vector<16x32xbf16>, vector<4x32xf32> -> vector<4x32xf32>
    %307 = vector.broadcast %304 : vector<1x32xf32> to vector<4x32xf32>
    %308 = arith.addf %306, %307 : vector<4x32xf32>
    %cst_197 = arith.constant 0.000000e+00 : f32
    %309 = vector.broadcast %cst_197 : f32 to vector<4x32xf32>
    %310 = arith.maximumf %308, %309 : vector<4x32xf32>
    %c1_198 = arith.constant 1 : index
    %c0_199 = arith.constant 0 : index
    %311 = tpu.strided_load %arg42[%c1_198, %c0_199] {strides = array<i32: 2, 1>} : memref<10x32xf32, #tpu.memory_space<vmem>>, vector<4x32xf32>
    tpu.strided_store %arg42[%c1_198, %c0_199], %310 {strides = array<i32: 2, 1>} : memref<10x32xf32, #tpu.memory_space<vmem>>, vector<4x32xf32>
    %312 = vector.extract_strided_slice %301 {offsets = [0, 0], sizes = [4, 16], strides = [1, 1]} : vector<5x16xbf16> to vector<4x16xbf16>
    %313 = vector.extract_strided_slice %301 {offsets = [1, 0], sizes = [4, 16], strides = [1, 1]} : vector<5x16xbf16> to vector<4x16xbf16>
    %314 = tpu.concatenate %312, %313 in 1 : vector<4x16xbf16>, vector<4x16xbf16> -> vector<4x32xbf16>
    %cst_200 = arith.constant dense<0.000000e+00> : vector<4x32xf32>
    %315 = tpu.matmul %314, %303, %cst_200 {dimension_numbers = #tpu.dot_dimension_numbers<[1], [0], [0], [1], [0, 0, 1, 1], [], []>} : vector<4x32xbf16>, vector<32x32xbf16>, vector<4x32xf32> -> vector<4x32xf32>
    %316 = vector.broadcast %304 : vector<1x32xf32> to vector<4x32xf32>
    %317 = arith.addf %315, %316 : vector<4x32xf32>
    %cst_201 = arith.constant 0.000000e+00 : f32
    %318 = vector.broadcast %cst_201 : f32 to vector<4x32xf32>
    %319 = arith.maximumf %317, %318 : vector<4x32xf32>
    %c2_202 = arith.constant 2 : index
    %c0_203 = arith.constant 0 : index
    %320 = tpu.strided_load %arg42[%c2_202, %c0_203] {strides = array<i32: 2, 1>} : memref<10x32xf32, #tpu.memory_space<vmem>>, vector<4x32xf32>
    tpu.strided_store %arg42[%c2_202, %c0_203], %319 {strides = array<i32: 2, 1>} : memref<10x32xf32, #tpu.memory_space<vmem>>, vector<4x32xf32>
    %cst_204 = arith.constant 0.000000e+00 : f32
    %321 = vector.broadcast %cst_204 : f32 to vector<3x16xf32>
    %c0_205 = arith.constant 0 : index
    %c0_206 = arith.constant 0 : index
    %322 = vector.load %arg43[%c0_205, %c0_206] : memref<22x16xf32, #tpu.memory_space<vmem>>, vector<3x16xf32>
    tpu.vector_store %arg43[%c0_205, %c0_206], %321 {strides = array<i32>} : memref<22x16xf32, #tpu.memory_space<vmem>>, vector<3x16xf32>,
    %cst_207 = arith.constant 0.000000e+00 : f32
    %323 = vector.broadcast %cst_207 : f32 to vector<3x16xf32>
    %c19 = arith.constant 19 : index
    %c0_208 = arith.constant 0 : index
    %324 = vector.load %arg43[%c19, %c0_208] : memref<22x16xf32, #tpu.memory_space<vmem>>, vector<3x16xf32>
    tpu.vector_store %arg43[%c19, %c0_208], %323 {strides = array<i32>} : memref<22x16xf32, #tpu.memory_space<vmem>>, vector<3x16xf32>,
    %c0_209 = arith.constant 0 : index
    %c0_210 = arith.constant 0 : index
    %325 = vector.load %arg42[%c0_209, %c0_210] : memref<10x32xf32, #tpu.memory_space<vmem>>, vector<10x32xf32>
    %326 = arith.truncf %325 : vector<10x32xf32> to vector<10x32xbf16>
    %c0_211 = arith.constant 0 : index
    %c0_212 = arith.constant 0 : index
    %327 = vector.load %arg23[%c0_211, %c0_212] : memref<96x16xbf16, #tpu.memory_space<vmem>>, vector<96x16xbf16>
    %c0_213 = arith.constant 0 : index
    %c0_214 = arith.constant 0 : index
    %328 = vector.load %arg24[%c0_213, %c0_214] : memref<64x16xbf16, #tpu.memory_space<vmem>>, vector<64x16xbf16>
    %c0_215 = arith.constant 0 : index
    %c0_216 = arith.constant 0 : index
    %329 = vector.load %arg25[%c0_215, %c0_216] : memref<1x16xf32, #tpu.memory_space<vmem>>, vector<1x16xf32>
    %330 = vector.extract_strided_slice %326 {offsets = [0, 0], sizes = [8, 32], strides = [1, 1]} : vector<10x32xbf16> to vector<8x32xbf16>
    %331 = vector.extract_strided_slice %326 {offsets = [1, 0], sizes = [8, 32], strides = [1, 1]} : vector<10x32xbf16> to vector<8x32xbf16>
    %332 = vector.extract_strided_slice %326 {offsets = [2, 0], sizes = [8, 32], strides = [1, 1]} : vector<10x32xbf16> to vector<8x32xbf16>
    %333 = tpu.concatenate %330, %331, %332 in 1 : vector<8x32xbf16>, vector<8x32xbf16>, vector<8x32xbf16> -> vector<8x96xbf16>
    %cst_217 = arith.constant dense<0.000000e+00> : vector<8x16xf32>
    %334 = tpu.matmul %333, %327, %cst_217 {dimension_numbers = #tpu.dot_dimension_numbers<[1], [0], [0], [1], [0, 0, 1, 1], [], []>} : vector<8x96xbf16>, vector<96x16xbf16>, vector<8x16xf32> -> vector<8x16xf32>
    %335 = vector.broadcast %329 : vector<1x16xf32> to vector<8x16xf32>
    %336 = arith.addf %334, %335 : vector<8x16xf32>
    %cst_218 = arith.constant 0.000000e+00 : f32
    %337 = vector.broadcast %cst_218 : f32 to vector<8x16xf32>
    %338 = arith.maximumf %336, %337 : vector<8x16xf32>
    %c3_219 = arith.constant 3 : index
    %c0_220 = arith.constant 0 : index
    %339 = tpu.strided_load %arg43[%c3_219, %c0_220] {strides = array<i32: 2, 1>} : memref<22x16xf32, #tpu.memory_space<vmem>>, vector<8x16xf32>
    tpu.strided_store %arg43[%c3_219, %c0_220], %338 {strides = array<i32: 2, 1>} : memref<22x16xf32, #tpu.memory_space<vmem>>, vector<8x16xf32>
    %340 = vector.extract_strided_slice %326 {offsets = [1, 0], sizes = [8, 32], strides = [1, 1]} : vector<10x32xbf16> to vector<8x32xbf16>
    %341 = vector.extract_strided_slice %326 {offsets = [2, 0], sizes = [8, 32], strides = [1, 1]} : vector<10x32xbf16> to vector<8x32xbf16>
    %342 = tpu.concatenate %340, %341 in 1 : vector<8x32xbf16>, vector<8x32xbf16> -> vector<8x64xbf16>
    %cst_221 = arith.constant dense<0.000000e+00> : vector<8x16xf32>
    %343 = tpu.matmul %342, %328, %cst_221 {dimension_numbers = #tpu.dot_dimension_numbers<[1], [0], [0], [1], [0, 0, 1, 1], [], []>} : vector<8x64xbf16>, vector<64x16xbf16>, vector<8x16xf32> -> vector<8x16xf32>
    %344 = vector.broadcast %329 : vector<1x16xf32> to vector<8x16xf32>
    %345 = arith.addf %343, %344 : vector<8x16xf32>
    %cst_222 = arith.constant 0.000000e+00 : f32
    %346 = vector.broadcast %cst_222 : f32 to vector<8x16xf32>
    %347 = arith.maximumf %345, %346 : vector<8x16xf32>
    %c4_223 = arith.constant 4 : index
    %c0_224 = arith.constant 0 : index
    %348 = tpu.strided_load %arg43[%c4_223, %c0_224] {strides = array<i32: 2, 1>} : memref<22x16xf32, #tpu.memory_space<vmem>>, vector<8x16xf32>
    tpu.strided_store %arg43[%c4_223, %c0_224], %347 {strides = array<i32: 2, 1>} : memref<22x16xf32, #tpu.memory_space<vmem>>, vector<8x16xf32>
    %c0_225 = arith.constant 0 : index
    %c0_226 = arith.constant 0 : index
    %349 = vector.load %arg43[%c0_225, %c0_226] : memref<22x16xf32, #tpu.memory_space<vmem>>, vector<22x16xf32>
    %350 = arith.truncf %349 : vector<22x16xf32> to vector<22x16xbf16>
    %351 = vector.extract_strided_slice %350 {offsets = [0, 0], sizes = [16, 16], strides = [1, 1]} : vector<22x16xbf16> to vector<16x16xbf16>
    %352 = vector.extract_strided_slice %350 {offsets = [1, 0], sizes = [16, 16], strides = [1, 1]} : vector<22x16xbf16> to vector<16x16xbf16>
    %353 = vector.extract_strided_slice %350 {offsets = [2, 0], sizes = [16, 16], strides = [1, 1]} : vector<22x16xbf16> to vector<16x16xbf16>
    %354 = vector.extract_strided_slice %350 {offsets = [3, 0], sizes = [16, 16], strides = [1, 1]} : vector<22x16xbf16> to vector<16x16xbf16>
    %355 = vector.extract_strided_slice %350 {offsets = [4, 0], sizes = [16, 16], strides = [1, 1]} : vector<22x16xbf16> to vector<16x16xbf16>
    %356 = vector.extract_strided_slice %350 {offsets = [5, 0], sizes = [16, 16], strides = [1, 1]} : vector<22x16xbf16> to vector<16x16xbf16>
    %357 = vector.extract_strided_slice %350 {offsets = [6, 0], sizes = [16, 16], strides = [1, 1]} : vector<22x16xbf16> to vector<16x16xbf16>
    %358 = tpu.concatenate %351, %352, %353, %354, %355, %356, %357 in 1 : vector<16x16xbf16>, vector<16x16xbf16>, vector<16x16xbf16>, vector<16x16xbf16>, vector<16x16xbf16>, vector<16x16xbf16>, vector<16x16xbf16> -> vector<16x112xbf16>
    %c0_227 = arith.constant 0 : index
    %c0_228 = arith.constant 0 : index
    %359 = vector.load %arg26[%c0_227, %c0_228] : memref<112x16xbf16, #tpu.memory_space<vmem>>, vector<112x16xbf16>
    %cst_229 = arith.constant dense<0.000000e+00> : vector<16x16xf32>
    %360 = tpu.matmul %358, %359, %cst_229 {dimension_numbers = #tpu.dot_dimension_numbers<[1], [0], [0], [1], [0, 0, 1, 1], [], []>} : vector<16x112xbf16>, vector<112x16xbf16>, vector<16x16xf32> -> vector<16x16xf32>
    %c0_230 = arith.constant 0 : index
    %c0_231 = arith.constant 0 : index
    %361 = vector.load %arg27[%c0_230, %c0_231] : memref<1x16xf32, #tpu.memory_space<vmem>>, vector<1x16xf32>
    %362 = vector.broadcast %361 : vector<1x16xf32> to vector<16x16xf32>
    %363 = arith.addf %360, %362 : vector<16x16xf32>
    %364 = tpu.transpose %363, [1, 0] : vector<16x16xf32> -> vector<16x16xf32>
    %c0_232 = arith.constant 0 : index
    %c0_233 = arith.constant 0 : index
    %c0_234 = arith.constant 0 : index
    %365 = vector.load %arg34[%c0_232, %c0_233, %c0_234] : memref<1x16x16xf32, #tpu.memory_space<vmem>>, vector<1x16x16xf32>
    %366 = vector.shape_cast %365 : vector<1x16x16xf32> to vector<16x16xf32>
    %367 = vector.shape_cast %364 : vector<16x16xf32> to vector<1x16x16xf32>
    tpu.vector_store %arg34[%c0_232, %c0_233, %c0_234], %367 {strides = array<i32>} : memref<1x16x16xf32, #tpu.memory_space<vmem>>, vector<1x16x16xf32>,
    return
  }
  func.func @transform_0(%arg0: i32) -> (i32, i32, i32) {
    %c0_i32 = arith.constant 0 : i32
    %c0_i32_0 = arith.constant 0 : i32
    %c0_i32_1 = arith.constant 0 : i32
    return %arg0, %c0_i32, %c0_i32_0 : i32, i32, i32
  }
  func.func @transform_1(%arg0: i32) -> (i32, i32) {
    %c0_i32 = arith.constant 0 : i32
    %c0_i32_0 = arith.constant 0 : i32
    %c0_i32_1 = arith.constant 0 : i32
    return %c0_i32, %c0_i32_0 : i32, i32
  }
  func.func @transform_2(%arg0: i32) -> (i32, i32) {
    %c0_i32 = arith.constant 0 : i32
    %c0_i32_0 = arith.constant 0 : i32
    %c0_i32_1 = arith.constant 0 : i32
    return %c0_i32, %c0_i32_0 : i32, i32
  }
  func.func @transform_3(%arg0: i32) -> (i32, i32) {
    %c0_i32 = arith.constant 0 : i32
    %c0_i32_0 = arith.constant 0 : i32
    %c0_i32_1 = arith.constant 0 : i32
    return %c0_i32, %c0_i32_0 : i32, i32
  }
  func.func @transform_4(%arg0: i32) -> (i32, i32) {
    %c0_i32 = arith.constant 0 : i32
    %c0_i32_0 = arith.constant 0 : i32
    %c0_i32_1 = arith.constant 0 : i32
    return %c0_i32, %c0_i32_0 : i32, i32
  }
  func.func @transform_5(%arg0: i32) -> (i32, i32) {
    %c0_i32 = arith.constant 0 : i32
    %c0_i32_0 = arith.constant 0 : i32
    %c0_i32_1 = arith.constant 0 : i32
    return %c0_i32, %c0_i32_0 : i32, i32
  }
  func.func @transform_6(%arg0: i32) -> (i32, i32) {
    %c0_i32 = arith.constant 0 : i32
    %c0_i32_0 = arith.constant 0 : i32
    %c0_i32_1 = arith.constant 0 : i32
    return %c0_i32, %c0_i32_0 : i32, i32
  }
  func.func @transform_7(%arg0: i32) -> (i32, i32, i32) {
    %c0_i32 = arith.constant 0 : i32
    %c0_i32_0 = arith.constant 0 : i32
    %c0_i32_1 = arith.constant 0 : i32
    %c0_i32_2 = arith.constant 0 : i32
    return %c0_i32, %c0_i32_0, %c0_i32_1 : i32, i32, i32
  }
  func.func @transform_8(%arg0: i32) -> (i32, i32, i32) {
    %c0_i32 = arith.constant 0 : i32
    %c0_i32_0 = arith.constant 0 : i32
    %c0_i32_1 = arith.constant 0 : i32
    %c0_i32_2 = arith.constant 0 : i32
    return %c0_i32, %c0_i32_0, %c0_i32_1 : i32, i32, i32
  }
  func.func @transform_9(%arg0: i32) -> (i32, i32, i32) {
    %c0_i32 = arith.constant 0 : i32
    %c0_i32_0 = arith.constant 0 : i32
    %c0_i32_1 = arith.constant 0 : i32
    %c0_i32_2 = arith.constant 0 : i32
    return %c0_i32, %c0_i32_0, %c0_i32_1 : i32, i32, i32
  }
  func.func @transform_10(%arg0: i32) -> (i32, i32, i32) {
    %c0_i32 = arith.constant 0 : i32
    %c0_i32_0 = arith.constant 0 : i32
    %c0_i32_1 = arith.constant 0 : i32
    %c0_i32_2 = arith.constant 0 : i32
    return %c0_i32, %c0_i32_0, %c0_i32_1 : i32, i32, i32
  }
  func.func @transform_11(%arg0: i32) -> (i32, i32, i32) {
    %c0_i32 = arith.constant 0 : i32
    %c0_i32_0 = arith.constant 0 : i32
    %c0_i32_1 = arith.constant 0 : i32
    %c0_i32_2 = arith.constant 0 : i32
    return %c0_i32, %c0_i32_0, %c0_i32_1 : i32, i32, i32
  }
  func.func @transform_12(%arg0: i32) -> (i32, i32, i32) {
    %c0_i32 = arith.constant 0 : i32
    %c0_i32_0 = arith.constant 0 : i32
    %c0_i32_1 = arith.constant 0 : i32
    %c0_i32_2 = arith.constant 0 : i32
    return %c0_i32, %c0_i32_0, %c0_i32_1 : i32, i32, i32
  }
  func.func @transform_13(%arg0: i32) -> (i32, i32) {
    %c0_i32 = arith.constant 0 : i32
    %c0_i32_0 = arith.constant 0 : i32
    %c0_i32_1 = arith.constant 0 : i32
    return %c0_i32, %c0_i32_0 : i32, i32
  }
  func.func @transform_14(%arg0: i32) -> (i32, i32) {
    %c0_i32 = arith.constant 0 : i32
    %c0_i32_0 = arith.constant 0 : i32
    %c0_i32_1 = arith.constant 0 : i32
    return %c0_i32, %c0_i32_0 : i32, i32
  }
  func.func @transform_15(%arg0: i32) -> (i32, i32) {
    %c0_i32 = arith.constant 0 : i32
    %c0_i32_0 = arith.constant 0 : i32
    %c0_i32_1 = arith.constant 0 : i32
    return %c0_i32, %c0_i32_0 : i32, i32
  }
  func.func @transform_16(%arg0: i32) -> (i32, i32) {
    %c0_i32 = arith.constant 0 : i32
    %c0_i32_0 = arith.constant 0 : i32
    %c0_i32_1 = arith.constant 0 : i32
    return %c0_i32, %c0_i32_0 : i32, i32
  }
  func.func @transform_17(%arg0: i32) -> (i32, i32) {
    %c0_i32 = arith.constant 0 : i32
    %c0_i32_0 = arith.constant 0 : i32
    %c0_i32_1 = arith.constant 0 : i32
    return %c0_i32, %c0_i32_0 : i32, i32
  }
  func.func @transform_18(%arg0: i32) -> (i32, i32) {
    %c0_i32 = arith.constant 0 : i32
    %c0_i32_0 = arith.constant 0 : i32
    %c0_i32_1 = arith.constant 0 : i32
    return %c0_i32, %c0_i32_0 : i32, i32
  }
  func.func @transform_19(%arg0: i32) -> (i32, i32) {
    %c0_i32 = arith.constant 0 : i32
    %c0_i32_0 = arith.constant 0 : i32
    %c0_i32_1 = arith.constant 0 : i32
    return %c0_i32, %c0_i32_0 : i32, i32
  }
  func.func @transform_20(%arg0: i32) -> (i32, i32) {
    %c0_i32 = arith.constant 0 : i32
    %c0_i32_0 = arith.constant 0 : i32
    %c0_i32_1 = arith.constant 0 : i32
    return %c0_i32, %c0_i32_0 : i32, i32
  }
  func.func @transform_21(%arg0: i32) -> (i32, i32) {
    %c0_i32 = arith.constant 0 : i32
    %c0_i32_0 = arith.constant 0 : i32
    %c0_i32_1 = arith.constant 0 : i32
    return %c0_i32, %c0_i32_0 : i32, i32
  }
  func.func @transform_22(%arg0: i32) -> (i32, i32) {
    %c0_i32 = arith.constant 0 : i32
    %c0_i32_0 = arith.constant 0 : i32
    %c0_i32_1 = arith.constant 0 : i32
    return %c0_i32, %c0_i32_0 : i32, i32
  }
  func.func @transform_23(%arg0: i32) -> (i32, i32) {
    %c0_i32 = arith.constant 0 : i32
    %c0_i32_0 = arith.constant 0 : i32
    %c0_i32_1 = arith.constant 0 : i32
    return %c0_i32, %c0_i32_0 : i32, i32
  }
  func.func @transform_24(%arg0: i32) -> (i32, i32) {
    %c0_i32 = arith.constant 0 : i32
    %c0_i32_0 = arith.constant 0 : i32
    %c0_i32_1 = arith.constant 0 : i32
    return %c0_i32, %c0_i32_0 : i32, i32
  }
  func.func @transform_25(%arg0: i32) -> (i32, i32) {
    %c0_i32 = arith.constant 0 : i32
    %c0_i32_0 = arith.constant 0 : i32
    %c0_i32_1 = arith.constant 0 : i32
    return %c0_i32, %c0_i32_0 : i32, i32
  }
  func.func @transform_26(%arg0: i32) -> (i32, i32) {
    %c0_i32 = arith.constant 0 : i32
    %c0_i32_0 = arith.constant 0 : i32
    %c0_i32_1 = arith.constant 0 : i32
    return %c0_i32, %c0_i32_0 : i32, i32
  }
  func.func @transform_27(%arg0: i32) -> (i32, i32) {
    %c0_i32 = arith.constant 0 : i32
    %c0_i32_0 = arith.constant 0 : i32
    %c0_i32_1 = arith.constant 0 : i32
    return %c0_i32, %c0_i32_0 : i32, i32
  }
  func.func @transform_28(%arg0: i32) -> (i32, i32) {
    %c0_i32 = arith.constant 0 : i32
    %c0_i32_0 = arith.constant 0 : i32
    %c0_i32_1 = arith.constant 0 : i32
    return %c0_i32, %c0_i32_0 : i32, i32
  }
  func.func @transform_29(%arg0: i32) -> (i32, i32) {
    %c0_i32 = arith.constant 0 : i32
    %c0_i32_0 = arith.constant 0 : i32
    %c0_i32_1 = arith.constant 0 : i32
    return %c0_i32, %c0_i32_0 : i32, i32
  }
  func.func @transform_30(%arg0: i32) -> (i32, i32) {
    %c0_i32 = arith.constant 0 : i32
    %c0_i32_0 = arith.constant 0 : i32
    %c0_i32_1 = arith.constant 0 : i32
    return %c0_i32, %c0_i32_0 : i32, i32
  }
  func.func @transform_31(%arg0: i32) -> (i32, i32) {
    %c0_i32 = arith.constant 0 : i32
    %c0_i32_0 = arith.constant 0 : i32
    %c0_i32_1 = arith.constant 0 : i32
    return %c0_i32, %c0_i32_0 : i32, i32
  }
  func.func @transform_32(%arg0: i32) -> (i32, i32) {
    %c0_i32 = arith.constant 0 : i32
    %c0_i32_0 = arith.constant 0 : i32
    %c0_i32_1 = arith.constant 0 : i32
    return %c0_i32, %c0_i32_0 : i32, i32
  }
  func.func @transform_33(%arg0: i32) -> (i32, i32, i32) {
    %c0_i32 = arith.constant 0 : i32
    %c0_i32_0 = arith.constant 0 : i32
    %c0_i32_1 = arith.constant 0 : i32
    return %arg0, %c0_i32, %c0_i32_0 : i32, i32, i32
  }
  func.func @transform_34(%arg0: i32) -> (i32, i32, i32) {
    %c0_i32 = arith.constant 0 : i32
    %c0_i32_0 = arith.constant 0 : i32
    %c0_i32_1 = arith.constant 0 : i32
    return %arg0, %c0_i32, %c0_i32_0 : i32, i32, i32
  }
  func.func @transform_35(%arg0: i32) -> (i32, i32, i32) {
    %c0_i32 = arith.constant 0 : i32
    %c0_i32_0 = arith.constant 0 : i32
    %c0_i32_1 = arith.constant 0 : i32
    return %arg0, %c0_i32, %c0_i32_0 : i32, i32, i32
  }
  func.func @transform_36(%arg0: i32) -> (i32, i32, i32) {
    %c0_i32 = arith.constant 0 : i32
    %c0_i32_0 = arith.constant 0 : i32
    %c0_i32_1 = arith.constant 0 : i32
    return %arg0, %c0_i32, %c0_i32_0 : i32, i32, i32
  }
  func.func @transform_37(%arg0: i32) -> (i32, i32, i32) {
    %c0_i32 = arith.constant 0 : i32
    %c0_i32_0 = arith.constant 0 : i32
    %c0_i32_1 = arith.constant 0 : i32
    return %arg0, %c0_i32, %c0_i32_0 : i32, i32, i32
  }
  func.func @transform_38(%arg0: i32) -> (i32, i32, i32) {
    %c0_i32 = arith.constant 0 : i32
    %c0_i32_0 = arith.constant 0 : i32
    %c0_i32_1 = arith.constant 0 : i32
    return %arg0, %c0_i32, %c0_i32_0 : i32, i32, i32
  }
}

</mosaic_0001>

<llo_original>
// kernel: forward.1
$region0: #{forward.1}
  #allocation0 [shape = 'u32[]', space=smem, size = 0x4, offset = 0x4, fixed_abs, tag = 'smem constant byte address 0x4 - core index']
  #allocation1 [shape = 'u32[144,128]{1,0:T(1,128)}', space=vmem, size = 0x12000, scoped, tag = 'internal scratch']
  #allocation2 [shape = 'f32[20,8]{1,0:T(8,128)}', space=vmem, size = 0x3000, scoped, tag = 'scratch operand']
  #allocation3 [shape = 'f32[10,16]{1,0:T(8,128)}', space=vmem, size = 0x2000, scoped, tag = 'scratch operand']
  #allocation4 [shape = 'f32[10,32]{1,0:T(8,128)}', space=vmem, size = 0x2000, scoped, tag = 'scratch operand']
  #allocation5 [shape = 'f32[22,16]{1,0:T(8,128)}', space=vmem, size = 0x3000, scoped, tag = 'scratch operand']
  %s0 = inlined_call_operand.smem [shape: u32[39], index: -1, kind: input, shape index: {}]
  %s1 = sld [smem:[%s0]]
  %s2 = scalar_lea.smem %s0, 1
  %s3 = sld [smem:[%s2]]
  %s4 = scalar_lea.smem %s0, 2
  %s5 = sld [smem:[%s4]]
  %s6 = scalar_lea.smem %s0, 3
  %s7 = sld [smem:[%s6]]
  %s8 = scalar_lea.smem %s0, 4
  %s9 = sld [smem:[%s8]]
  %s10 = scalar_lea.smem %s0, 5
  %s11 = sld [smem:[%s10]]
  %s12 = scalar_lea.smem %s0, 6
  %s13 = sld [smem:[%s12]]
  %s14 = scalar_lea.smem %s0, 7
  %s15 = sld [smem:[%s14]]
  %s16 = scalar_lea.smem %s0, 8
  %s17 = sld [smem:[%s16]]
  %s18 = scalar_lea.smem %s0, 9
  %s19 = sld [smem:[%s18]]
  %s20 = scalar_lea.smem %s0, 10
  %s21 = sld [smem:[%s20]]
  %s22 = scalar_lea.smem %s0, 11
  %s23 = sld [smem:[%s22]]
  %s24 = scalar_lea.smem %s0, 12
  %s25 = sld [smem:[%s24]]
  %s26 = scalar_lea.smem %s0, 13
  %s27 = sld [smem:[%s26]]
  %s28 = scalar_lea.smem %s0, 14
  %s29 = sld [smem:[%s28]]
  %s30 = scalar_lea.smem %s0, 15
  %s31 = sld [smem:[%s30]]
  %s32 = scalar_lea.smem %s0, 16
  %s33 = sld [smem:[%s32]]
  %s34 = scalar_lea.smem %s0, 17
  %s35 = sld [smem:[%s34]]
  %s36 = scalar_lea.smem %s0, 18
  %s37 = sld [smem:[%s36]]
  %s38 = scalar_lea.smem %s0, 19
  %s39 = sld [smem:[%s38]]
  %s40 = scalar_lea.smem %s0, 20
  %s41 = sld [smem:[%s40]]
  %s42 = scalar_lea.smem %s0, 21
  %s43 = sld [smem:[%s42]]
  %s44 = scalar_lea.smem %s0, 22
  %s45 = sld [smem:[%s44]]
  %s46 = scalar_lea.smem %s0, 23
  %s47 = sld [smem:[%s46]]
  %s48 = scalar_lea.smem %s0, 24
  %s49 = sld [smem:[%s48]]
  %s50 = scalar_lea.smem %s0, 25
  %s51 = sld [smem:[%s50]]
  %s52 = scalar_lea.smem %s0, 26
  %s53 = sld [smem:[%s52]]
  %s54 = scalar_lea.smem %s0, 27
  %s55 = sld [smem:[%s54]]
  %s56 = scalar_lea.smem %s0, 28
  %s57 = sld [smem:[%s56]]
  %s58 = scalar_lea.smem %s0, 29
  %s59 = sld [smem:[%s58]]
  %s60 = scalar_lea.smem %s0, 30
  %s61 = sld [smem:[%s60]]
  %s62 = scalar_lea.smem %s0, 31
  %s63 = sld [smem:[%s62]]
  %s64 = scalar_lea.smem %s0, 32
  %s65 = sld [smem:[%s64]]
  %s66 = scalar_lea.smem %s0, 33
  %s67 = sld [smem:[%s66]]
  %s68 = scalar_lea.smem %s0, 34
  %s69 = sld [smem:[%s68]]
  %s70 = scalar_lea.smem %s0, 35
  %s71 = sld [smem:[%s70]]
  %s72 = scalar_lea.smem %s0, 36
  %s73 = sld [smem:[%s72]]
  %s74 = scalar_lea.smem %s0, 37
  %s75 = sld [smem:[%s74]]
  %s76 = scalar_lea.smem %s0, 38
  %s77 = sld [smem:[%s76]]
  %78 = xla_tuple %s67, %s69, %s71, %s73, %s75, %s77
  %s79 = sld [smem:[#allocation0]]
  $region205: #{forward.1} parent=0
    _
  %s81 = ssub.s32 1, %s79
  %s82 = scalar_select 0, %s81, %s79
  $region1: #{forward.1} parent=0
    #allocation6 [shape = 'u8[16384]{0}', space=vmem, size = 0x4000, scoped, tag = 'output window, operand 0']
    #allocation7 [shape = 's32[2]{0}', space=sflag, size = 0x8, scoped, tag = 'scoped memory for forward.1']
    #allocation8 [shape = 'u8[4096]{0}', space=vmem, size = 0x1000, scoped, tag = 'output window, operand 2']
    #allocation9 [shape = 's32[2]{0}', space=sflag, size = 0x8, scoped, tag = 'scoped memory for forward.1']
    #allocation10 [shape = 'u8[1024]{0}', space=vmem, size = 0x400, scoped, tag = 'output window, operand 3']
    %83 = vsyncpa [#allocation7], 0
    %s84 = scalar_lea.sflag [#allocation7], 1
    %85 = vsyncpa %s84, 0
    %86 = vsyncpa [#allocation9], 0
    %s87 = scalar_lea.sflag [#allocation9], 1
    %88 = vsyncpa %s87, 0
    loop: start=0, step=1, limit=4
    $region2: #{forward.1} parent=1 // loop_pre_header
      _
    $region3: #{forward.1} parent=1 // loop_header
      %s90 = sphi 0, %s94
      %p91 = scmp.ge.s32.totalorder %s90, 4
      %s100 = sphi 0, %s102
      %s103 = sphi 0, %s100
      %s104 = sphi 0, %s103
      %s120 = sphi 0, %s104
      %s124 = sphi 0, %s124
      %s126 = sphi 0, %s124
      %s127 = sphi 0, %s126
      %s141 = sphi 0, %s127
      %s145 = sphi 0, %s145
      %s147 = sphi 0, %s145
      %s148 = sphi 0, %s147
      %s162 = sphi 0, %s148
      %s166 = sphi 0, %s166
      %s168 = sphi 0, %s166
      %s169 = sphi 0, %s168
      %s183 = sphi 0, %s169
      %s187 = sphi 0, %s187
      %s189 = sphi 0, %s187
      %s190 = sphi 0, %s189
      %s204 = sphi 0, %s190
      %s208 = sphi 0, %s208
      %s210 = sphi 0, %s208
      %s211 = sphi 0, %s210
      %s225 = sphi 0, %s211
      %s229 = sphi 0, %s229
      %s231 = sphi 0, %s229
      %s232 = sphi 0, %s231
      %s246 = sphi 0, %s232
      %s250 = sphi 0, %s250
      %s252 = sphi 0, %s250
      %s253 = sphi 0, %s252
      %s267 = sphi 0, %s253
      %s271 = sphi 0, %s271
      %s273 = sphi 0, %s271
      %s274 = sphi 0, %s273
      %s288 = sphi 0, %s274
      %s292 = sphi 0, %s292
      %s294 = sphi 0, %s292
      %s295 = sphi 0, %s294
      %s309 = sphi 0, %s295
      %s313 = sphi 0, %s313
      %s315 = sphi 0, %s313
      %s316 = sphi 0, %s315
      %s330 = sphi 0, %s316
      %s334 = sphi 0, %s334
      %s336 = sphi 0, %s334
      %s337 = sphi 0, %s336
      %s351 = sphi 0, %s337
      %s355 = sphi 0, %s355
      %s357 = sphi 0, %s355
      %s358 = sphi 0, %s357
      %s372 = sphi 0, %s358
      %s376 = sphi 0, %s376
      %s378 = sphi 0, %s376
      %s379 = sphi 0, %s378
      %s393 = sphi 0, %s379
      %s397 = sphi 0, %s397
      %s399 = sphi 0, %s397
      %s400 = sphi 0, %s399
      %s414 = sphi 0, %s400
      %s418 = sphi 0, %s418
      %s420 = sphi 0, %s418
      %s421 = sphi 0, %s420
      %s435 = sphi 0, %s421
      %s439 = sphi 0, %s439
      %s441 = sphi 0, %s439
      %s442 = sphi 0, %s441
      %s456 = sphi 0, %s442
      %s460 = sphi 0, %s460
      %s462 = sphi 0, %s460
      %s463 = sphi 0, %s462
      %s477 = sphi 0, %s463
      %s481 = sphi 0, %s481
      %s483 = sphi 0, %s481
      %s484 = sphi 0, %s483
      %s498 = sphi 0, %s484
      %s502 = sphi 0, %s502
      %s504 = sphi 0, %s502
      %s505 = sphi 0, %s504
      %s519 = sphi 0, %s505
      %s523 = sphi 0, %s523
      %s525 = sphi 0, %s523
      %s526 = sphi 0, %s525
      %s540 = sphi 0, %s526
      %s544 = sphi 0, %s544
      %s546 = sphi 0, %s544
      %s547 = sphi 0, %s546
      %s561 = sphi 0, %s547
      %s565 = sphi 0, %s565
      %s567 = sphi 0, %s565
      %s568 = sphi 0, %s567
      %s582 = sphi 0, %s568
      %s586 = sphi 0, %s586
      %s588 = sphi 0, %s586
      %s589 = sphi 0, %s588
      %s603 = sphi 0, %s589
      %s607 = sphi 0, %s607
      %s609 = sphi 0, %s607
      %s610 = sphi 0, %s609
      %s624 = sphi 0, %s610
      %s628 = sphi 0, %s628
      %s630 = sphi 0, %s628
      %s631 = sphi 0, %s630
      %s645 = sphi 0, %s631
      %s649 = sphi 0, %s649
      %s651 = sphi 0, %s649
      %s652 = sphi 0, %s651
      %s666 = sphi 0, %s652
      %s670 = sphi 0, %s670
      %s672 = sphi 0, %s670
      %s673 = sphi 0, %s672
      %s687 = sphi 0, %s673
      %s691 = sphi 0, %s691
      %s693 = sphi 0, %s691
      %s694 = sphi 0, %s693
      %s708 = sphi 0, %s694
      %s712 = sphi 0, %s712
      %s714 = sphi 0, %s712
      %s715 = sphi 0, %s714
      %s729 = sphi 0, %s715
      %s733 = sphi 0, %s733
      %s735 = sphi 0, %s733
      %s736 = sphi 0, %s735
      %s750 = sphi 0, %s736
      %s754 = sphi 0, %s754
      %s756 = sphi 0, %s754
      %s757 = sphi 0, %s756
      %s771 = sphi 0, %s757
      %s775 = sphi 0, %s775
      %s777 = sphi 0, %s775
      %s778 = sphi 0, %s777
      %s792 = sphi 0, %s778
      %s798 = sphi 0, %s800
      %s801 = sphi 0, %s798
      %s802 = sphi 0, %s801
      %s818 = sphi 0, %s802
      %s824 = sphi 0, %s826
      %s827 = sphi 0, %s824
      %s828 = sphi 0, %s827
      %s844 = sphi 0, %s828
      %s850 = sphi 0, %s852
      %s853 = sphi 0, %s850
      %s854 = sphi 0, %s853
      %s870 = sphi 0, %s854
      %s876 = sphi 0, %s878
      %s879 = sphi 0, %s876
      %s880 = sphi 0, %s879
      %s896 = sphi 0, %s880
      %s902 = sphi 0, %s904
      %s905 = sphi 0, %s902
      %s906 = sphi 0, %s905
      %s922 = sphi 0, %s906
      %s928 = sphi 0, %s930
      %s931 = sphi 0, %s928
      %s932 = sphi 0, %s931
      %s948 = sphi 0, %s932
    $region4: #{forward.1} parent=1 // loop_header_branch
      %93 = sbr.rel (%p91) target = $region8
    $region5: #{forward.1} parent=1 // loop_body
      %s95 = ssub.s32 %s90, 1
      %s96 = ssub.s32 %s90, 2
      %s97 = sadd.s32 %s90, 1
      %s98 = ssub.s32 %s90, %s97
      %p99 = scmp.eq.s32.totalorder %s98, 0
      %s101 = sadd.s32 %s100, 1
      %s102 = scalar_select %p99, %s100, %s101
      %p105 = pneg %p99
      %p106 = scmp.eq.s32.totalorder %s90, 1
      %p107 = por %p105, %p106
      %p108 = scmp.ne.s32.totalorder %s100, %s103
      %p109 = scmp.eq.s32.totalorder %s90, 0
      %p110 = por %p108, %p109
      %p111 = scmp.ne.s32.totalorder %s100, %s103
      %p112 = scmp.eq.s32.totalorder %s95, 1
      %p113 = por %p111, %p112
      %p114 = scmp.ne.s32.totalorder %s103, %s104
      %p115 = scmp.eq.s32.totalorder %s95, 0
      %p116 = por %p114, %p115
      %p117 = scmp.ne.s32.totalorder %s103, %s104
      %p118 = scmp.eq.s32.totalorder %s96, 1
      %p119 = por %p117, %p118
      %p121 = scmp.ne.s32.totalorder %s104, %s120
      %p122 = scmp.eq.s32.totalorder %s96, 0
      %p123 = por %p121, %p122
      %s125 = sadd.s32 %s124, 1
      %p128 = scmp.eq.s32.totalorder %s90, 1
      %p129 = scmp.ne.s32.totalorder %s124, %s126
      %p130 = scmp.eq.s32.totalorder %s90, 0
      %p131 = por %p129, %p130
      %p132 = scmp.ne.s32.totalorder %s124, %s126
      %p133 = scmp.eq.s32.totalorder %s95, 1
      %p134 = por %p132, %p133
      %p135 = scmp.ne.s32.totalorder %s126, %s127
      %p136 = scmp.eq.s32.totalorder %s95, 0
      %p137 = por %p135, %p136
      %p138 = scmp.ne.s32.totalorder %s126, %s127
      %p139 = scmp.eq.s32.totalorder %s96, 1
      %p140 = por %p138, %p139
      %p142 = scmp.ne.s32.totalorder %s127, %s141
      %p143 = scmp.eq.s32.totalorder %s96, 0
      %p144 = por %p142, %p143
      %s146 = sadd.s32 %s145, 1
      %p149 = scmp.eq.s32.totalorder %s90, 1
      %p150 = scmp.ne.s32.totalorder %s145, %s147
      %p151 = scmp.eq.s32.totalorder %s90, 0
      %p152 = por %p150, %p151
      %p153 = scmp.ne.s32.totalorder %s145, %s147
      %p154 = scmp.eq.s32.totalorder %s95, 1
      %p155 = por %p153, %p154
      %p156 = scmp.ne.s32.totalorder %s147, %s148
      %p157 = scmp.eq.s32.totalorder %s95, 0
      %p158 = por %p156, %p157
      %p159 = scmp.ne.s32.totalorder %s147, %s148
      %p160 = scmp.eq.s32.totalorder %s96, 1
      %p161 = por %p159, %p160
      %p163 = scmp.ne.s32.totalorder %s148, %s162
      %p164 = scmp.eq.s32.totalorder %s96, 0
      %p165 = por %p163, %p164
      %s167 = sadd.s32 %s166, 1
      %p170 = scmp.eq.s32.totalorder %s90, 1
      %p171 = scmp.ne.s32.totalorder %s166, %s168
      %p172 = scmp.eq.s32.totalorder %s90, 0
      %p173 = por %p171, %p172
      %p174 = scmp.ne.s32.totalorder %s166, %s168
      %p175 = scmp.eq.s32.totalorder %s95, 1
      %p176 = por %p174, %p175
      %p177 = scmp.ne.s32.totalorder %s168, %s169
      %p178 = scmp.eq.s32.totalorder %s95, 0
      %p179 = por %p177, %p178
      %p180 = scmp.ne.s32.totalorder %s168, %s169
      %p181 = scmp.eq.s32.totalorder %s96, 1
      %p182 = por %p180, %p181
      %p184 = scmp.ne.s32.totalorder %s169, %s183
      %p185 = scmp.eq.s32.totalorder %s96, 0
      %p186 = por %p184, %p185
      %s188 = sadd.s32 %s187, 1
      %p191 = scmp.eq.s32.totalorder %s90, 1
      %p192 = scmp.ne.s32.totalorder %s187, %s189
      %p193 = scmp.eq.s32.totalorder %s90, 0
      %p194 = por %p192, %p193
      %p195 = scmp.ne.s32.totalorder %s187, %s189
      %p196 = scmp.eq.s32.totalorder %s95, 1
      %p197 = por %p195, %p196
      %p198 = scmp.ne.s32.totalorder %s189, %s190
      %p199 = scmp.eq.s32.totalorder %s95, 0
      %p200 = por %p198, %p199
      %p201 = scmp.ne.s32.totalorder %s189, %s190
      %p202 = scmp.eq.s32.totalorder %s96, 1
      %p203 = por %p201, %p202
      %p205 = scmp.ne.s32.totalorder %s190, %s204
      %p206 = scmp.eq.s32.totalorder %s96, 0
      %p207 = por %p205, %p206
      %s209 = sadd.s32 %s208, 1
      %p212 = scmp.eq.s32.totalorder %s90, 1
      %p213 = scmp.ne.s32.totalorder %s208, %s210
      %p214 = scmp.eq.s32.totalorder %s90, 0
      %p215 = por %p213, %p214
      %p216 = scmp.ne.s32.totalorder %s208, %s210
      %p217 = scmp.eq.s32.totalorder %s95, 1
      %p218 = por %p216, %p217
      %p219 = scmp.ne.s32.totalorder %s210, %s211
      %p220 = scmp.eq.s32.totalorder %s95, 0
      %p221 = por %p219, %p220
      %p222 = scmp.ne.s32.totalorder %s210, %s211
      %p223 = scmp.eq.s32.totalorder %s96, 1
      %p224 = por %p222, %p223
      %p226 = scmp.ne.s32.totalorder %s211, %s225
      %p227 = scmp.eq.s32.totalorder %s96, 0
      %p228 = por %p226, %p227
      %s230 = sadd.s32 %s229, 1
      %p233 = scmp.eq.s32.totalorder %s90, 1
      %p234 = scmp.ne.s32.totalorder %s229, %s231
      %p235 = scmp.eq.s32.totalorder %s90, 0
      %p236 = por %p234, %p235
      %p237 = scmp.ne.s32.totalorder %s229, %s231
      %p238 = scmp.eq.s32.totalorder %s95, 1
      %p239 = por %p237, %p238
      %p240 = scmp.ne.s32.totalorder %s231, %s232
      %p241 = scmp.eq.s32.totalorder %s95, 0
      %p242 = por %p240, %p241
      %p243 = scmp.ne.s32.totalorder %s231, %s232
      %p244 = scmp.eq.s32.totalorder %s96, 1
      %p245 = por %p243, %p244
      %p247 = scmp.ne.s32.totalorder %s232, %s246
      %p248 = scmp.eq.s32.totalorder %s96, 0
      %p249 = por %p247, %p248
      %s251 = sadd.s32 %s250, 1
      %p254 = scmp.eq.s32.totalorder %s90, 1
      %p255 = scmp.ne.s32.totalorder %s250, %s252
      %p256 = scmp.eq.s32.totalorder %s90, 0
      %p257 = por %p255, %p256
      %p258 = scmp.ne.s32.totalorder %s250, %s252
      %p259 = scmp.eq.s32.totalorder %s95, 1
      %p260 = por %p258, %p259
      %p261 = scmp.ne.s32.totalorder %s252, %s253
      %p262 = scmp.eq.s32.totalorder %s95, 0
      %p263 = por %p261, %p262
      %p264 = scmp.ne.s32.totalorder %s252, %s253
      %p265 = scmp.eq.s32.totalorder %s96, 1
      %p266 = por %p264, %p265
      %p268 = scmp.ne.s32.totalorder %s253, %s267
      %p269 = scmp.eq.s32.totalorder %s96, 0
      %p270 = por %p268, %p269
      %s272 = sadd.s32 %s271, 1
      %p275 = scmp.eq.s32.totalorder %s90, 1
      %p276 = scmp.ne.s32.totalorder %s271, %s273
      %p277 = scmp.eq.s32.totalorder %s90, 0
      %p278 = por %p276, %p277
      %p279 = scmp.ne.s32.totalorder %s271, %s273
      %p280 = scmp.eq.s32.totalorder %s95, 1
      %p281 = por %p279, %p280
      %p282 = scmp.ne.s32.totalorder %s273, %s274
      %p283 = scmp.eq.s32.totalorder %s95, 0
      %p284 = por %p282, %p283
      %p285 = scmp.ne.s32.totalorder %s273, %s274
      %p286 = scmp.eq.s32.totalorder %s96, 1
      %p287 = por %p285, %p286
      %p289 = scmp.ne.s32.totalorder %s274, %s288
      %p290 = scmp.eq.s32.totalorder %s96, 0
      %p291 = por %p289, %p290
      %s293 = sadd.s32 %s292, 1
      %p296 = scmp.eq.s32.totalorder %s90, 1
      %p297 = scmp.ne.s32.totalorder %s292, %s294
      %p298 = scmp.eq.s32.totalorder %s90, 0
      %p299 = por %p297, %p298
      %p300 = scmp.ne.s32.totalorder %s292, %s294
      %p301 = scmp.eq.s32.totalorder %s95, 1
      %p302 = por %p300, %p301
      %p303 = scmp.ne.s32.totalorder %s294, %s295
      %p304 = scmp.eq.s32.totalorder %s95, 0
      %p305 = por %p303, %p304
      %p306 = scmp.ne.s32.totalorder %s294, %s295
      %p307 = scmp.eq.s32.totalorder %s96, 1
      %p308 = por %p306, %p307
      %p310 = scmp.ne.s32.totalorder %s295, %s309
      %p311 = scmp.eq.s32.totalorder %s96, 0
      %p312 = por %p310, %p311
      %s314 = sadd.s32 %s313, 1
      %p317 = scmp.eq.s32.totalorder %s90, 1
      %p318 = scmp.ne.s32.totalorder %s313, %s315
      %p319 = scmp.eq.s32.totalorder %s90, 0
      %p320 = por %p318, %p319
      %p321 = scmp.ne.s32.totalorder %s313, %s315
      %p322 = scmp.eq.s32.totalorder %s95, 1
      %p323 = por %p321, %p322
      %p324 = scmp.ne.s32.totalorder %s315, %s316
      %p325 = scmp.eq.s32.totalorder %s95, 0
      %p326 = por %p324, %p325
      %p327 = scmp.ne.s32.totalorder %s315, %s316
      %p328 = scmp.eq.s32.totalorder %s96, 1
      %p329 = por %p327, %p328
      %p331 = scmp.ne.s32.totalorder %s316, %s330
      %p332 = scmp.eq.s32.totalorder %s96, 0
      %p333 = por %p331, %p332
      %s335 = sadd.s32 %s334, 1
      %p338 = scmp.eq.s32.totalorder %s90, 1
      %p339 = scmp.ne.s32.totalorder %s334, %s336
      %p340 = scmp.eq.s32.totalorder %s90, 0
      %p341 = por %p339, %p340
      %p342 = scmp.ne.s32.totalorder %s334, %s336
      %p343 = scmp.eq.s32.totalorder %s95, 1
      %p344 = por %p342, %p343
      %p345 = scmp.ne.s32.totalorder %s336, %s337
      %p346 = scmp.eq.s32.totalorder %s95, 0
      %p347 = por %p345, %p346
      %p348 = scmp.ne.s32.totalorder %s336, %s337
      %p349 = scmp.eq.s32.totalorder %s96, 1
      %p350 = por %p348, %p349
      %p352 = scmp.ne.s32.totalorder %s337, %s351
      %p353 = scmp.eq.s32.totalorder %s96, 0
      %p354 = por %p352, %p353
      %s356 = sadd.s32 %s355, 1
      %p359 = scmp.eq.s32.totalorder %s90, 1
      %p360 = scmp.ne.s32.totalorder %s355, %s357
      %p361 = scmp.eq.s32.totalorder %s90, 0
      %p362 = por %p360, %p361
      %p363 = scmp.ne.s32.totalorder %s355, %s357
      %p364 = scmp.eq.s32.totalorder %s95, 1
      %p365 = por %p363, %p364
      %p366 = scmp.ne.s32.totalorder %s357, %s358
      %p367 = scmp.eq.s32.totalorder %s95, 0
      %p368 = por %p366, %p367
      %p369 = scmp.ne.s32.totalorder %s357, %s358
      %p370 = scmp.eq.s32.totalorder %s96, 1
      %p371 = por %p369, %p370
      %p373 = scmp.ne.s32.totalorder %s358, %s372
      %p374 = scmp.eq.s32.totalorder %s96, 0
      %p375 = por %p373, %p374
      %s377 = sadd.s32 %s376, 1
      %p380 = scmp.eq.s32.totalorder %s90, 1
      %p381 = scmp.ne.s32.totalorder %s376, %s378
      %p382 = scmp.eq.s32.totalorder %s90, 0
      %p383 = por %p381, %p382
      %p384 = scmp.ne.s32.totalorder %s376, %s378
      %p385 = scmp.eq.s32.totalorder %s95, 1
      %p386 = por %p384, %p385
      %p387 = scmp.ne.s32.totalorder %s378, %s379
      %p388 = scmp.eq.s32.totalorder %s95, 0
      %p389 = por %p387, %p388
      %p390 = scmp.ne.s32.totalorder %s378, %s379
      %p391 = scmp.eq.s32.totalorder %s96, 1
      %p392 = por %p390, %p391
      %p394 = scmp.ne.s32.totalorder %s379, %s393
      %p395 = scmp.eq.s32.totalorder %s96, 0
      %p396 = por %p394, %p395
      %s398 = sadd.s32 %s397, 1
      %p401 = scmp.eq.s32.totalorder %s90, 1
      %p402 = scmp.ne.s32.totalorder %s397, %s399
      %p403 = scmp.eq.s32.totalorder %s90, 0
      %p404 = por %p402, %p403
      %p405 = scmp.ne.s32.totalorder %s397, %s399
      %p406 = scmp.eq.s32.totalorder %s95, 1
      %p407 = por %p405, %p406
      %p408 = scmp.ne.s32.totalorder %s399, %s400
      %p409 = scmp.eq.s32.totalorder %s95, 0
      %p410 = por %p408, %p409
      %p411 = scmp.ne.s32.totalorder %s399, %s400
      %p412 = scmp.eq.s32.totalorder %s96, 1
      %p413 = por %p411, %p412
      %p415 = scmp.ne.s32.totalorder %s400, %s414
      %p416 = scmp.eq.s32.totalorder %s96, 0
      %p417 = por %p415, %p416
      %s419 = sadd.s32 %s418, 1
      %p422 = scmp.eq.s32.totalorder %s90, 1
      %p423 = scmp.ne.s32.totalorder %s418, %s420
      %p424 = scmp.eq.s32.totalorder %s90, 0
      %p425 = por %p423, %p424
      %p426 = scmp.ne.s32.totalorder %s418, %s420
      %p427 = scmp.eq.s32.totalorder %s95, 1
      %p428 = por %p426, %p427
      %p429 = scmp.ne.s32.totalorder %s420, %s421
      %p430 = scmp.eq.s32.totalorder %s95, 0
      %p431 = por %p429, %p430
      %p432 = scmp.ne.s32.totalorder %s420, %s421
      %p433 = scmp.eq.s32.totalorder %s96, 1
      %p434 = por %p432, %p433
      %p436 = scmp.ne.s32.totalorder %s421, %s435
      %p437 = scmp.eq.s32.totalorder %s96, 0
      %p438 = por %p436, %p437
      %s440 = sadd.s32 %s439, 1
      %p443 = scmp.eq.s32.totalorder %s90, 1
      %p444 = scmp.ne.s32.totalorder %s439, %s441
      %p445 = scmp.eq.s32.totalorder %s90, 0
      %p446 = por %p444, %p445
      %p447 = scmp.ne.s32.totalorder %s439, %s441
      %p448 = scmp.eq.s32.totalorder %s95, 1
      %p449 = por %p447, %p448
      %p450 = scmp.ne.s32.totalorder %s441, %s442
      %p451 = scmp.eq.s32.totalorder %s95, 0
      %p452 = por %p450, %p451
      %p453 = scmp.ne.s32.totalorder %s441, %s442
      %p454 = scmp.eq.s32.totalorder %s96, 1
      %p455 = por %p453, %p454
      %p457 = scmp.ne.s32.totalorder %s442, %s456
      %p458 = scmp.eq.s32.totalorder %s96, 0
      %p459 = por %p457, %p458
      %s461 = sadd.s32 %s460, 1
      %p464 = scmp.eq.s32.totalorder %s90, 1
      %p465 = scmp.ne.s32.totalorder %s460, %s462
      %p466 = scmp.eq.s32.totalorder %s90, 0
      %p467 = por %p465, %p466
      %p468 = scmp.ne.s32.totalorder %s460, %s462
      %p469 = scmp.eq.s32.totalorder %s95, 1
      %p470 = por %p468, %p469
      %p471 = scmp.ne.s32.totalorder %s462, %s463
      %p472 = scmp.eq.s32.totalorder %s95, 0
      %p473 = por %p471, %p472
      %p474 = scmp.ne.s32.totalorder %s462, %s463
      %p475 = scmp.eq.s32.totalorder %s96, 1
      %p476 = por %p474, %p475
      %p478 = scmp.ne.s32.totalorder %s463, %s477
      %p479 = scmp.eq.s32.totalorder %s96, 0
      %p480 = por %p478, %p479
      %s482 = sadd.s32 %s481, 1
      %p485 = scmp.eq.s32.totalorder %s90, 1
      %p486 = scmp.ne.s32.totalorder %s481, %s483
      %p487 = scmp.eq.s32.totalorder %s90, 0
      %p488 = por %p486, %p487
      %p489 = scmp.ne.s32.totalorder %s481, %s483
      %p490 = scmp.eq.s32.totalorder %s95, 1
      %p491 = por %p489, %p490
      %p492 = scmp.ne.s32.totalorder %s483, %s484
      %p493 = scmp.eq.s32.totalorder %s95, 0
      %p494 = por %p492, %p493
      %p495 = scmp.ne.s32.totalorder %s483, %s484
      %p496 = scmp.eq.s32.totalorder %s96, 1
      %p497 = por %p495, %p496
      %p499 = scmp.ne.s32.totalorder %s484, %s498
      %p500 = scmp.eq.s32.totalorder %s96, 0
      %p501 = por %p499, %p500
      %s503 = sadd.s32 %s502, 1
      %p506 = scmp.eq.s32.totalorder %s90, 1
      %p507 = scmp.ne.s32.totalorder %s502, %s504
      %p508 = scmp.eq.s32.totalorder %s90, 0
      %p509 = por %p507, %p508
      %p510 = scmp.ne.s32.totalorder %s502, %s504
      %p511 = scmp.eq.s32.totalorder %s95, 1
      %p512 = por %p510, %p511
      %p513 = scmp.ne.s32.totalorder %s504, %s505
      %p514 = scmp.eq.s32.totalorder %s95, 0
      %p515 = por %p513, %p514
      %p516 = scmp.ne.s32.totalorder %s504, %s505
      %p517 = scmp.eq.s32.totalorder %s96, 1
      %p518 = por %p516, %p517
      %p520 = scmp.ne.s32.totalorder %s505, %s519
      %p521 = scmp.eq.s32.totalorder %s96, 0
      %p522 = por %p520, %p521
      %s524 = sadd.s32 %s523, 1
      %p527 = scmp.eq.s32.totalorder %s90, 1
      %p528 = scmp.ne.s32.totalorder %s523, %s525
      %p529 = scmp.eq.s32.totalorder %s90, 0
      %p530 = por %p528, %p529
      %p531 = scmp.ne.s32.totalorder %s523, %s525
      %p532 = scmp.eq.s32.totalorder %s95, 1
      %p533 = por %p531, %p532
      %p534 = scmp.ne.s32.totalorder %s525, %s526
      %p535 = scmp.eq.s32.totalorder %s95, 0
      %p536 = por %p534, %p535
      %p537 = scmp.ne.s32.totalorder %s525, %s526
      %p538 = scmp.eq.s32.totalorder %s96, 1
      %p539 = por %p537, %p538
      %p541 = scmp.ne.s32.totalorder %s526, %s540
      %p542 = scmp.eq.s32.totalorder %s96, 0
      %p543 = por %p541, %p542
      %s545 = sadd.s32 %s544, 1
      %p548 = scmp.eq.s32.totalorder %s90, 1
      %p549 = scmp.ne.s32.totalorder %s544, %s546
      %p550 = scmp.eq.s32.totalorder %s90, 0
      %p551 = por %p549, %p550
      %p552 = scmp.ne.s32.totalorder %s544, %s546
      %p553 = scmp.eq.s32.totalorder %s95, 1
      %p554 = por %p552, %p553
      %p555 = scmp.ne.s32.totalorder %s546, %s547
      %p556 = scmp.eq.s32.totalorder %s95, 0
      %p557 = por %p555, %p556
      %p558 = scmp.ne.s32.totalorder %s546, %s547
      %p559 = scmp.eq.s32.totalorder %s96, 1
      %p560 = por %p558, %p559
      %p562 = scmp.ne.s32.totalorder %s547, %s561
      %p563 = scmp.eq.s32.totalorder %s96, 0
      %p564 = por %p562, %p563
      %s566 = sadd.s32 %s565, 1
      %p569 = scmp.eq.s32.totalorder %s90, 1
      %p570 = scmp.ne.s32.totalorder %s565, %s567
      %p571 = scmp.eq.s32.totalorder %s90, 0
      %p572 = por %p570, %p571
      %p573 = scmp.ne.s32.totalorder %s565, %s567
      %p574 = scmp.eq.s32.totalorder %s95, 1
      %p575 = por %p573, %p574
      %p576 = scmp.ne.s32.totalorder %s567, %s568
      %p577 = scmp.eq.s32.totalorder %s95, 0
      %p578 = por %p576, %p577
      %p579 = scmp.ne.s32.totalorder %s567, %s568
      %p580 = scmp.eq.s32.totalorder %s96, 1
      %p581 = por %p579, %p580
      %p583 = scmp.ne.s32.totalorder %s568, %s582
      %p584 = scmp.eq.s32.totalorder %s96, 0
      %p585 = por %p583, %p584
      %s587 = sadd.s32 %s586, 1
      %p590 = scmp.eq.s32.totalorder %s90, 1
      %p591 = scmp.ne.s32.totalorder %s586, %s588
      %p592 = scmp.eq.s32.totalorder %s90, 0
      %p593 = por %p591, %p592
      %p594 = scmp.ne.s32.totalorder %s586, %s588
      %p595 = scmp.eq.s32.totalorder %s95, 1
      %p596 = por %p594, %p595
      %p597 = scmp.ne.s32.totalorder %s588, %s589
      %p598 = scmp.eq.s32.totalorder %s95, 0
      %p599 = por %p597, %p598
      %p600 = scmp.ne.s32.totalorder %s588, %s589
      %p601 = scmp.eq.s32.totalorder %s96, 1
      %p602 = por %p600, %p601
      %p604 = scmp.ne.s32.totalorder %s589, %s603
      %p605 = scmp.eq.s32.totalorder %s96, 0
      %p606 = por %p604, %p605
      %s608 = sadd.s32 %s607, 1
      %p611 = scmp.eq.s32.totalorder %s90, 1
      %p612 = scmp.ne.s32.totalorder %s607, %s609
      %p613 = scmp.eq.s32.totalorder %s90, 0
      %p614 = por %p612, %p613
      %p615 = scmp.ne.s32.totalorder %s607, %s609
      %p616 = scmp.eq.s32.totalorder %s95, 1
      %p617 = por %p615, %p616
      %p618 = scmp.ne.s32.totalorder %s609, %s610
      %p619 = scmp.eq.s32.totalorder %s95, 0
      %p620 = por %p618, %p619
      %p621 = scmp.ne.s32.totalorder %s609, %s610
      %p622 = scmp.eq.s32.totalorder %s96, 1
      %p623 = por %p621, %p622
      %p625 = scmp.ne.s32.totalorder %s610, %s624
      %p626 = scmp.eq.s32.totalorder %s96, 0
      %p627 = por %p625, %p626
      %s629 = sadd.s32 %s628, 1
      %p632 = scmp.eq.s32.totalorder %s90, 1
      %p633 = scmp.ne.s32.totalorder %s628, %s630
      %p634 = scmp.eq.s32.totalorder %s90, 0
      %p635 = por %p633, %p634
      %p636 = scmp.ne.s32.totalorder %s628, %s630
      %p637 = scmp.eq.s32.totalorder %s95, 1
      %p638 = por %p636, %p637
      %p639 = scmp.ne.s32.totalorder %s630, %s631
      %p640 = scmp.eq.s32.totalorder %s95, 0
      %p641 = por %p639, %p640
      %p642 = scmp.ne.s32.totalorder %s630, %s631
      %p643 = scmp.eq.s32.totalorder %s96, 1
      %p644 = por %p642, %p643
      %p646 = scmp.ne.s32.totalorder %s631, %s645
      %p647 = scmp.eq.s32.totalorder %s96, 0
      %p648 = por %p646, %p647
      %s650 = sadd.s32 %s649, 1
      %p653 = scmp.eq.s32.totalorder %s90, 1
      %p654 = scmp.ne.s32.totalorder %s649, %s651
      %p655 = scmp.eq.s32.totalorder %s90, 0
      %p656 = por %p654, %p655
      %p657 = scmp.ne.s32.totalorder %s649, %s651
      %p658 = scmp.eq.s32.totalorder %s95, 1
      %p659 = por %p657, %p658
      %p660 = scmp.ne.s32.totalorder %s651, %s652
      %p661 = scmp.eq.s32.totalorder %s95, 0
      %p662 = por %p660, %p661
      %p663 = scmp.ne.s32.totalorder %s651, %s652
      %p664 = scmp.eq.s32.totalorder %s96, 1
      %p665 = por %p663, %p664
      %p667 = scmp.ne.s32.totalorder %s652, %s666
      %p668 = scmp.eq.s32.totalorder %s96, 0
      %p669 = por %p667, %p668
      %s671 = sadd.s32 %s670, 1
      %p674 = scmp.eq.s32.totalorder %s90, 1
      %p675 = scmp.ne.s32.totalorder %s670, %s672
      %p676 = scmp.eq.s32.totalorder %s90, 0
      %p677 = por %p675, %p676
      %p678 = scmp.ne.s32.totalorder %s670, %s672
      %p679 = scmp.eq.s32.totalorder %s95, 1
      %p680 = por %p678, %p679
      %p681 = scmp.ne.s32.totalorder %s672, %s673
      %p682 = scmp.eq.s32.totalorder %s95, 0
      %p683 = por %p681, %p682
      %p684 = scmp.ne.s32.totalorder %s672, %s673
      %p685 = scmp.eq.s32.totalorder %s96, 1
      %p686 = por %p684, %p685
      %p688 = scmp.ne.s32.totalorder %s673, %s687
      %p689 = scmp.eq.s32.totalorder %s96, 0
      %p690 = por %p688, %p689
      %s692 = sadd.s32 %s691, 1
      %p695 = scmp.eq.s32.totalorder %s90, 1
      %p696 = scmp.ne.s32.totalorder %s691, %s693
      %p697 = scmp.eq.s32.totalorder %s90, 0
      %p698 = por %p696, %p697
      %p699 = scmp.ne.s32.totalorder %s691, %s693
      %p700 = scmp.eq.s32.totalorder %s95, 1
      %p701 = por %p699, %p700
      %p702 = scmp.ne.s32.totalorder %s693, %s694
      %p703 = scmp.eq.s32.totalorder %s95, 0
      %p704 = por %p702, %p703
      %p705 = scmp.ne.s32.totalorder %s693, %s694
      %p706 = scmp.eq.s32.totalorder %s96, 1
      %p707 = por %p705, %p706
      %p709 = scmp.ne.s32.totalorder %s694, %s708
      %p710 = scmp.eq.s32.totalorder %s96, 0
      %p711 = por %p709, %p710
      %s713 = sadd.s32 %s712, 1
      %p716 = scmp.eq.s32.totalorder %s90, 1
      %p717 = scmp.ne.s32.totalorder %s712, %s714
      %p718 = scmp.eq.s32.totalorder %s90, 0
      %p719 = por %p717, %p718
      %p720 = scmp.ne.s32.totalorder %s712, %s714
      %p721 = scmp.eq.s32.totalorder %s95, 1
      %p722 = por %p720, %p721
      %p723 = scmp.ne.s32.totalorder %s714, %s715
      %p724 = scmp.eq.s32.totalorder %s95, 0
      %p725 = por %p723, %p724
      %p726 = scmp.ne.s32.totalorder %s714, %s715
      %p727 = scmp.eq.s32.totalorder %s96, 1
      %p728 = por %p726, %p727
      %p730 = scmp.ne.s32.totalorder %s715, %s729
      %p731 = scmp.eq.s32.totalorder %s96, 0
      %p732 = por %p730, %p731
      %s734 = sadd.s32 %s733, 1
      %p737 = scmp.eq.s32.totalorder %s90, 1
      %p738 = scmp.ne.s32.totalorder %s733, %s735
      %p739 = scmp.eq.s32.totalorder %s90, 0
      %p740 = por %p738, %p739
      %p741 = scmp.ne.s32.totalorder %s733, %s735
      %p742 = scmp.eq.s32.totalorder %s95, 1
      %p743 = por %p741, %p742
      %p744 = scmp.ne.s32.totalorder %s735, %s736
      %p745 = scmp.eq.s32.totalorder %s95, 0
      %p746 = por %p744, %p745
      %p747 = scmp.ne.s32.totalorder %s735, %s736
      %p748 = scmp.eq.s32.totalorder %s96, 1
      %p749 = por %p747, %p748
      %p751 = scmp.ne.s32.totalorder %s736, %s750
      %p752 = scmp.eq.s32.totalorder %s96, 0
      %p753 = por %p751, %p752
      %s755 = sadd.s32 %s754, 1
      %p758 = scmp.eq.s32.totalorder %s90, 1
      %p759 = scmp.ne.s32.totalorder %s754, %s756
      %p760 = scmp.eq.s32.totalorder %s90, 0
      %p761 = por %p759, %p760
      %p762 = scmp.ne.s32.totalorder %s754, %s756
      %p763 = scmp.eq.s32.totalorder %s95, 1
      %p764 = por %p762, %p763
      %p765 = scmp.ne.s32.totalorder %s756, %s757
      %p766 = scmp.eq.s32.totalorder %s95, 0
      %p767 = por %p765, %p766
      %p768 = scmp.ne.s32.totalorder %s756, %s757
      %p769 = scmp.eq.s32.totalorder %s96, 1
      %p770 = por %p768, %p769
      %p772 = scmp.ne.s32.totalorder %s757, %s771
      %p773 = scmp.eq.s32.totalorder %s96, 0
      %p774 = por %p772, %p773
      %s776 = sadd.s32 %s775, 1
      %p779 = scmp.eq.s32.totalorder %s90, 1
      %p780 = scmp.ne.s32.totalorder %s775, %s777
      %p781 = scmp.eq.s32.totalorder %s90, 0
      %p782 = por %p780, %p781
      %p783 = scmp.ne.s32.totalorder %s775, %s777
      %p784 = scmp.eq.s32.totalorder %s95, 1
      %p785 = por %p783, %p784
      %p786 = scmp.ne.s32.totalorder %s777, %s778
      %p787 = scmp.eq.s32.totalorder %s95, 0
      %p788 = por %p786, %p787
      %p789 = scmp.ne.s32.totalorder %s777, %s778
      %p790 = scmp.eq.s32.totalorder %s96, 1
      %p791 = por %p789, %p790
      %p793 = scmp.ne.s32.totalorder %s778, %s792
      %p794 = scmp.eq.s32.totalorder %s96, 0
      %p795 = por %p793, %p794
      %s796 = ssub.s32 %s90, %s97
      %p797 = scmp.eq.s32.totalorder %s796, 0
      %s799 = sadd.s32 %s798, 1
      %s800 = scalar_select %p797, %s798, %s799
      %p803 = pneg %p797
      %p804 = scmp.eq.s32.totalorder %s90, 1
      %p805 = por %p803, %p804
      %p806 = scmp.ne.s32.totalorder %s798, %s801
      %p807 = scmp.eq.s32.totalorder %s90, 0
      %p808 = por %p806, %p807
      %p809 = scmp.ne.s32.totalorder %s798, %s801
      %p810 = scmp.eq.s32.totalorder %s95, 1
      %p811 = por %p809, %p810
      %p812 = scmp.ne.s32.totalorder %s801, %s802
      %p813 = scmp.eq.s32.totalorder %s95, 0
      %p814 = por %p812, %p813
      %p815 = scmp.ne.s32.totalorder %s801, %s802
      %p816 = scmp.eq.s32.totalorder %s96, 1
      %p817 = por %p815, %p816
      %p819 = scmp.ne.s32.totalorder %s802, %s818
      %p820 = scmp.eq.s32.totalorder %s96, 0
      %p821 = por %p819, %p820
      %s822 = ssub.s32 %s90, %s97
      %p823 = scmp.eq.s32.totalorder %s822, 0
      %s825 = sadd.s32 %s824, 1
      %s826 = scalar_select %p823, %s824, %s825
      %p829 = pneg %p823
      %p830 = scmp.eq.s32.totalorder %s90, 1
      %p831 = por %p829, %p830
      %p832 = scmp.ne.s32.totalorder %s824, %s827
      %p833 = scmp.eq.s32.totalorder %s90, 0
      %p834 = por %p832, %p833
      %p835 = scmp.ne.s32.totalorder %s824, %s827
      %p836 = scmp.eq.s32.totalorder %s95, 1
      %p837 = por %p835, %p836
      %p838 = scmp.ne.s32.totalorder %s827, %s828
      %p839 = scmp.eq.s32.totalorder %s95, 0
      %p840 = por %p838, %p839
      %p841 = scmp.ne.s32.totalorder %s827, %s828
      %p842 = scmp.eq.s32.totalorder %s96, 1
      %p843 = por %p841, %p842
      %p845 = scmp.ne.s32.totalorder %s828, %s844
      %p846 = scmp.eq.s32.totalorder %s96, 0
      %p847 = por %p845, %p846
      %s848 = ssub.s32 %s90, %s97
      %p849 = scmp.eq.s32.totalorder %s848, 0
      %s851 = sadd.s32 %s850, 1
      %s852 = scalar_select %p849, %s850, %s851
      %p855 = pneg %p849
      %p856 = scmp.eq.s32.totalorder %s90, 1
      %p857 = por %p855, %p856
      %p858 = scmp.ne.s32.totalorder %s850, %s853
      %p859 = scmp.eq.s32.totalorder %s90, 0
      %p860 = por %p858, %p859
      %p861 = scmp.ne.s32.totalorder %s850, %s853
      %p862 = scmp.eq.s32.totalorder %s95, 1
      %p863 = por %p861, %p862
      %p864 = scmp.ne.s32.totalorder %s853, %s854
      %p865 = scmp.eq.s32.totalorder %s95, 0
      %p866 = por %p864, %p865
      %p867 = scmp.ne.s32.totalorder %s853, %s854
      %p868 = scmp.eq.s32.totalorder %s96, 1
      %p869 = por %p867, %p868
      %p871 = scmp.ne.s32.totalorder %s854, %s870
      %p872 = scmp.eq.s32.totalorder %s96, 0
      %p873 = por %p871, %p872
      %s874 = ssub.s32 %s90, %s97
      %p875 = scmp.eq.s32.totalorder %s874, 0
      %s877 = sadd.s32 %s876, 1
      %s878 = scalar_select %p875, %s876, %s877
      %p881 = pneg %p875
      %p882 = scmp.eq.s32.totalorder %s90, 1
      %p883 = por %p881, %p882
      %p884 = scmp.ne.s32.totalorder %s876, %s879
      %p885 = scmp.eq.s32.totalorder %s90, 0
      %p886 = por %p884, %p885
      %p887 = scmp.ne.s32.totalorder %s876, %s879
      %p888 = scmp.eq.s32.totalorder %s95, 1
      %p889 = por %p887, %p888
      %p890 = scmp.ne.s32.totalorder %s879, %s880
      %p891 = scmp.eq.s32.totalorder %s95, 0
      %p892 = por %p890, %p891
      %p893 = scmp.ne.s32.totalorder %s879, %s880
      %p894 = scmp.eq.s32.totalorder %s96, 1
      %p895 = por %p893, %p894
      %p897 = scmp.ne.s32.totalorder %s880, %s896
      %p898 = scmp.eq.s32.totalorder %s96, 0
      %p899 = por %p897, %p898
      %s900 = ssub.s32 %s90, %s97
      %p901 = scmp.eq.s32.totalorder %s900, 0
      %s903 = sadd.s32 %s902, 1
      %s904 = scalar_select %p901, %s902, %s903
      %p907 = pneg %p901
      %p908 = scmp.eq.s32.totalorder %s90, 1
      %p909 = por %p907, %p908
      %p910 = scmp.ne.s32.totalorder %s902, %s905
      %p911 = scmp.eq.s32.totalorder %s90, 0
      %p912 = por %p910, %p911
      %p913 = scmp.ne.s32.totalorder %s902, %s905
      %p914 = scmp.eq.s32.totalorder %s95, 1
      %p915 = por %p913, %p914
      %p916 = scmp.ne.s32.totalorder %s905, %s906
      %p917 = scmp.eq.s32.totalorder %s95, 0
      %p918 = por %p916, %p917
      %p919 = scmp.ne.s32.totalorder %s905, %s906
      %p920 = scmp.eq.s32.totalorder %s96, 1
      %p921 = por %p919, %p920
      %p923 = scmp.ne.s32.totalorder %s906, %s922
      %p924 = scmp.eq.s32.totalorder %s96, 0
      %p925 = por %p923, %p924
      %s926 = ssub.s32 %s90, %s97
      %p927 = scmp.eq.s32.totalorder %s926, 0
      %s929 = sadd.s32 %s928, 1
      %s930 = scalar_select %p927, %s928, %s929
      %p933 = pneg %p927
      %p934 = scmp.eq.s32.totalorder %s90, 1
      %p935 = por %p933, %p934
      %p936 = scmp.ne.s32.totalorder %s928, %s931
      %p937 = scmp.eq.s32.totalorder %s90, 0
      %p938 = por %p936, %p937
      %p939 = scmp.ne.s32.totalorder %s928, %s931
      %p940 = scmp.eq.s32.totalorder %s95, 1
      %p941 = por %p939, %p940
      %p942 = scmp.ne.s32.totalorder %s931, %s932
      %p943 = scmp.eq.s32.totalorder %s95, 0
      %p944 = por %p942, %p943
      %p945 = scmp.ne.s32.totalorder %s931, %s932
      %p946 = scmp.eq.s32.totalorder %s96, 1
      %p947 = por %p945, %p946
      %p949 = scmp.ne.s32.totalorder %s932, %s948
      %p950 = scmp.eq.s32.totalorder %s96, 0
      %p951 = por %p949, %p950
      %p952 = scmp.le.s32.totalorder 1, %s90
      %p953 = scmp.lt.s32.totalorder %s90, 3
      %p954 = pnand %p952, %p953
      %p955 = pneg %p954
      // Predicated region
      $region9: #{forward.1} parent=5 // pred_check
        _
      $region10: #{forward.1} parent=5 // pred_check_branch
        %957 = sbr.rel (%p954) target = $region12
      $region11: #{forward.1} parent=5 // pred_region
        %s958 = ssub.s32 %s90, 1
        // Predicated region
        $region13: #{forward.1} parent=11 // pred_check
          %p959 = pneg %p137
        $region14: #{forward.1} parent=11 // pred_check_branch
          %961 = sbr.rel (%p959) target = $region16
        $region15: #{forward.1} parent=11 // pred_region
          _
        $region16: #{forward.1} parent=11 // pred_fallthru
          _
        // Predicated region
        $region17: #{forward.1} parent=11 // pred_check
          %p962 = pneg %p158
        $region18: #{forward.1} parent=11 // pred_check_branch
          %964 = sbr.rel (%p962) target = $region20
        $region19: #{forward.1} parent=11 // pred_region
          _
        $region20: #{forward.1} parent=11 // pred_fallthru
          _
        // Predicated region
        $region21: #{forward.1} parent=11 // pred_check
          %p965 = pneg %p179
        $region22: #{forward.1} parent=11 // pred_check_branch
          %967 = sbr.rel (%p965) target = $region24
        $region23: #{forward.1} parent=11 // pred_region
          _
        $region24: #{forward.1} parent=11 // pred_fallthru
          _
        // Predicated region
        $region25: #{forward.1} parent=11 // pred_check
          %p968 = pneg %p200
        $region26: #{forward.1} parent=11 // pred_check_branch
          %970 = sbr.rel (%p968) target = $region28
        $region27: #{forward.1} parent=11 // pred_region
          _
        $region28: #{forward.1} parent=11 // pred_fallthru
          _
        // Predicated region
        $region29: #{forward.1} parent=11 // pred_check
          %p971 = pneg %p221
        $region30: #{forward.1} parent=11 // pred_check_branch
          %973 = sbr.rel (%p971) target = $region32
        $region31: #{forward.1} parent=11 // pred_region
          _
        $region32: #{forward.1} parent=11 // pred_fallthru
          _
        // Predicated region
        $region33: #{forward.1} parent=11 // pred_check
          %p974 = pneg %p242
        $region34: #{forward.1} parent=11 // pred_check_branch
          %976 = sbr.rel (%p974) target = $region36
        $region35: #{forward.1} parent=11 // pred_region
          _
        $region36: #{forward.1} parent=11 // pred_fallthru
          _
        // Predicated region
        $region37: #{forward.1} parent=11 // pred_check
          %p977 = pneg %p263
        $region38: #{forward.1} parent=11 // pred_check_branch
          %979 = sbr.rel (%p977) target = $region40
        $region39: #{forward.1} parent=11 // pred_region
          _
        $region40: #{forward.1} parent=11 // pred_fallthru
          _
        // Predicated region
        $region41: #{forward.1} parent=11 // pred_check
          %p980 = pneg %p284
        $region42: #{forward.1} parent=11 // pred_check_branch
          %982 = sbr.rel (%p980) target = $region44
        $region43: #{forward.1} parent=11 // pred_region
          _
        $region44: #{forward.1} parent=11 // pred_fallthru
          _
        // Predicated region
        $region45: #{forward.1} parent=11 // pred_check
          %p983 = pneg %p305
        $region46: #{forward.1} parent=11 // pred_check_branch
          %985 = sbr.rel (%p983) target = $region48
        $region47: #{forward.1} parent=11 // pred_region
          _
        $region48: #{forward.1} parent=11 // pred_fallthru
          _
        // Predicated region
        $region49: #{forward.1} parent=11 // pred_check
          %p986 = pneg %p326
        $region50: #{forward.1} parent=11 // pred_check_branch
          %988 = sbr.rel (%p986) target = $region52
        $region51: #{forward.1} parent=11 // pred_region
          _
        $region52: #{forward.1} parent=11 // pred_fallthru
          _
        // Predicated region
        $region53: #{forward.1} parent=11 // pred_check
          %p989 = pneg %p347
        $region54: #{forward.1} parent=11 // pred_check_branch
          %991 = sbr.rel (%p989) target = $region56
        $region55: #{forward.1} parent=11 // pred_region
          _
        $region56: #{forward.1} parent=11 // pred_fallthru
          _
        // Predicated region
        $region57: #{forward.1} parent=11 // pred_check
          %p992 = pneg %p368
        $region58: #{forward.1} parent=11 // pred_check_branch
          %994 = sbr.rel (%p992) target = $region60
        $region59: #{forward.1} parent=11 // pred_region
          _
        $region60: #{forward.1} parent=11 // pred_fallthru
          _
        // Predicated region
        $region61: #{forward.1} parent=11 // pred_check
          %p995 = pneg %p389
        $region62: #{forward.1} parent=11 // pred_check_branch
          %997 = sbr.rel (%p995) target = $region64
        $region63: #{forward.1} parent=11 // pred_region
          _
        $region64: #{forward.1} parent=11 // pred_fallthru
          _
        // Predicated region
        $region65: #{forward.1} parent=11 // pred_check
          %p998 = pneg %p410
        $region66: #{forward.1} parent=11 // pred_check_branch
          %1000 = sbr.rel (%p998) target = $region68
        $region67: #{forward.1} parent=11 // pred_region
          _
        $region68: #{forward.1} parent=11 // pred_fallthru
          _
        // Predicated region
        $region69: #{forward.1} parent=11 // pred_check
          %p1001 = pneg %p431
        $region70: #{forward.1} parent=11 // pred_check_branch
          %1003 = sbr.rel (%p1001) target = $region72
        $region71: #{forward.1} parent=11 // pred_region
          _
        $region72: #{forward.1} parent=11 // pred_fallthru
          _
        // Predicated region
        $region73: #{forward.1} parent=11 // pred_check
          %p1004 = pneg %p452
        $region74: #{forward.1} parent=11 // pred_check_branch
          %1006 = sbr.rel (%p1004) target = $region76
        $region75: #{forward.1} parent=11 // pred_region
          _
        $region76: #{forward.1} parent=11 // pred_fallthru
          _
        // Predicated region
        $region77: #{forward.1} parent=11 // pred_check
          %p1007 = pneg %p473
        $region78: #{forward.1} parent=11 // pred_check_branch
          %1009 = sbr.rel (%p1007) target = $region80
        $region79: #{forward.1} parent=11 // pred_region
          _
        $region80: #{forward.1} parent=11 // pred_fallthru
          _
        // Predicated region
        $region81: #{forward.1} parent=11 // pred_check
          %p1010 = pneg %p494
        $region82: #{forward.1} parent=11 // pred_check_branch
          %1012 = sbr.rel (%p1010) target = $region84
        $region83: #{forward.1} parent=11 // pred_region
          _
        $region84: #{forward.1} parent=11 // pred_fallthru
          _
        // Predicated region
        $region85: #{forward.1} parent=11 // pred_check
          %p1013 = pneg %p515
        $region86: #{forward.1} parent=11 // pred_check_branch
          %1015 = sbr.rel (%p1013) target = $region88
        $region87: #{forward.1} parent=11 // pred_region
          _
        $region88: #{forward.1} parent=11 // pred_fallthru
          _
        // Predicated region
        $region89: #{forward.1} parent=11 // pred_check
          %p1016 = pneg %p536
        $region90: #{forward.1} parent=11 // pred_check_branch
          %1018 = sbr.rel (%p1016) target = $region92
        $region91: #{forward.1} parent=11 // pred_region
          _
        $region92: #{forward.1} parent=11 // pred_fallthru
          _
        // Predicated region
        $region93: #{forward.1} parent=11 // pred_check
          %p1019 = pneg %p557
        $region94: #{forward.1} parent=11 // pred_check_branch
          %1021 = sbr.rel (%p1019) target = $region96
        $region95: #{forward.1} parent=11 // pred_region
          _
        $region96: #{forward.1} parent=11 // pred_fallthru
          _
        // Predicated region
        $region97: #{forward.1} parent=11 // pred_check
          %p1022 = pneg %p578
        $region98: #{forward.1} parent=11 // pred_check_branch
          %1024 = sbr.rel (%p1022) target = $region100
        $region99: #{forward.1} parent=11 // pred_region
          _
        $region100: #{forward.1} parent=11 // pred_fallthru
          _
        // Predicated region
        $region101: #{forward.1} parent=11 // pred_check
          %p1025 = pneg %p599
        $region102: #{forward.1} parent=11 // pred_check_branch
          %1027 = sbr.rel (%p1025) target = $region104
        $region103: #{forward.1} parent=11 // pred_region
          _
        $region104: #{forward.1} parent=11 // pred_fallthru
          _
        // Predicated region
        $region105: #{forward.1} parent=11 // pred_check
          %p1028 = pneg %p620
        $region106: #{forward.1} parent=11 // pred_check_branch
          %1030 = sbr.rel (%p1028) target = $region108
        $region107: #{forward.1} parent=11 // pred_region
          _
        $region108: #{forward.1} parent=11 // pred_fallthru
          _
        // Predicated region
        $region109: #{forward.1} parent=11 // pred_check
          %p1031 = pneg %p641
        $region110: #{forward.1} parent=11 // pred_check_branch
          %1033 = sbr.rel (%p1031) target = $region112
        $region111: #{forward.1} parent=11 // pred_region
          _
        $region112: #{forward.1} parent=11 // pred_fallthru
          _
        // Predicated region
        $region113: #{forward.1} parent=11 // pred_check
          %p1034 = pneg %p662
        $region114: #{forward.1} parent=11 // pred_check_branch
          %1036 = sbr.rel (%p1034) target = $region116
        $region115: #{forward.1} parent=11 // pred_region
          _
        $region116: #{forward.1} parent=11 // pred_fallthru
          _
        // Predicated region
        $region117: #{forward.1} parent=11 // pred_check
          %p1037 = pneg %p683
        $region118: #{forward.1} parent=11 // pred_check_branch
          %1039 = sbr.rel (%p1037) target = $region120
        $region119: #{forward.1} parent=11 // pred_region
          _
        $region120: #{forward.1} parent=11 // pred_fallthru
          _
        // Predicated region
        $region121: #{forward.1} parent=11 // pred_check
          %p1040 = pneg %p704
        $region122: #{forward.1} parent=11 // pred_check_branch
          %1042 = sbr.rel (%p1040) target = $region124
        $region123: #{forward.1} parent=11 // pred_region
          _
        $region124: #{forward.1} parent=11 // pred_fallthru
          _
        // Predicated region
        $region125: #{forward.1} parent=11 // pred_check
          %p1043 = pneg %p725
        $region126: #{forward.1} parent=11 // pred_check_branch
          %1045 = sbr.rel (%p1043) target = $region128
        $region127: #{forward.1} parent=11 // pred_region
          _
        $region128: #{forward.1} parent=11 // pred_fallthru
          _
        // Predicated region
        $region129: #{forward.1} parent=11 // pred_check
          %p1046 = pneg %p746
        $region130: #{forward.1} parent=11 // pred_check_branch
          %1048 = sbr.rel (%p1046) target = $region132
        $region131: #{forward.1} parent=11 // pred_region
          _
        $region132: #{forward.1} parent=11 // pred_fallthru
          _
        // Predicated region
        $region133: #{forward.1} parent=11 // pred_check
          %p1049 = pneg %p767
        $region134: #{forward.1} parent=11 // pred_check_branch
          %1051 = sbr.rel (%p1049) target = $region136
        $region135: #{forward.1} parent=11 // pred_region
          _
        $region136: #{forward.1} parent=11 // pred_fallthru
          _
        // Predicated region
        $region137: #{forward.1} parent=11 // pred_check
          %p1052 = pneg %p788
        $region138: #{forward.1} parent=11 // pred_check_branch
          %1054 = sbr.rel (%p1052) target = $region140
        $region139: #{forward.1} parent=11 // pred_region
          _
        $region140: #{forward.1} parent=11 // pred_fallthru
          _
      $region12: #{forward.1} parent=5 // pred_fallthru
        _
      %p1055 = scmp.lt.s32.totalorder %s90, 2
      // Predicated region
      $region141: #{forward.1} parent=5 // pred_check
        %p1056 = pneg %p1055
      $region142: #{forward.1} parent=5 // pred_check_branch
        %1058 = sbr.rel (%p1056) target = $region144
      $region143: #{forward.1} parent=5 // pred_region
        // Predicated region
        $region145: #{forward.1} parent=143 // pred_check
          %p1059 = pneg %p110
        $region146: #{forward.1} parent=143 // pred_check_branch
          %1061 = sbr.rel (%p1059) target = $region148
        $region147: #{forward.1} parent=143 // pred_region
          %p1062 = scmp.lt.s32.totalorder %s90, 1
          %s1063 = scalar_select %p1062, %s90, 1
          %s1064 = smul.addr %s1063, 2
          %s1065 = smul.addr %s1064, 8
          %s1066 = scalar_lea.vmem %s1, %s1065
        $region148: #{forward.1} parent=143 // pred_fallthru
          _
      $region144: #{forward.1} parent=5 // pred_fallthru
        _
      %p1067 = scmp.le.s32.totalorder 1, %s90
      %p1068 = scmp.lt.s32.totalorder %s90, 3
      %p1069 = pnand %p1067, %p1068
      %p1070 = pneg %p1069
      // Predicated region
      $region149: #{forward.1} parent=5 // pred_check
        _
      $region150: #{forward.1} parent=5 // pred_check_branch
        %1072 = sbr.rel (%p1069) target = $region152
      $region151: #{forward.1} parent=5 // pred_region
        %s1073 = ssub.s32 %s90, 1
        %p1074 = scmp.lt.s32.totalorder %s95, 1
        %s1075 = scalar_select %p1074, %s95, 1
        %s1076 = smul.addr %s1075, 2
        %s1077 = smul.addr %s1076, 8
        %s1078 = scalar_lea.vmem %s1, %s1077
        %p1079 = pneg %p116
        %p1080 = pneg %p113
        %p1081 = pneg %p137
        %p1082 = pneg %p134
        %p1083 = pneg %p158
        %p1084 = pneg %p155
        %p1085 = pneg %p179
        %p1086 = pneg %p176
        %p1087 = pneg %p200
        %p1088 = pneg %p197
        %p1089 = pneg %p221
        %p1090 = pneg %p218
        %p1091 = pneg %p242
        %p1092 = pneg %p239
        %p1093 = pneg %p263
        %p1094 = pneg %p260
        %p1095 = pneg %p284
        %p1096 = pneg %p281
        %p1097 = pneg %p305
        %p1098 = pneg %p302
        %p1099 = pneg %p326
        %p1100 = pneg %p323
        %p1101 = pneg %p347
        %p1102 = pneg %p344
        %p1103 = pneg %p368
        %p1104 = pneg %p365
        %p1105 = pneg %p389
        %p1106 = pneg %p386
        %p1107 = pneg %p410
        %p1108 = pneg %p407
        %p1109 = pneg %p431
        %p1110 = pneg %p428
        %p1111 = pneg %p452
        %p1112 = pneg %p449
        %p1113 = pneg %p473
        %p1114 = pneg %p470
        %p1115 = pneg %p494
        %p1116 = pneg %p491
        %p1117 = pneg %p515
        %p1118 = pneg %p512
        %p1119 = pneg %p536
        %p1120 = pneg %p533
        %p1121 = pneg %p557
        %p1122 = pneg %p554
        %p1123 = pneg %p578
        %p1124 = pneg %p575
        %p1125 = pneg %p599
        %p1126 = pneg %p596
        %p1127 = pneg %p620
        %p1128 = pneg %p617
        %p1129 = pneg %p641
        %p1130 = pneg %p638
        %p1131 = pneg %p662
        %p1132 = pneg %p659
        %p1133 = pneg %p683
        %p1134 = pneg %p680
        %p1135 = pneg %p704
        %p1136 = pneg %p701
        %p1137 = pneg %p725
        %p1138 = pneg %p722
        %p1139 = pneg %p746
        %p1140 = pneg %p743
        %p1141 = pneg %p767
        %p1142 = pneg %p764
        %p1143 = pneg %p788
        %p1144 = pneg %p785
        %p1145 = pneg %p814
        %p1146 = pneg %p811
        %s1147 = sand.u32 %s801, 1
        %s1148 = scalar_lea.sflag [#allocation7], %s1147
        %s1149 = sand.u32 %s801, 1
        %s1150 = smul.addr %s1149, 16
        %s1151 = scalar_lea.vmem [#allocation6], %s1150
        %p1152 = pneg %p840
        %p1153 = pneg %p837
        %p1154 = scmp.lt.s32.totalorder %s95, 1
        %s1155 = scalar_select %p1154, %s95, 1
        %s1156 = smul.addr %s1155, 2
        %s1157 = smul.addr %s1156, 8
        %s1158 = scalar_lea.vmem %s69, %s1157
        %p1159 = pneg %p866
        %p1160 = pneg %p863
        %s1161 = sand.u32 %s95, 1
        %s1162 = scalar_lea.sflag [#allocation9], %s1161
        %s1163 = sand.u32 %s853, 1
        %s1164 = smul.addr %s1163, 4
        %s1165 = scalar_lea.vmem [#allocation8], %s1164
        %p1166 = pneg %p892
        %p1167 = pneg %p889
        %s1168 = sand.u32 %s95, 1
        %s1169 = scalar_lea.sflag [#allocation9], %s1168
        %s1170 = sand.u32 %s879, 1
        %s1171 = scalar_lea.vmem [#allocation10], %s1170
        %p1172 = pneg %p918
        %p1173 = pneg %p915
        %p1174 = scmp.lt.s32.totalorder %s95, 1
        %s1175 = scalar_select %p1174, %s95, 1
        %s1176 = scalar_lea.vmem %s75, %s1175
        %p1177 = pneg %p944
        %p1178 = pneg %p941
        %p1179 = scmp.lt.s32.totalorder %s95, 1
        %s1180 = scalar_select %p1179, %s95, 1
        %s1181 = scalar_lea.vmem %s77, %s1180
        %p1182 = scmp.lt.s32.totalorder %s95, 1
        %s1183 = scalar_select %p1182, %s95, 1
        %s1184 = smul.addr %s1183, 2
        %s1185 = smul.addr %s1184, 8
        %s1186 = scalar_lea.vmem %s1, %s1185
        %p1187 = scmp.lt.s32.totalorder %s95, 1
        %s1188 = scalar_select %p1187, %s95, 1
        %s1189 = smul.addr %s1188, 2
        %s1190 = smul.addr %s1189, 8
        %s1191 = scalar_lea.vmem %s69, %s1190
        %p1192 = scmp.lt.s32.totalorder %s95, 1
        %s1193 = scalar_select %p1192, %s95, 1
        %s1194 = scalar_lea.vmem %s75, %s1193
        %p1195 = scmp.lt.s32.totalorder %s95, 1
        %s1196 = scalar_select %p1195, %s95, 1
        %s1197 = scalar_lea.vmem %s77, %s1196
        %v1199 = vld [vmem:[%s1186] sm:$0xff]
        %v1200 = vld [vmem:[%s1186 + $0x8] sm:$0xff]
        %1201 = vxpose.xlu0.b32.start [1/16] %v1199, 128
        %1202 = vxpose.xlu0.b32.cont [2/16] %v1200, 128
        %1203 = vxpose.xlu0.b32.cont [3/16] 0.0, 128
        %1204 = vxpose.xlu0.b32.cont [4/16] 0.0, 128
        %1205 = vxpose.xlu0.b32.cont [5/16] 0.0, 128
        %1206 = vxpose.xlu0.b32.cont [6/16] 0.0, 128
        %1207 = vxpose.xlu0.b32.cont [7/16] 0.0, 128
        %1208 = vxpose.xlu0.b32.cont [8/16] 0.0, 128
        %1209 = vxpose.xlu0.b32.cont [9/16] 0.0, 128
        %1210 = vxpose.xlu0.b32.cont [10/16] 0.0, 128
        %1211 = vxpose.xlu0.b32.cont [11/16] 0.0, 128
        %1212 = vxpose.xlu0.b32.cont [12/16] 0.0, 128
        %1213 = vxpose.xlu0.b32.cont [13/16] 0.0, 128
        %1214 = vxpose.xlu0.b32.cont [14/16] 0.0, 128
        %1215 = vxpose.xlu0.b32.cont [15/16] 0.0, 128
        %1216 = vxpose.xlu0.b32.end [16/16] 0.0, 128
        %v1217 = vpop.trf.xlu0
        %v1218 = vpop.trf.xlu0
        %v1219 = vpop.trf.xlu0
        %v1220 = vpop.trf.xlu0
        %v1221 = vpop.trf.xlu0
        %v1222 = vpop.trf.xlu0
        %v1223 = vpop.trf.xlu0
        %v1224 = vpop.trf.xlu0
        %v1225 = vpop.trf.xlu0
        %v1226 = vpop.trf.xlu0
        %v1227 = vpop.trf.xlu0
        %v1228 = vpop.trf.xlu0
        %v1229 = vpop.trf.xlu0
        %v1230 = vpop.trf.xlu0
        %v1231 = vpop.trf.xlu0
        %v1232 = vpop.trf.xlu0
        %v1233 = vld [vmem:[%s3] sm:$0xf]
        %v1234 = vld [vmem:[%s3 + $0x4] sm:$0xf]
        %v1235 = vld [vmem:[%s3 + $0x8] sm:$0xf]
        %v1236 = vld [vmem:[%s3 + $0xc] sm:$0xf]
        %v1237 = vld [vmem:[%s3 + $0x10] sm:$0xf]
        %v1238 = vld [vmem:[%s3 + $0x14] sm:$0xf]
        %v1239 = vld [vmem:[%s3 + $0x18] sm:$0xf]
        %v1240 = vld [vmem:[%s3 + $0x1c] sm:$0xf]
        %v1241 = vld [vmem:[%s3 + $0x20] sm:$0xf]
        %v1242 = vld [vmem:[%s3 + $0x24] sm:$0xf]
        %v1243 = vld [vmem:[%s3 + $0x28] sm:$0xf]
        %v1244 = vld [vmem:[%s3 + $0x2c] sm:$0xf]
        %v1245 = vld [vmem:[%s3 + $0x30] sm:$0xf]
        %v1246 = vld [vmem:[%s3 + $0x34] sm:$0xf]
        %v1247 = vld [vmem:[%s5] sm:$0x1]
        %v1248 = vpack.c.bf16 %v1218, %v1217
        %v1250 = vshrl.u32 %v1248, 16
        %v1252 = vrot.slane %v1250, 6
        %v1253 = vshll.u32 %v1248, 16
        %v1255 = vrot.slane %v1253, 7
        %v1256 = vor.u32 %v1252, %v1255
        %vm1258 = vcmask 1041408
        %vm1259 = vsmask.f32 1280
        %vm1260 = vmand %vm1258, %vm1259
        %v1261 = vsel %vm1260, 0, %v1256
        %v1262 = vsel %vm1260, %v1256, 0
        %vm1263 = vsmask.f32 7424
        %v1265 = vshrl.u32 %v1261, 16
        %v1267 = vshll.u32 %v1261, 16
        %v1269 = vrot.slane %v1267, 1
        %v1270 = vor.u32 %v1265, %v1269
        %v1272 = vshll.u32 %v1262, 16
        %v1274 = vrot.slane %v1272, 1
        %v1275 = vsel %vm1263, %v1270, %v1274
        %1276 = vrot.lane.b32.xlu0 %v1275, 16
        %v1277 = vpop.permute.xlu0 %1276
        %vm1280 = vcmask 1046528
        %v1281 = vrot.slane %v1261, 1
        %v1282 = vrot.slane %v1262, 1
        %v1283 = vsel %vm1280, %v1281, %v1282
        %1284 = vrot.lane.b32.xlu0 %v1283, 32
        %v1285 = vpop.permute.xlu0 %1284
        %vm1286 = vsmask.f32 6400
        %v1287 = vrot.slane %v1265, 1
        %v1288 = vrot.slane %v1267, 2
        %v1289 = vor.u32 %v1287, %v1288
        %v1290 = vshrl.u32 %v1262, 16
        %v1292 = vrot.slane %v1290, 1
        %v1293 = vrot.slane %v1272, 2
        %v1294 = vor.u32 %v1292, %v1293
        %v1295 = vsel %vm1286, %v1289, %v1294
        %1296 = vrot.lane.b32.xlu0 %v1295, 48
        %v1297 = vpop.permute.xlu0 %1296
        %vm1298 = vcmask 1045504
        %v1299 = vrot.slane %v1261, 2
        %v1300 = vrot.slane %v1262, 2
        %v1301 = vsel %vm1298, %v1299, %v1300
        %1302 = vrot.lane.b32.xlu0 %v1301, 64
        %v1303 = vpop.permute.xlu0 %1302
        %vm1304 = vsmask.f32 5376
        %v1305 = vrot.slane %v1265, 2
        %v1306 = vrot.slane %v1267, 3
        %v1307 = vor.u32 %v1305, %v1306
        %v1308 = vrot.slane %v1290, 2
        %v1309 = vrot.slane %v1272, 3
        %v1310 = vor.u32 %v1308, %v1309
        %v1311 = vsel %vm1304, %v1307, %v1310
        %1312 = vrot.lane.b32.xlu0 %v1311, 80
        %v1313 = vpop.permute.xlu0 %1312
        %vm1314 = vcmask 1044480
        %v1315 = vrot.slane %v1261, 3
        %v1316 = vrot.slane %v1262, 3
        %v1317 = vsel %vm1314, %v1315, %v1316
        %1318 = vrot.lane.b32.xlu0 %v1317, 96
        %v1319 = vpop.permute.xlu0 %1318
        %vm1320 = vcmask 130048
        %v1322 = vsel %vm1320, %v1261, %v1277
        %vm1323 = vcmask 261120
        %v1325 = vsel %vm1323, %v1322, %v1285
        %vm1326 = vcmask 392192
        %v1328 = vsel %vm1326, %v1325, %v1297
        %vm1329 = vcmask 523264
        %v1331 = vsel %vm1329, %v1328, %v1303
        %vm1332 = vcmask 654336
        %v1334 = vsel %vm1332, %v1331, %v1313
        %vm1335 = vcmask 785408
        %v1337 = vsel %vm1335, %v1334, %v1319
        %v1339 = vlaneseq
        %v1340 = vshrl.u32 %v1339, 7
        %v1341 = vsub.s32 0, %v1340
        %v1342 = vrot.slane %v1247, %v1341
        %v1358 = vunpack.c.l.b16 %v1233
        %v1359 = vunpack.c.l.b16 %v1234
        %v1360 = vunpack.c.l.b16 %v1235
        %v1361 = vunpack.c.l.b16 %v1236
        %v1362 = vunpack.c.l.b16 %v1237
        %v1363 = vunpack.c.l.b16 %v1238
        %v1364 = vunpack.c.l.b16 %v1239
        %v1365 = vunpack.c.l.b16 %v1240
        %v1366 = vunpack.c.l.b16 %v1241
        %v1367 = vunpack.c.l.b16 %v1242
        %v1368 = vunpack.c.l.b16 %v1243
        %v1369 = vunpack.c.l.b16 %v1244
        %v1370 = vunpack.c.l.b16 %v1245
        %v1371 = vunpack.c.l.b16 %v1246
        %v1372 = vpack.c.b16 %v1359, %v1358
        %v1373 = vpack.c.b16 %v1361, %v1360
        %v1374 = vpack.c.b16 %v1363, %v1362
        %v1375 = vpack.c.b16 %v1365, %v1364
        %v1376 = vpack.c.b16 %v1367, %v1366
        %v1377 = vpack.c.b16 %v1369, %v1368
        %v1378 = vpack.c.b16 %v1371, %v1370
        %vm1386 = vcmask 916480
        %v1387 = vsel %vm1386, %v1337, 0
        %1389 = vmatprep.subr.bf16.mxu0 0
        %1390 = vmatpush1.bf16.msra.mxu0 %v1372
        %1391 = vmatprep.subr.bf16.mxu0 0
        %1392 = vmatpush1.bf16.msra.mxu0 %v1373
        %1393 = vmatprep.subr.bf16.mxu0 0
        %1394 = vmatpush1.bf16.msra.mxu0 %v1374
        %1395 = vmatprep.subr.bf16.mxu0 0
        %1396 = vmatpush1.bf16.msra.mxu0 %v1375
        %1397 = vmatprep.subr.bf16.mxu0 0
        %1398 = vmatpush1.bf16.msra.mxu0 %v1376
        %1399 = vmatprep.subr.bf16.mxu0 0
        %1400 = vmatpush1.bf16.msra.mxu0 %v1377
        %1401 = vmatprep.subr.bf16.mxu0 0
        %1402 = vmatpush1.bf16.msra.mxu0 %v1378
        %1403 = vmatprep.subr.bf16.mxu0 0
        %1404 = vmatpush1.bf16.msra.mxu0 0
        %1405 = vmatprep.subr.bf16.mxu0 0
        %1406 = vmatpush1.bf16.msra.mxu0 0
        %1407 = vmatprep.subr.bf16.mxu0 0
        %1408 = vmatpush1.bf16.msra.mxu0 0
        %1409 = vmatprep.subr.bf16.mxu0 0
        %1410 = vmatpush1.bf16.msra.mxu0 0
        %1411 = vmatprep.subr.bf16.mxu0 0
        %1412 = vmatpush1.bf16.msra.mxu0 0
        %1413 = vmatprep.subr.bf16.mxu0 0
        %1414 = vmatpush1.bf16.msra.mxu0 0
        %1415 = vmatprep.subr.bf16.mxu0 0
        %1416 = vmatpush1.bf16.msra.mxu0 0
        %1417 = vmatprep.subr.bf16.mxu0 0
        %1418 = vmatpush1.bf16.msra.mxu0 0
        %1419 = vmatprep.subr.bf16.mxu0 0
        %1420 = vmatpush1.bf16.msra.mxu0 0
        %1421 = vmatprep.mubr.bf16.mxu0 0
        %1422 = vmatmul.mubr.bf16.gmra.mrb[0].mxu0 %v1387
        %v1423 = vpop.f32.mrb[0].mxu0
        %v1424 = vadd.f32 %v1342, %v1423
        %v1425 = vpop.f32.mrb[0].mxu0
        %v1426 = vpop.f32.mrb[0].mxu0
        %v1427 = vadd.f32 %v1342, %v1426
        %v1428 = vpop.f32.mrb[0].mxu0
        %1429 = vdwg.mxu0
        %v1430 = vmax.f32 %v1424, 0.0
        %v1431 = vmax.f32 %v1427, 0.0
        %v1432 = vld [vmem:[%s7] sm:$0xf]
        %v1433 = vld [vmem:[%s7 + $0x4] sm:$0xf]
        %v1434 = vld [vmem:[%s7 + $0x8] sm:$0xf]
        %v1435 = vld [vmem:[%s7 + $0xc] sm:$0xf]
        %v1436 = vld [vmem:[%s7 + $0x10] sm:$0xf]
        %v1437 = vld [vmem:[%s9] sm:$0x1]
        %vm1438 = vcmask 58368
        %1439 = vst.msk [vmem:[#allocation2] sm:$0x3] %vm1438, 0.0
        %1440 = vst.msk [vmem:[#allocation2 + $0x12] sm:$0x3] %vm1438, 0.0
        %vm1441 = vcmask 64512
        %1442 = vst.msk [vmem:[#allocation2 + $0x2] sm:$0xff] %vm1441, %v1430
        %1443 = vst.msk [vmem:[#allocation2 + $0xa] sm:$0xff] %vm1441, %v1431
        %v1444 = vld [vmem:[#allocation2] ss:$2 sm:$0xff]
        %s1445 = scalar_lea.vmem [#allocation2], 1
        %v1446 = vld [vmem:[%s1445] ss:$2 sm:$0xff]
        %s1447 = scalar_lea.vmem [#allocation2], 2
        %v1448 = vld [vmem:[%s1447] ss:$2 sm:$0xff]
        %s1449 = scalar_lea.vmem [#allocation2], 3
        %v1450 = vld [vmem:[%s1449] ss:$2 sm:$0xff]
        %s1451 = scalar_lea.vmem [#allocation2], 4
        %v1452 = vld [vmem:[%s1451] ss:$2 sm:$0xff]
        %1454 = vrot.lane.b32.xlu0 %v1446, 8
        %v1455 = vpop.permute.xlu0 %1454
        %1458 = vrot.lane.b32.xlu0 %v1448, 16
        %v1459 = vpop.permute.xlu0 %1458
        %1462 = vrot.lane.b32.xlu0 %v1450, 24
        %v1463 = vpop.permute.xlu0 %1462
        %1466 = vrot.lane.b32.xlu0 %v1452, 32
        %v1467 = vpop.permute.xlu0 %1466
        %v1469 = vsel %vm1441, %v1444, %v1455
        %v1470 = vsel %vm1320, %v1469, %v1459
        %vm1471 = vcmask 195584
        %v1472 = vsel %vm1471, %v1470, %v1463
        %v1473 = vsel %vm1323, %v1472, %v1467
        %v1474 = vpack.c.bf16 %v1473, %v1473
        %v1476 = vlaneseq
        %v1477 = vshrl.u32 %v1476, 7
        %v1478 = vsub.s32 0, %v1477
        %v1479 = vrot.slane %v1437, %v1478
        %v1486 = vunpack.c.l.b16 %v1432
        %v1487 = vunpack.c.l.b16 %v1433
        %v1488 = vunpack.c.l.b16 %v1434
        %v1489 = vunpack.c.l.b16 %v1435
        %v1490 = vunpack.c.l.b16 %v1436
        %v1491 = vpack.c.b16 %v1487, %v1486
        %v1492 = vpack.c.b16 %v1489, %v1488
        %v1493 = vpack.c.b16 %v1490, %v1490
        %vm1496 = vcmask 326656
        %v1498 = vsel %vm1496, %v1474, 0
        %vm1500 = vcmask 1043456
        %v1502 = vsel %vm1500, %v1493, 0
        %1504 = vmatprep.subr.bf16.mxu0 0
        %1505 = vmatpush1.bf16.msra.mxu0 %v1491
        %1506 = vmatprep.subr.bf16.mxu0 0
        %1507 = vmatpush1.bf16.msra.mxu0 %v1492
        %1508 = vmatprep.subr.bf16.mxu0 0
        %1509 = vmatpush1.bf16.msra.mxu0 %v1502
        %1510 = vmatprep.subr.bf16.mxu0 0
        %1511 = vmatpush1.bf16.msra.mxu0 0
        %1512 = vmatprep.subr.bf16.mxu0 0
        %1513 = vmatpush1.bf16.msra.mxu0 0
        %1514 = vmatprep.subr.bf16.mxu0 0
        %1515 = vmatpush1.bf16.msra.mxu0 0
        %1516 = vmatprep.subr.bf16.mxu0 0
        %1517 = vmatpush1.bf16.msra.mxu0 0
        %1518 = vmatprep.subr.bf16.mxu0 0
        %1519 = vmatpush1.bf16.msra.mxu0 0
        %1520 = vmatprep.subr.bf16.mxu0 0
        %1521 = vmatpush1.bf16.msra.mxu0 0
        %1522 = vmatprep.subr.bf16.mxu0 0
        %1523 = vmatpush1.bf16.msra.mxu0 0
        %1524 = vmatprep.subr.bf16.mxu0 0
        %1525 = vmatpush1.bf16.msra.mxu0 0
        %1526 = vmatprep.subr.bf16.mxu0 0
        %1527 = vmatpush1.bf16.msra.mxu0 0
        %1528 = vmatprep.subr.bf16.mxu0 0
        %1529 = vmatpush1.bf16.msra.mxu0 0
        %1530 = vmatprep.subr.bf16.mxu0 0
        %1531 = vmatpush1.bf16.msra.mxu0 0
        %1532 = vmatprep.subr.bf16.mxu0 0
        %1533 = vmatpush1.bf16.msra.mxu0 0
        %1534 = vmatprep.subr.bf16.mxu0 0
        %1535 = vmatpush1.bf16.msra.mxu0 0
        %1536 = vmatprep.mubr.bf16.mxu0 0
        %1537 = vmatmul.mubr.bf16.gmra.mrb[0].mxu0 %v1498
        %v1538 = vpop.f32.mrb[0].mxu0
        %v1539 = vadd.f32 %v1479, %v1538
        %v1540 = vpop.f32.mrb[0].mxu0
        %v1541 = vpop.f32.mrb[0].mxu0
        %v1542 = vpop.f32.mrb[0].mxu0
        %1543 = vdwg.mxu0
        %v1544 = vmax.f32 %v1539, 0.0
        %v1545 = vld [vmem:[%s11] sm:$0xf]
        %v1546 = vld [vmem:[%s11 + $0x4] sm:$0xf]
        %v1547 = vld [vmem:[%s11 + $0x8] sm:$0xf]
        %v1548 = vld [vmem:[%s11 + $0xc] sm:$0xf]
        %v1549 = vld [vmem:[%s11 + $0x10] sm:$0xf]
        %v1550 = vld [vmem:[%s11 + $0x14] sm:$0xf]
        %v1551 = vld [vmem:[%s13] sm:$0x1]
        %vm1552 = vcmask 122880
        %1553 = vst.msk [vmem:[#allocation3] sm:$0x1] %vm1552, 0.0
        %1554 = vst.msk [vmem:[#allocation3 + $0x9] sm:$0x1] %vm1552, 0.0
        %1555 = vst.msk [vmem:[#allocation3 + $0x1] sm:$0xff] %vm1320, %v1544
        %v1556 = vld [vmem:[#allocation3] ss:$2 sm:$0xf]
        %s1557 = scalar_lea.vmem [#allocation3], 1
        %v1558 = vld [vmem:[%s1557] ss:$2 sm:$0xf]
        %s1559 = scalar_lea.vmem [#allocation3], 2
        %v1560 = vld [vmem:[%s1559] ss:$2 sm:$0xf]
        %1562 = vrot.lane.b32.xlu0 %v1558, 16
        %v1563 = vpop.permute.xlu0 %1562
        %1566 = vrot.lane.b32.xlu0 %v1560, 32
        %v1567 = vpop.permute.xlu0 %1566
        %v1569 = vsel %vm1320, %v1556, %v1563
        %v1570 = vsel %vm1323, %v1569, %v1567
        %v1571 = vpack.c.bf16 %v1570, %v1570
        %v1573 = vlaneseq
        %v1574 = vshrl.u32 %v1573, 7
        %v1575 = vsub.s32 0, %v1574
        %v1576 = vrot.slane %v1551, %v1575
        %v1584 = vunpack.c.l.b16 %v1545
        %v1585 = vunpack.c.l.b16 %v1546
        %v1586 = vunpack.c.l.b16 %v1547
        %v1587 = vunpack.c.l.b16 %v1548
        %v1588 = vunpack.c.l.b16 %v1549
        %v1589 = vunpack.c.l.b16 %v1550
        %v1590 = vpack.c.b16 %v1585, %v1584
        %v1591 = vpack.c.b16 %v1587, %v1586
        %v1592 = vpack.c.b16 %v1589, %v1588
        %v1597 = vsel %vm1326, %v1571, 0
        %1599 = vmatprep.subr.bf16.mxu0 0
        %1600 = vmatpush1.bf16.msra.mxu0 %v1590
        %1601 = vmatprep.subr.bf16.mxu0 0
        %1602 = vmatpush1.bf16.msra.mxu0 %v1591
        %1603 = vmatprep.subr.bf16.mxu0 0
        %1604 = vmatpush1.bf16.msra.mxu0 %v1592
        %1605 = vmatprep.subr.bf16.mxu0 0
        %1606 = vmatpush1.bf16.msra.mxu0 0
        %1607 = vmatprep.subr.bf16.mxu0 0
        %1608 = vmatpush1.bf16.msra.mxu0 0
        %1609 = vmatprep.subr.bf16.mxu0 0
        %1610 = vmatpush1.bf16.msra.mxu0 0
        %1611 = vmatprep.subr.bf16.mxu0 0
        %1612 = vmatpush1.bf16.msra.mxu0 0
        %1613 = vmatprep.subr.bf16.mxu0 0
        %1614 = vmatpush1.bf16.msra.mxu0 0
        %1615 = vmatprep.subr.bf16.mxu0 0
        %1616 = vmatpush1.bf16.msra.mxu0 0
        %1617 = vmatprep.subr.bf16.mxu0 0
        %1618 = vmatpush1.bf16.msra.mxu0 0
        %1619 = vmatprep.subr.bf16.mxu0 0
        %1620 = vmatpush1.bf16.msra.mxu0 0
        %1621 = vmatprep.subr.bf16.mxu0 0
        %1622 = vmatpush1.bf16.msra.mxu0 0
        %1623 = vmatprep.subr.bf16.mxu0 0
        %1624 = vmatpush1.bf16.msra.mxu0 0
        %1625 = vmatprep.subr.bf16.mxu0 0
        %1626 = vmatpush1.bf16.msra.mxu0 0
        %1627 = vmatprep.subr.bf16.mxu0 0
        %1628 = vmatpush1.bf16.msra.mxu0 0
        %1629 = vmatprep.subr.bf16.mxu0 0
        %1630 = vmatpush1.bf16.msra.mxu0 0
        %1631 = vmatprep.mubr.bf16.mxu0 0
        %1632 = vmatmul.mubr.bf16.gmra.mrb[0].mxu0 %v1597
        %v1633 = vpop.f32.mrb[0].mxu0
        %v1634 = vadd.f32 %v1576, %v1633
        %v1635 = vpop.f32.mrb[0].mxu0
        %v1636 = vpop.f32.mrb[0].mxu0
        %v1637 = vpop.f32.mrb[0].mxu0
        %1638 = vdwg.mxu0
        %v1639 = vld [vmem:[%s27] sm:$0xff]
        %v1640 = vld [vmem:[%s27 + $0x8] sm:$0xff]
        %v1641 = vld [vmem:[%s27 + $0x10] sm:$0xff]
        %v1642 = vld [vmem:[%s27 + $0x18] sm:$0xff]
        %v1643 = vld [vmem:[%s29] sm:$0xff]
        %v1644 = vld [vmem:[%s29 + $0x8] sm:$0xff]
        %v1645 = vld [vmem:[%s15] sm:$0x1]
        %v1646 = vld [vmem:[%s17] sm:$0x1]
        %vm1647 = vcmask 257024
        %v1648 = vsel %vm1647, %v1634, 0.0
        %v1649 = vrot.slane %v1648, 4
        %v1650 = vadd.f32 %v1648, %v1649
        %v1651 = vrot.slane %v1650, 2
        %v1652 = vadd.f32 %v1650, %v1651
        %v1653 = vrot.slane %v1652, 1
        %v1654 = vadd.f32 %v1652, %v1653
        %v1655 = vmul.f32 %v1634, %v1634
        %v1656 = vsel %vm1647, %v1655, 0.0
        %v1657 = vrot.slane %v1656, 4
        %v1658 = vadd.f32 %v1656, %v1657
        %v1659 = vrot.slane %v1658, 2
        %v1660 = vadd.f32 %v1658, %v1659
        %v1661 = vrot.slane %v1660, 1
        %v1662 = vadd.f32 %v1660, %v1661
        %v1664 = vsel %vm1323, %v1654, 0
        %1666 = vmatprep.subr.mxu0 0.0
        %1667 = vmatpush1.msra.mxu0 %v1639
        %1668 = vmatprep.subr.mxu0 0.0
        %1669 = vmatpush1.msra.mxu0 %v1640
        %1670 = vmatprep.subr.mxu0 0.0
        %1671 = vmatpush1.msra.mxu0 %v1641
        %1672 = vmatprep.subr.mxu0 0.0
        %1673 = vmatpush1.msra.mxu0 %v1642
        %1674 = vmatprep.subr.mxu0 0.0
        %1675 = vmatpush1.msra.mxu0 0.0
        %1676 = vmatprep.subr.mxu0 0.0
        %1677 = vmatpush1.msra.mxu0 0.0
        %1678 = vmatprep.subr.mxu0 0.0
        %1679 = vmatpush1.msra.mxu0 0.0
        %1680 = vmatprep.subr.mxu0 0.0
        %1681 = vmatpush1.msra.mxu0 0.0
        %1682 = vmatprep.subr.mxu0 0.0
        %1683 = vmatpush1.msra.mxu0 0.0
        %1684 = vmatprep.subr.mxu0 0.0
        %1685 = vmatpush1.msra.mxu0 0.0
        %1686 = vmatprep.subr.mxu0 0.0
        %1687 = vmatpush1.msra.mxu0 0.0
        %1688 = vmatprep.subr.mxu0 0.0
        %1689 = vmatpush1.msra.mxu0 0.0
        %1690 = vmatprep.subr.mxu0 0.0
        %1691 = vmatpush1.msra.mxu0 0.0
        %1692 = vmatprep.subr.mxu0 0.0
        %1693 = vmatpush1.msra.mxu0 0.0
        %1694 = vmatprep.subr.mxu0 0.0
        %1695 = vmatpush1.msra.mxu0 0.0
        %1696 = vmatprep.subr.mxu0 0.0
        %1697 = vmatpush1.msra.mxu0 0.0
        %1698 = vmatprep.subr.mxu0 0.0
        %1699 = vmatpush1.msra.mxu0 0.0
        %1700 = vmatprep.subr.mxu0 0.0
        %1701 = vmatpush1.msra.mxu0 0.0
        %1702 = vmatprep.subr.mxu0 0.0
        %1703 = vmatpush1.msra.mxu0 0.0
        %1704 = vmatprep.subr.mxu0 0.0
        %1705 = vmatpush1.msra.mxu0 0.0
        %1706 = vmatprep.subr.mxu0 0.0
        %1707 = vmatpush1.msra.mxu0 0.0
        %1708 = vmatprep.subr.mxu0 0.0
        %1709 = vmatpush1.msra.mxu0 0.0
        %1710 = vmatprep.subr.mxu0 0.0
        %1711 = vmatpush1.msra.mxu0 0.0
        %1712 = vmatprep.subr.mxu0 0.0
        %1713 = vmatpush1.msra.mxu0 0.0
        %1714 = vmatprep.subr.mxu0 0.0
        %1715 = vmatpush1.msra.mxu0 0.0
        %1716 = vmatprep.subr.mxu0 0.0
        %1717 = vmatpush1.msra.mxu0 0.0
        %1718 = vmatprep.subr.mxu0 0.0
        %1719 = vmatpush1.msra.mxu0 0.0
        %1720 = vmatprep.subr.mxu0 0.0
        %1721 = vmatpush1.msra.mxu0 0.0
        %1722 = vmatprep.subr.mxu0 0.0
        %1723 = vmatpush1.msra.mxu0 0.0
        %1724 = vmatprep.subr.mxu0 0.0
        %1725 = vmatpush1.msra.mxu0 0.0
        %1726 = vmatprep.subr.mxu0 0.0
        %1727 = vmatpush1.msra.mxu0 0.0
        %1728 = vmatprep.subr.mxu0 0.0
        %1729 = vmatpush1.msra.mxu0 0.0
        %1730 = vmatprep.mubr.f32.mxu0 0.0
        %1731 = vmatmul.mubr.f32.gmra.mrb[0].mxu0 %v1664
        %v1732 = vpop.f32.mrb[0].mxu0
        %v1733 = vadd.f32 0.0, %v1732
        %v1734 = vpop.f32.mrb[0].mxu0
        %1735 = vdwg.mxu0
        %v1736 = vrcp.pop 16.0
        %v1737 = vmul.f32 %v1733, %v1736
        %v1739 = vsel %vm1323, %v1662, 0
        %1741 = vmatprep.subr.mxu0 0.0
        %1742 = vmatpush1.msra.mxu0 %v1639
        %1743 = vmatprep.subr.mxu0 0.0
        %1744 = vmatpush1.msra.mxu0 %v1640
        %1745 = vmatprep.subr.mxu0 0.0
        %1746 = vmatpush1.msra.mxu0 %v1641
        %1747 = vmatprep.subr.mxu0 0.0
        %1748 = vmatpush1.msra.mxu0 %v1642
        %1749 = vmatprep.subr.mxu0 0.0
        %1750 = vmatpush1.msra.mxu0 0.0
        %1751 = vmatprep.subr.mxu0 0.0
        %1752 = vmatpush1.msra.mxu0 0.0
        %1753 = vmatprep.subr.mxu0 0.0
        %1754 = vmatpush1.msra.mxu0 0.0
        %1755 = vmatprep.subr.mxu0 0.0
        %1756 = vmatpush1.msra.mxu0 0.0
        %1757 = vmatprep.subr.mxu0 0.0
        %1758 = vmatpush1.msra.mxu0 0.0
        %1759 = vmatprep.subr.mxu0 0.0
        %1760 = vmatpush1.msra.mxu0 0.0
        %1761 = vmatprep.subr.mxu0 0.0
        %1762 = vmatpush1.msra.mxu0 0.0
        %1763 = vmatprep.subr.mxu0 0.0
        %1764 = vmatpush1.msra.mxu0 0.0
        %1765 = vmatprep.subr.mxu0 0.0
        %1766 = vmatpush1.msra.mxu0 0.0
        %1767 = vmatprep.subr.mxu0 0.0
        %1768 = vmatpush1.msra.mxu0 0.0
        %1769 = vmatprep.subr.mxu0 0.0
        %1770 = vmatpush1.msra.mxu0 0.0
        %1771 = vmatprep.subr.mxu0 0.0
        %1772 = vmatpush1.msra.mxu0 0.0
        %1773 = vmatprep.subr.mxu0 0.0
        %1774 = vmatpush1.msra.mxu0 0.0
        %1775 = vmatprep.subr.mxu0 0.0
        %1776 = vmatpush1.msra.mxu0 0.0
        %1777 = vmatprep.subr.mxu0 0.0
        %1778 = vmatpush1.msra.mxu0 0.0
        %1779 = vmatprep.subr.mxu0 0.0
        %1780 = vmatpush1.msra.mxu0 0.0
        %1781 = vmatprep.subr.mxu0 0.0
        %1782 = vmatpush1.msra.mxu0 0.0
        %1783 = vmatprep.subr.mxu0 0.0
        %1784 = vmatpush1.msra.mxu0 0.0
        %1785 = vmatprep.subr.mxu0 0.0
        %1786 = vmatpush1.msra.mxu0 0.0
        %1787 = vmatprep.subr.mxu0 0.0
        %1788 = vmatpush1.msra.mxu0 0.0
        %1789 = vmatprep.subr.mxu0 0.0
        %1790 = vmatpush1.msra.mxu0 0.0
        %1791 = vmatprep.subr.mxu0 0.0
        %1792 = vmatpush1.msra.mxu0 0.0
        %1793 = vmatprep.subr.mxu0 0.0
        %1794 = vmatpush1.msra.mxu0 0.0
        %1795 = vmatprep.subr.mxu0 0.0
        %1796 = vmatpush1.msra.mxu0 0.0
        %1797 = vmatprep.subr.mxu0 0.0
        %1798 = vmatpush1.msra.mxu0 0.0
        %1799 = vmatprep.subr.mxu0 0.0
        %1800 = vmatpush1.msra.mxu0 0.0
        %1801 = vmatprep.subr.mxu0 0.0
        %1802 = vmatpush1.msra.mxu0 0.0
        %1803 = vmatprep.subr.mxu0 0.0
        %1804 = vmatpush1.msra.mxu0 0.0
        %1805 = vmatprep.mubr.f32.mxu0 0.0
        %1806 = vmatmul.mubr.f32.gmra.mrb[0].mxu0 %v1739
        %v1807 = vpop.f32.mrb[0].mxu0
        %v1808 = vadd.f32 0.0, %v1807
        %v1809 = vpop.f32.mrb[0].mxu0
        %1810 = vdwg.mxu0
        %v1811 = vmul.f32 %v1808, %v1736
        %v1812 = vmul.f32 %v1737, %v1737
        %v1813 = vsub.f32 %v1811, %v1812
        %v1814 = vmax.f32 %v1813, 0.0
        %v1815 = vlaneseq
        %v1816 = vshrl.u32 %v1815, 7
        %v1817 = vsub.s32 0, %v1816
        %v1818 = vrot.slane %v1737, %v1817
        %v1819 = vsub.f32 %v1634, %v1818
        %v1820 = vadd.f32 %v1814, 1e-05
        %v1821 = vrsqrt.pop %v1820
        %v1822 = vlaneseq
        %v1823 = vshrl.u32 %v1822, 7
        %v1824 = vsub.s32 0, %v1823
        %v1825 = vrot.slane %v1821, %v1824
        %v1826 = vmul.f32 %v1819, %v1825
        %v1828 = vlaneseq
        %v1829 = vshrl.u32 %v1828, 7
        %v1830 = vsub.s32 0, %v1829
        %v1831 = vrot.slane %v1645, %v1830
        %v1833 = vmul.f32 %v1826, %v1831
        %v1835 = vlaneseq
        %v1836 = vshrl.u32 %v1835, 7
        %v1837 = vsub.s32 0, %v1836
        %v1838 = vrot.slane %v1646, %v1837
        %v1840 = vadd.f32 %v1833, %v1838
        %v1841 = vmax.f32 %v1840, 0.0
        %v1842 = vld [vmem:[%s19] sm:$0xf]
        %v1843 = vld [vmem:[%s19 + $0x4] sm:$0xf]
        %v1844 = vld [vmem:[%s19 + $0x8] sm:$0xf]
        %v1845 = vld [vmem:[%s19 + $0xc] sm:$0xf]
        %v1846 = vld [vmem:[%s19 + $0x10] sm:$0xf]
        %v1847 = vld [vmem:[%s19 + $0x14] sm:$0xf]
        %v1848 = vld [vmem:[%s19 + $0x18] sm:$0xf]
        %v1849 = vld [vmem:[%s19 + $0x1c] sm:$0xf]
        %v1850 = vld [vmem:[%s19 + $0x20] sm:$0xf]
        %v1851 = vld [vmem:[%s19 + $0x24] sm:$0xf]
        %v1852 = vld [vmem:[%s19 + $0x28] sm:$0xf]
        %v1853 = vld [vmem:[%s19 + $0x2c] sm:$0xf]
        %v1854 = vpack.c.bf16 %v1841, %v1841
        %v1856 = vshrl.u32 %v1854, 16
        %v1858 = vrot.slane %v1856, 7
        %v1859 = vshll.u32 %v1854, 16
        %v1861 = vor.u32 %v1858, %v1859
        %vm1863 = vcmask 1040384
        %vm1864 = vsmask.f32 256
        %vm1865 = vmand %vm1863, %vm1864
        %v1866 = vsel %vm1865, 0, %v1861
        %vm1867 = vcmask 1042432
        %vm1868 = vsmask.f32 2304
        %vm1869 = vmand %vm1867, %vm1868
        %v1870 = vsel %vm1869, %v1866, 0
        %v1872 = vshrl.u32 %v1870, 16
        %v1874 = vshll.u32 %v1870, 16
        %v1876 = vrot.slane %v1874, 1
        %v1877 = vor.u32 %v1872, %v1876
        %1878 = vrot.lane.b32.xlu0 %v1877, 32
        %v1879 = vpop.permute.xlu0 %1878
        %v1881 = vrot.slane %v1870, 1
        %1882 = vrot.lane.b32.xlu0 %v1881, 64
        %v1883 = vpop.permute.xlu0 %1882
        %v1885 = vsel %vm1323, %v1870, %v1879
        %v1887 = vsel %vm1329, %v1885, %v1883
        %v1900 = vunpack.c.l.b16 %v1842
        %v1901 = vunpack.c.l.b16 %v1843
        %v1902 = vunpack.c.l.b16 %v1844
        %v1903 = vunpack.c.l.b16 %v1845
        %v1904 = vunpack.c.l.b16 %v1846
        %v1905 = vunpack.c.l.b16 %v1847
        %v1906 = vunpack.c.l.b16 %v1848
        %v1907 = vunpack.c.l.b16 %v1849
        %v1908 = vunpack.c.l.b16 %v1850
        %v1909 = vunpack.c.l.b16 %v1851
        %v1910 = vunpack.c.l.b16 %v1852
        %v1911 = vunpack.c.l.b16 %v1853
        %v1912 = vpack.c.b16 %v1901, %v1900
        %v1913 = vpack.c.b16 %v1903, %v1902
        %v1914 = vpack.c.b16 %v1905, %v1904
        %v1915 = vpack.c.b16 %v1907, %v1906
        %v1916 = vpack.c.b16 %v1909, %v1908
        %v1917 = vpack.c.b16 %v1911, %v1910
        %v1924 = vsel %vm1335, %v1887, 0
        %1926 = vmatprep.subr.bf16.mxu0 0
        %1927 = vmatpush1.bf16.msra.mxu0 %v1912
        %1928 = vmatprep.subr.bf16.mxu0 0
        %1929 = vmatpush1.bf16.msra.mxu0 %v1913
        %1930 = vmatprep.subr.bf16.mxu0 0
        %1931 = vmatpush1.bf16.msra.mxu0 %v1914
        %1932 = vmatprep.subr.bf16.mxu0 0
        %1933 = vmatpush1.bf16.msra.mxu0 %v1915
        %1934 = vmatprep.subr.bf16.mxu0 0
        %1935 = vmatpush1.bf16.msra.mxu0 %v1916
        %1936 = vmatprep.subr.bf16.mxu0 0
        %1937 = vmatpush1.bf16.msra.mxu0 %v1917
        %1938 = vmatprep.subr.bf16.mxu0 0
        %1939 = vmatpush1.bf16.msra.mxu0 0
        %1940 = vmatprep.subr.bf16.mxu0 0
        %1941 = vmatpush1.bf16.msra.mxu0 0
        %1942 = vmatprep.subr.bf16.mxu0 0
        %1943 = vmatpush1.bf16.msra.mxu0 0
        %1944 = vmatprep.subr.bf16.mxu0 0
        %1945 = vmatpush1.bf16.msra.mxu0 0
        %1946 = vmatprep.subr.bf16.mxu0 0
        %1947 = vmatpush1.bf16.msra.mxu0 0
        %1948 = vmatprep.subr.bf16.mxu0 0
        %1949 = vmatpush1.bf16.msra.mxu0 0
        %1950 = vmatprep.subr.bf16.mxu0 0
        %1951 = vmatpush1.bf16.msra.mxu0 0
        %1952 = vmatprep.subr.bf16.mxu0 0
        %1953 = vmatpush1.bf16.msra.mxu0 0
        %1954 = vmatprep.subr.bf16.mxu0 0
        %1955 = vmatpush1.bf16.msra.mxu0 0
        %1956 = vmatprep.subr.bf16.mxu0 0
        %1957 = vmatpush1.bf16.msra.mxu0 0
        %1958 = vmatprep.mubr.bf16.mxu0 0
        %1959 = vmatmul.mubr.bf16.gmra.mrb[0].mxu0 %v1924
        %v1960 = vpop.f32.mrb[0].mxu0
        %v1961 = vadd.f32 0.0, %v1960
        %v1962 = vpop.f32.mrb[0].mxu0
        %v1963 = vpop.f32.mrb[0].mxu0
        %v1964 = vpop.f32.mrb[0].mxu0
        %1965 = vdwg.mxu0
        %v1966 = vld [vmem:[%s21] sm:$0x1]
        %v1967 = vld [vmem:[%s23] sm:$0x1]
        %vm1968 = vcmask 125952
        %v1969 = vsel %vm1968, %v1961, 0.0
        %v1970 = vrot.slane %v1969, 4
        %v1971 = vadd.f32 %v1969, %v1970
        %v1972 = vrot.slane %v1971, 2
        %v1973 = vadd.f32 %v1971, %v1972
        %v1974 = vrot.slane %v1973, 1
        %v1975 = vadd.f32 %v1973, %v1974
        %v1976 = vmul.f32 %v1961, %v1961
        %v1977 = vsel %vm1968, %v1976, 0.0
        %v1978 = vrot.slane %v1977, 4
        %v1979 = vadd.f32 %v1977, %v1978
        %v1980 = vrot.slane %v1979, 2
        %v1981 = vadd.f32 %v1979, %v1980
        %v1982 = vrot.slane %v1981, 1
        %v1983 = vadd.f32 %v1981, %v1982
        %v1985 = vsel %vm1320, %v1975, 0
        %1987 = vmatprep.subr.mxu0 0.0
        %1988 = vmatpush1.msra.mxu0 %v1643
        %1989 = vmatprep.subr.mxu0 0.0
        %1990 = vmatpush1.msra.mxu0 %v1644
        %1991 = vmatprep.subr.mxu0 0.0
        %1992 = vmatpush1.msra.mxu0 0.0
        %1993 = vmatprep.subr.mxu0 0.0
        %1994 = vmatpush1.msra.mxu0 0.0
        %1995 = vmatprep.subr.mxu0 0.0
        %1996 = vmatpush1.msra.mxu0 0.0
        %1997 = vmatprep.subr.mxu0 0.0
        %1998 = vmatpush1.msra.mxu0 0.0
        %1999 = vmatprep.subr.mxu0 0.0
        %2000 = vmatpush1.msra.mxu0 0.0
        %2001 = vmatprep.subr.mxu0 0.0
        %2002 = vmatpush1.msra.mxu0 0.0
        %2003 = vmatprep.subr.mxu0 0.0
        %2004 = vmatpush1.msra.mxu0 0.0
        %2005 = vmatprep.subr.mxu0 0.0
        %2006 = vmatpush1.msra.mxu0 0.0
        %2007 = vmatprep.subr.mxu0 0.0
        %2008 = vmatpush1.msra.mxu0 0.0
        %2009 = vmatprep.subr.mxu0 0.0
        %2010 = vmatpush1.msra.mxu0 0.0
        %2011 = vmatprep.subr.mxu0 0.0
        %2012 = vmatpush1.msra.mxu0 0.0
        %2013 = vmatprep.subr.mxu0 0.0
        %2014 = vmatpush1.msra.mxu0 0.0
        %2015 = vmatprep.subr.mxu0 0.0
        %2016 = vmatpush1.msra.mxu0 0.0
        %2017 = vmatprep.subr.mxu0 0.0
        %2018 = vmatpush1.msra.mxu0 0.0
        %2019 = vmatprep.subr.mxu0 0.0
        %2020 = vmatpush1.msra.mxu0 0.0
        %2021 = vmatprep.subr.mxu0 0.0
        %2022 = vmatpush1.msra.mxu0 0.0
        %2023 = vmatprep.subr.mxu0 0.0
        %2024 = vmatpush1.msra.mxu0 0.0
        %2025 = vmatprep.subr.mxu0 0.0
        %2026 = vmatpush1.msra.mxu0 0.0
        %2027 = vmatprep.subr.mxu0 0.0
        %2028 = vmatpush1.msra.mxu0 0.0
        %2029 = vmatprep.subr.mxu0 0.0
        %2030 = vmatpush1.msra.mxu0 0.0
        %2031 = vmatprep.subr.mxu0 0.0
        %2032 = vmatpush1.msra.mxu0 0.0
        %2033 = vmatprep.subr.mxu0 0.0
        %2034 = vmatpush1.msra.mxu0 0.0
        %2035 = vmatprep.subr.mxu0 0.0
        %2036 = vmatpush1.msra.mxu0 0.0
        %2037 = vmatprep.subr.mxu0 0.0
        %2038 = vmatpush1.msra.mxu0 0.0
        %2039 = vmatprep.subr.mxu0 0.0
        %2040 = vmatpush1.msra.mxu0 0.0
        %2041 = vmatprep.subr.mxu0 0.0
        %2042 = vmatpush1.msra.mxu0 0.0
        %2043 = vmatprep.subr.mxu0 0.0
        %2044 = vmatpush1.msra.mxu0 0.0
        %2045 = vmatprep.subr.mxu0 0.0
        %2046 = vmatpush1.msra.mxu0 0.0
        %2047 = vmatprep.subr.mxu0 0.0
        %2048 = vmatpush1.msra.mxu0 0.0
        %2049 = vmatprep.subr.mxu0 0.0
        %2050 = vmatpush1.msra.mxu0 0.0
        %2051 = vmatprep.mubr.f32.mxu0 0.0
        %2052 = vmatmul.mubr.f32.gmra.mrb[0].mxu0 %v1985
        %v2053 = vpop.f32.mrb[0].mxu0
        %v2054 = vadd.f32 0.0, %v2053
        %v2055 = vpop.f32.mrb[0].mxu0
        %2056 = vdwg.mxu0
        %v2057 = vrcp.pop 8.0
        %v2058 = vmul.f32 %v2054, %v2057
        %v2060 = vsel %vm1320, %v1983, 0
        %2062 = vmatprep.subr.mxu0 0.0
        %2063 = vmatpush1.msra.mxu0 %v1643
        %2064 = vmatprep.subr.mxu0 0.0
        %2065 = vmatpush1.msra.mxu0 %v1644
        %2066 = vmatprep.subr.mxu0 0.0
        %2067 = vmatpush1.msra.mxu0 0.0
        %2068 = vmatprep.subr.mxu0 0.0
        %2069 = vmatpush1.msra.mxu0 0.0
        %2070 = vmatprep.subr.mxu0 0.0
        %2071 = vmatpush1.msra.mxu0 0.0
        %2072 = vmatprep.subr.mxu0 0.0
        %2073 = vmatpush1.msra.mxu0 0.0
        %2074 = vmatprep.subr.mxu0 0.0
        %2075 = vmatpush1.msra.mxu0 0.0
        %2076 = vmatprep.subr.mxu0 0.0
        %2077 = vmatpush1.msra.mxu0 0.0
        %2078 = vmatprep.subr.mxu0 0.0
        %2079 = vmatpush1.msra.mxu0 0.0
        %2080 = vmatprep.subr.mxu0 0.0
        %2081 = vmatpush1.msra.mxu0 0.0
        %2082 = vmatprep.subr.mxu0 0.0
        %2083 = vmatpush1.msra.mxu0 0.0
        %2084 = vmatprep.subr.mxu0 0.0
        %2085 = vmatpush1.msra.mxu0 0.0
        %2086 = vmatprep.subr.mxu0 0.0
        %2087 = vmatpush1.msra.mxu0 0.0
        %2088 = vmatprep.subr.mxu0 0.0
        %2089 = vmatpush1.msra.mxu0 0.0
        %2090 = vmatprep.subr.mxu0 0.0
        %2091 = vmatpush1.msra.mxu0 0.0
        %2092 = vmatprep.subr.mxu0 0.0
        %2093 = vmatpush1.msra.mxu0 0.0
        %2094 = vmatprep.subr.mxu0 0.0
        %2095 = vmatpush1.msra.mxu0 0.0
        %2096 = vmatprep.subr.mxu0 0.0
        %2097 = vmatpush1.msra.mxu0 0.0
        %2098 = vmatprep.subr.mxu0 0.0
        %2099 = vmatpush1.msra.mxu0 0.0
        %2100 = vmatprep.subr.mxu0 0.0
        %2101 = vmatpush1.msra.mxu0 0.0
        %2102 = vmatprep.subr.mxu0 0.0
        %2103 = vmatpush1.msra.mxu0 0.0
        %2104 = vmatprep.subr.mxu0 0.0
        %2105 = vmatpush1.msra.mxu0 0.0
        %2106 = vmatprep.subr.mxu0 0.0
        %2107 = vmatpush1.msra.mxu0 0.0
        %2108 = vmatprep.subr.mxu0 0.0
        %2109 = vmatpush1.msra.mxu0 0.0
        %2110 = vmatprep.subr.mxu0 0.0
        %2111 = vmatpush1.msra.mxu0 0.0
        %2112 = vmatprep.subr.mxu0 0.0
        %2113 = vmatpush1.msra.mxu0 0.0
        %2114 = vmatprep.subr.mxu0 0.0
        %2115 = vmatpush1.msra.mxu0 0.0
        %2116 = vmatprep.subr.mxu0 0.0
        %2117 = vmatpush1.msra.mxu0 0.0
        %2118 = vmatprep.subr.mxu0 0.0
        %2119 = vmatpush1.msra.mxu0 0.0
        %2120 = vmatprep.subr.mxu0 0.0
        %2121 = vmatpush1.msra.mxu0 0.0
        %2122 = vmatprep.subr.mxu0 0.0
        %2123 = vmatpush1.msra.mxu0 0.0
        %2124 = vmatprep.subr.mxu0 0.0
        %2125 = vmatpush1.msra.mxu0 0.0
        %2126 = vmatprep.mubr.f32.mxu0 0.0
        %2127 = vmatmul.mubr.f32.gmra.mrb[0].mxu0 %v2060
        %v2128 = vpop.f32.mrb[0].mxu0
        %v2129 = vadd.f32 0.0, %v2128
        %v2130 = vpop.f32.mrb[0].mxu0
        %2131 = vdwg.mxu0
        %v2132 = vmul.f32 %v2129, %v2057
        %v2133 = vmul.f32 %v2058, %v2058
        %v2134 = vsub.f32 %v2132, %v2133
        %v2135 = vmax.f32 %v2134, 0.0
        %v2136 = vlaneseq
        %v2137 = vshrl.u32 %v2136, 7
        %v2138 = vsub.s32 0, %v2137
        %v2139 = vrot.slane %v2058, %v2138
        %v2140 = vsub.f32 %v1961, %v2139
        %v2141 = vadd.f32 %v2135, 1e-05
        %v2142 = vrsqrt.pop %v2141
        %v2143 = vlaneseq
        %v2144 = vshrl.u32 %v2143, 7
        %v2145 = vsub.s32 0, %v2144
        %v2146 = vrot.slane %v2142, %v2145
        %v2147 = vmul.f32 %v2140, %v2146
        %v2149 = vlaneseq
        %v2150 = vshrl.u32 %v2149, 7
        %v2151 = vsub.s32 0, %v2150
        %v2152 = vrot.slane %v1966, %v2151
        %v2154 = vmul.f32 %v2147, %v2152
        %v2156 = vlaneseq
        %v2157 = vshrl.u32 %v2156, 7
        %v2158 = vsub.s32 0, %v2157
        %v2159 = vrot.slane %v1967, %v2158
        %v2161 = vadd.f32 %v2154, %v2159
        %v2162 = vmax.f32 %v2161, 0.0
        %v2163 = vpack.c.bf16 %v2162, %v2162
        %v2164 = vld [vmem:[%s25] sm:$0xf]
        %v2165 = vld [vmem:[%s25 + $0x4] sm:$0xf]
        %v2168 = vunpack.c.l.b16 %v2164
        %v2169 = vunpack.c.l.b16 %v2165
        %v2170 = vpack.c.b16 %v2169, %v2168
        %v2173 = vsel %vm1320, %v2163, 0
        %2175 = vmatprep.subr.bf16.mxu0 0
        %2176 = vmatpush1.bf16.msra.mxu0 %v2170
        %2177 = vmatprep.subr.bf16.mxu0 0
        %2178 = vmatpush1.bf16.msra.mxu0 0
        %2179 = vmatprep.subr.bf16.mxu0 0
        %2180 = vmatpush1.bf16.msra.mxu0 0
        %2181 = vmatprep.subr.bf16.mxu0 0
        %2182 = vmatpush1.bf16.msra.mxu0 0
        %2183 = vmatprep.subr.bf16.mxu0 0
        %2184 = vmatpush1.bf16.msra.mxu0 0
        %2185 = vmatprep.subr.bf16.mxu0 0
        %2186 = vmatpush1.bf16.msra.mxu0 0
        %2187 = vmatprep.subr.bf16.mxu0 0
        %2188 = vmatpush1.bf16.msra.mxu0 0
        %2189 = vmatprep.subr.bf16.mxu0 0
        %2190 = vmatpush1.bf16.msra.mxu0 0
        %2191 = vmatprep.subr.bf16.mxu0 0
        %2192 = vmatpush1.bf16.msra.mxu0 0
        %2193 = vmatprep.subr.bf16.mxu0 0
        %2194 = vmatpush1.bf16.msra.mxu0 0
        %2195 = vmatprep.subr.bf16.mxu0 0
        %2196 = vmatpush1.bf16.msra.mxu0 0
        %2197 = vmatprep.subr.bf16.mxu0 0
        %2198 = vmatpush1.bf16.msra.mxu0 0
        %2199 = vmatprep.subr.bf16.mxu0 0
        %2200 = vmatpush1.bf16.msra.mxu0 0
        %2201 = vmatprep.subr.bf16.mxu0 0
        %2202 = vmatpush1.bf16.msra.mxu0 0
        %2203 = vmatprep.subr.bf16.mxu0 0
        %2204 = vmatpush1.bf16.msra.mxu0 0
        %2205 = vmatprep.subr.bf16.mxu0 0
        %2206 = vmatpush1.bf16.msra.mxu0 0
        %2207 = vmatprep.mubr.bf16.mxu0 0
        %2208 = vmatmul.mubr.bf16.gmra.mrb[0].mxu0 %v2173
        %v2209 = vpop.f32.mrb[0].mxu0
        %v2210 = vadd.f32 0.0, %v2209
        %v2211 = vpop.f32.mrb[0].mxu0
        %v2212 = vpop.f32.mrb[0].mxu0
        %v2213 = vpop.f32.mrb[0].mxu0
        %2214 = vdwg.mxu0
        %v2215 = vadd.f32 %v1634, %v2210
        %s2216 = scalar_lea.vmem %s15, 1
        %v2217 = vld [vmem:[%s2216] sm:$0x1]
        %s2218 = scalar_lea.vmem %s17, 1
        %v2219 = vld [vmem:[%s2218] sm:$0x1]
        %v2220 = vsel %vm1647, %v2215, 0.0
        %v2221 = vrot.slane %v2220, 4
        %v2222 = vadd.f32 %v2220, %v2221
        %v2223 = vrot.slane %v2222, 2
        %v2224 = vadd.f32 %v2222, %v2223
        %v2225 = vrot.slane %v2224, 1
        %v2226 = vadd.f32 %v2224, %v2225
        %v2227 = vmul.f32 %v2215, %v2215
        %v2228 = vsel %vm1647, %v2227, 0.0
        %v2229 = vrot.slane %v2228, 4
        %v2230 = vadd.f32 %v2228, %v2229
        %v2231 = vrot.slane %v2230, 2
        %v2232 = vadd.f32 %v2230, %v2231
        %v2233 = vrot.slane %v2232, 1
        %v2234 = vadd.f32 %v2232, %v2233
        %v2236 = vsel %vm1323, %v2226, 0
        %2238 = vmatprep.subr.mxu0 0.0
        %2239 = vmatpush1.msra.mxu0 %v1639
        %2240 = vmatprep.subr.mxu0 0.0
        %2241 = vmatpush1.msra.mxu0 %v1640
        %2242 = vmatprep.subr.mxu0 0.0
        %2243 = vmatpush1.msra.mxu0 %v1641
        %2244 = vmatprep.subr.mxu0 0.0
        %2245 = vmatpush1.msra.mxu0 %v1642
        %2246 = vmatprep.subr.mxu0 0.0
        %2247 = vmatpush1.msra.mxu0 0.0
        %2248 = vmatprep.subr.mxu0 0.0
        %2249 = vmatpush1.msra.mxu0 0.0
        %2250 = vmatprep.subr.mxu0 0.0
        %2251 = vmatpush1.msra.mxu0 0.0
        %2252 = vmatprep.subr.mxu0 0.0
        %2253 = vmatpush1.msra.mxu0 0.0
        %2254 = vmatprep.subr.mxu0 0.0
        %2255 = vmatpush1.msra.mxu0 0.0
        %2256 = vmatprep.subr.mxu0 0.0
        %2257 = vmatpush1.msra.mxu0 0.0
        %2258 = vmatprep.subr.mxu0 0.0
        %2259 = vmatpush1.msra.mxu0 0.0
        %2260 = vmatprep.subr.mxu0 0.0
        %2261 = vmatpush1.msra.mxu0 0.0
        %2262 = vmatprep.subr.mxu0 0.0
        %2263 = vmatpush1.msra.mxu0 0.0
        %2264 = vmatprep.subr.mxu0 0.0
        %2265 = vmatpush1.msra.mxu0 0.0
        %2266 = vmatprep.subr.mxu0 0.0
        %2267 = vmatpush1.msra.mxu0 0.0
        %2268 = vmatprep.subr.mxu0 0.0
        %2269 = vmatpush1.msra.mxu0 0.0
        %2270 = vmatprep.subr.mxu0 0.0
        %2271 = vmatpush1.msra.mxu0 0.0
        %2272 = vmatprep.subr.mxu0 0.0
        %2273 = vmatpush1.msra.mxu0 0.0
        %2274 = vmatprep.subr.mxu0 0.0
        %2275 = vmatpush1.msra.mxu0 0.0
        %2276 = vmatprep.subr.mxu0 0.0
        %2277 = vmatpush1.msra.mxu0 0.0
        %2278 = vmatprep.subr.mxu0 0.0
        %2279 = vmatpush1.msra.mxu0 0.0
        %2280 = vmatprep.subr.mxu0 0.0
        %2281 = vmatpush1.msra.mxu0 0.0
        %2282 = vmatprep.subr.mxu0 0.0
        %2283 = vmatpush1.msra.mxu0 0.0
        %2284 = vmatprep.subr.mxu0 0.0
        %2285 = vmatpush1.msra.mxu0 0.0
        %2286 = vmatprep.subr.mxu0 0.0
        %2287 = vmatpush1.msra.mxu0 0.0
        %2288 = vmatprep.subr.mxu0 0.0
        %2289 = vmatpush1.msra.mxu0 0.0
        %2290 = vmatprep.subr.mxu0 0.0
        %2291 = vmatpush1.msra.mxu0 0.0
        %2292 = vmatprep.subr.mxu0 0.0
        %2293 = vmatpush1.msra.mxu0 0.0
        %2294 = vmatprep.subr.mxu0 0.0
        %2295 = vmatpush1.msra.mxu0 0.0
        %2296 = vmatprep.subr.mxu0 0.0
        %2297 = vmatpush1.msra.mxu0 0.0
        %2298 = vmatprep.subr.mxu0 0.0
        %2299 = vmatpush1.msra.mxu0 0.0
        %2300 = vmatprep.subr.mxu0 0.0
        %2301 = vmatpush1.msra.mxu0 0.0
        %2302 = vmatprep.mubr.f32.mxu0 0.0
        %2303 = vmatmul.mubr.f32.gmra.mrb[0].mxu0 %v2236
        %v2304 = vpop.f32.mrb[0].mxu0
        %v2305 = vadd.f32 0.0, %v2304
        %v2306 = vpop.f32.mrb[0].mxu0
        %2307 = vdwg.mxu0
        %v2308 = vmul.f32 %v2305, %v1736
        %v2310 = vsel %vm1323, %v2234, 0
        %2312 = vmatprep.subr.mxu0 0.0
        %2313 = vmatpush1.msra.mxu0 %v1639
        %2314 = vmatprep.subr.mxu0 0.0
        %2315 = vmatpush1.msra.mxu0 %v1640
        %2316 = vmatprep.subr.mxu0 0.0
        %2317 = vmatpush1.msra.mxu0 %v1641
        %2318 = vmatprep.subr.mxu0 0.0
        %2319 = vmatpush1.msra.mxu0 %v1642
        %2320 = vmatprep.subr.mxu0 0.0
        %2321 = vmatpush1.msra.mxu0 0.0
        %2322 = vmatprep.subr.mxu0 0.0
        %2323 = vmatpush1.msra.mxu0 0.0
        %2324 = vmatprep.subr.mxu0 0.0
        %2325 = vmatpush1.msra.mxu0 0.0
        %2326 = vmatprep.subr.mxu0 0.0
        %2327 = vmatpush1.msra.mxu0 0.0
        %2328 = vmatprep.subr.mxu0 0.0
        %2329 = vmatpush1.msra.mxu0 0.0
        %2330 = vmatprep.subr.mxu0 0.0
        %2331 = vmatpush1.msra.mxu0 0.0
        %2332 = vmatprep.subr.mxu0 0.0
        %2333 = vmatpush1.msra.mxu0 0.0
        %2334 = vmatprep.subr.mxu0 0.0
        %2335 = vmatpush1.msra.mxu0 0.0
        %2336 = vmatprep.subr.mxu0 0.0
        %2337 = vmatpush1.msra.mxu0 0.0
        %2338 = vmatprep.subr.mxu0 0.0
        %2339 = vmatpush1.msra.mxu0 0.0
        %2340 = vmatprep.subr.mxu0 0.0
        %2341 = vmatpush1.msra.mxu0 0.0
        %2342 = vmatprep.subr.mxu0 0.0
        %2343 = vmatpush1.msra.mxu0 0.0
        %2344 = vmatprep.subr.mxu0 0.0
        %2345 = vmatpush1.msra.mxu0 0.0
        %2346 = vmatprep.subr.mxu0 0.0
        %2347 = vmatpush1.msra.mxu0 0.0
        %2348 = vmatprep.subr.mxu0 0.0
        %2349 = vmatpush1.msra.mxu0 0.0
        %2350 = vmatprep.subr.mxu0 0.0
        %2351 = vmatpush1.msra.mxu0 0.0
        %2352 = vmatprep.subr.mxu0 0.0
        %2353 = vmatpush1.msra.mxu0 0.0
        %2354 = vmatprep.subr.mxu0 0.0
        %2355 = vmatpush1.msra.mxu0 0.0
        %2356 = vmatprep.subr.mxu0 0.0
        %2357 = vmatpush1.msra.mxu0 0.0
        %2358 = vmatprep.subr.mxu0 0.0
        %2359 = vmatpush1.msra.mxu0 0.0
        %2360 = vmatprep.subr.mxu0 0.0
        %2361 = vmatpush1.msra.mxu0 0.0
        %2362 = vmatprep.subr.mxu0 0.0
        %2363 = vmatpush1.msra.mxu0 0.0
        %2364 = vmatprep.subr.mxu0 0.0
        %2365 = vmatpush1.msra.mxu0 0.0
        %2366 = vmatprep.subr.mxu0 0.0
        %2367 = vmatpush1.msra.mxu0 0.0
        %2368 = vmatprep.subr.mxu0 0.0
        %2369 = vmatpush1.msra.mxu0 0.0
        %2370 = vmatprep.subr.mxu0 0.0
        %2371 = vmatpush1.msra.mxu0 0.0
        %2372 = vmatprep.subr.mxu0 0.0
        %2373 = vmatpush1.msra.mxu0 0.0
        %2374 = vmatprep.subr.mxu0 0.0
        %2375 = vmatpush1.msra.mxu0 0.0
        %2376 = vmatprep.mubr.f32.mxu0 0.0
        %2377 = vmatmul.mubr.f32.gmra.mrb[0].mxu0 %v2310
        %v2378 = vpop.f32.mrb[0].mxu0
        %v2379 = vadd.f32 0.0, %v2378
        %v2380 = vpop.f32.mrb[0].mxu0
        %2381 = vdwg.mxu0
        %v2382 = vmul.f32 %v2379, %v1736
        %v2383 = vmul.f32 %v2308, %v2308
        %v2384 = vsub.f32 %v2382, %v2383
        %v2385 = vmax.f32 %v2384, 0.0
        %v2386 = vlaneseq
        %v2387 = vshrl.u32 %v2386, 7
        %v2388 = vsub.s32 0, %v2387
        %v2389 = vrot.slane %v2308, %v2388
        %v2390 = vsub.f32 %v2215, %v2389
        %v2391 = vadd.f32 %v2385, 1e-05
        %v2392 = vrsqrt.pop %v2391
        %v2393 = vlaneseq
        %v2394 = vshrl.u32 %v2393, 7
        %v2395 = vsub.s32 0, %v2394
        %v2396 = vrot.slane %v2392, %v2395
        %v2397 = vmul.f32 %v2390, %v2396
        %v2399 = vlaneseq
        %v2400 = vshrl.u32 %v2399, 7
        %v2401 = vsub.s32 0, %v2400
        %v2402 = vrot.slane %v2217, %v2401
        %v2404 = vmul.f32 %v2397, %v2402
        %v2406 = vlaneseq
        %v2407 = vshrl.u32 %v2406, 7
        %v2408 = vsub.s32 0, %v2407
        %v2409 = vrot.slane %v2219, %v2408
        %v2411 = vadd.f32 %v2404, %v2409
        %v2412 = vmax.f32 %v2411, 0.0
        %s2413 = scalar_lea.vmem %s19, 48
        %v2414 = vld [vmem:[%s2413] sm:$0xf]
        %v2415 = vld [vmem:[%s2413 + $0x4] sm:$0xf]
        %v2416 = vld [vmem:[%s2413 + $0x8] sm:$0xf]
        %v2417 = vld [vmem:[%s2413 + $0xc] sm:$0xf]
        %v2418 = vld [vmem:[%s2413 + $0x10] sm:$0xf]
        %v2419 = vld [vmem:[%s2413 + $0x14] sm:$0xf]
        %v2420 = vld [vmem:[%s2413 + $0x18] sm:$0xf]
        %v2421 = vld [vmem:[%s2413 + $0x1c] sm:$0xf]
        %v2422 = vld [vmem:[%s2413 + $0x20] sm:$0xf]
        %v2423 = vld [vmem:[%s2413 + $0x24] sm:$0xf]
        %v2424 = vld [vmem:[%s2413 + $0x28] sm:$0xf]
        %v2425 = vld [vmem:[%s2413 + $0x2c] sm:$0xf]
        %v2426 = vpack.c.bf16 %v2412, %v2412
        %v2428 = vshrl.u32 %v2426, 16
        %v2430 = vrot.slane %v2428, 7
        %v2431 = vshll.u32 %v2426, 16
        %v2433 = vor.u32 %v2430, %v2431
        %v2435 = vsel %vm1865, 0, %v2433
        %v2436 = vsel %vm1869, %v2435, 0
        %v2438 = vshrl.u32 %v2436, 16
        %v2440 = vshll.u32 %v2436, 16
        %v2442 = vrot.slane %v2440, 1
        %v2443 = vor.u32 %v2438, %v2442
        %2444 = vrot.lane.b32.xlu0 %v2443, 32
        %v2445 = vpop.permute.xlu0 %2444
        %v2447 = vrot.slane %v2436, 1
        %2448 = vrot.lane.b32.xlu0 %v2447, 64
        %v2449 = vpop.permute.xlu0 %2448
        %v2451 = vsel %vm1323, %v2436, %v2445
        %v2453 = vsel %vm1329, %v2451, %v2449
        %v2466 = vunpack.c.l.b16 %v2414
        %v2467 = vunpack.c.l.b16 %v2415
        %v2468 = vunpack.c.l.b16 %v2416
        %v2469 = vunpack.c.l.b16 %v2417
        %v2470 = vunpack.c.l.b16 %v2418
        %v2471 = vunpack.c.l.b16 %v2419
        %v2472 = vunpack.c.l.b16 %v2420
        %v2473 = vunpack.c.l.b16 %v2421
        %v2474 = vunpack.c.l.b16 %v2422
        %v2475 = vunpack.c.l.b16 %v2423
        %v2476 = vunpack.c.l.b16 %v2424
        %v2477 = vunpack.c.l.b16 %v2425
        %v2478 = vpack.c.b16 %v2467, %v2466
        %v2479 = vpack.c.b16 %v2469, %v2468
        %v2480 = vpack.c.b16 %v2471, %v2470
        %v2481 = vpack.c.b16 %v2473, %v2472
        %v2482 = vpack.c.b16 %v2475, %v2474
        %v2483 = vpack.c.b16 %v2477, %v2476
        %v2490 = vsel %vm1335, %v2453, 0
        %2492 = vmatprep.subr.bf16.mxu0 0
        %2493 = vmatpush1.bf16.msra.mxu0 %v2478
        %2494 = vmatprep.subr.bf16.mxu0 0
        %2495 = vmatpush1.bf16.msra.mxu0 %v2479
        %2496 = vmatprep.subr.bf16.mxu0 0
        %2497 = vmatpush1.bf16.msra.mxu0 %v2480
        %2498 = vmatprep.subr.bf16.mxu0 0
        %2499 = vmatpush1.bf16.msra.mxu0 %v2481
        %2500 = vmatprep.subr.bf16.mxu0 0
        %2501 = vmatpush1.bf16.msra.mxu0 %v2482
        %2502 = vmatprep.subr.bf16.mxu0 0
        %2503 = vmatpush1.bf16.msra.mxu0 %v2483
        %2504 = vmatprep.subr.bf16.mxu0 0
        %2505 = vmatpush1.bf16.msra.mxu0 0
        %2506 = vmatprep.subr.bf16.mxu0 0
        %2507 = vmatpush1.bf16.msra.mxu0 0
        %2508 = vmatprep.subr.bf16.mxu0 0
        %2509 = vmatpush1.bf16.msra.mxu0 0
        %2510 = vmatprep.subr.bf16.mxu0 0
        %2511 = vmatpush1.bf16.msra.mxu0 0
        %2512 = vmatprep.subr.bf16.mxu0 0
        %2513 = vmatpush1.bf16.msra.mxu0 0
        %2514 = vmatprep.subr.bf16.mxu0 0
        %2515 = vmatpush1.bf16.msra.mxu0 0
        %2516 = vmatprep.subr.bf16.mxu0 0
        %2517 = vmatpush1.bf16.msra.mxu0 0
        %2518 = vmatprep.subr.bf16.mxu0 0
        %2519 = vmatpush1.bf16.msra.mxu0 0
        %2520 = vmatprep.subr.bf16.mxu0 0
        %2521 = vmatpush1.bf16.msra.mxu0 0
        %2522 = vmatprep.subr.bf16.mxu0 0
        %2523 = vmatpush1.bf16.msra.mxu0 0
        %2524 = vmatprep.mubr.bf16.mxu0 0
        %2525 = vmatmul.mubr.bf16.gmra.mrb[0].mxu0 %v2490
        %v2526 = vpop.f32.mrb[0].mxu0
        %v2527 = vadd.f32 0.0, %v2526
        %v2528 = vpop.f32.mrb[0].mxu0
        %v2529 = vpop.f32.mrb[0].mxu0
        %v2530 = vpop.f32.mrb[0].mxu0
        %2531 = vdwg.mxu0
        %s2532 = scalar_lea.vmem %s21, 1
        %v2533 = vld [vmem:[%s2532] sm:$0x1]
        %s2534 = scalar_lea.vmem %s23, 1
        %v2535 = vld [vmem:[%s2534] sm:$0x1]
        %v2536 = vsel %vm1968, %v2527, 0.0
        %v2537 = vrot.slane %v2536, 4
        %v2538 = vadd.f32 %v2536, %v2537
        %v2539 = vrot.slane %v2538, 2
        %v2540 = vadd.f32 %v2538, %v2539
        %v2541 = vrot.slane %v2540, 1
        %v2542 = vadd.f32 %v2540, %v2541
        %v2543 = vmul.f32 %v2527, %v2527
        %v2544 = vsel %vm1968, %v2543, 0.0
        %v2545 = vrot.slane %v2544, 4
        %v2546 = vadd.f32 %v2544, %v2545
        %v2547 = vrot.slane %v2546, 2
        %v2548 = vadd.f32 %v2546, %v2547
        %v2549 = vrot.slane %v2548, 1
        %v2550 = vadd.f32 %v2548, %v2549
        %v2552 = vsel %vm1320, %v2542, 0
        %2554 = vmatprep.subr.mxu0 0.0
        %2555 = vmatpush1.msra.mxu0 %v1643
        %2556 = vmatprep.subr.mxu0 0.0
        %2557 = vmatpush1.msra.mxu0 %v1644
        %2558 = vmatprep.subr.mxu0 0.0
        %2559 = vmatpush1.msra.mxu0 0.0
        %2560 = vmatprep.subr.mxu0 0.0
        %2561 = vmatpush1.msra.mxu0 0.0
        %2562 = vmatprep.subr.mxu0 0.0
        %2563 = vmatpush1.msra.mxu0 0.0
        %2564 = vmatprep.subr.mxu0 0.0
        %2565 = vmatpush1.msra.mxu0 0.0
        %2566 = vmatprep.subr.mxu0 0.0
        %2567 = vmatpush1.msra.mxu0 0.0
        %2568 = vmatprep.subr.mxu0 0.0
        %2569 = vmatpush1.msra.mxu0 0.0
        %2570 = vmatprep.subr.mxu0 0.0
        %2571 = vmatpush1.msra.mxu0 0.0
        %2572 = vmatprep.subr.mxu0 0.0
        %2573 = vmatpush1.msra.mxu0 0.0
        %2574 = vmatprep.subr.mxu0 0.0
        %2575 = vmatpush1.msra.mxu0 0.0
        %2576 = vmatprep.subr.mxu0 0.0
        %2577 = vmatpush1.msra.mxu0 0.0
        %2578 = vmatprep.subr.mxu0 0.0
        %2579 = vmatpush1.msra.mxu0 0.0
        %2580 = vmatprep.subr.mxu0 0.0
        %2581 = vmatpush1.msra.mxu0 0.0
        %2582 = vmatprep.subr.mxu0 0.0
        %2583 = vmatpush1.msra.mxu0 0.0
        %2584 = vmatprep.subr.mxu0 0.0
        %2585 = vmatpush1.msra.mxu0 0.0
        %2586 = vmatprep.subr.mxu0 0.0
        %2587 = vmatpush1.msra.mxu0 0.0
        %2588 = vmatprep.subr.mxu0 0.0
        %2589 = vmatpush1.msra.mxu0 0.0
        %2590 = vmatprep.subr.mxu0 0.0
        %2591 = vmatpush1.msra.mxu0 0.0
        %2592 = vmatprep.subr.mxu0 0.0
        %2593 = vmatpush1.msra.mxu0 0.0
        %2594 = vmatprep.subr.mxu0 0.0
        %2595 = vmatpush1.msra.mxu0 0.0
        %2596 = vmatprep.subr.mxu0 0.0
        %2597 = vmatpush1.msra.mxu0 0.0
        %2598 = vmatprep.subr.mxu0 0.0
        %2599 = vmatpush1.msra.mxu0 0.0
        %2600 = vmatprep.subr.mxu0 0.0
        %2601 = vmatpush1.msra.mxu0 0.0
        %2602 = vmatprep.subr.mxu0 0.0
        %2603 = vmatpush1.msra.mxu0 0.0
        %2604 = vmatprep.subr.mxu0 0.0
        %2605 = vmatpush1.msra.mxu0 0.0
        %2606 = vmatprep.subr.mxu0 0.0
        %2607 = vmatpush1.msra.mxu0 0.0
        %2608 = vmatprep.subr.mxu0 0.0
        %2609 = vmatpush1.msra.mxu0 0.0
        %2610 = vmatprep.subr.mxu0 0.0
        %2611 = vmatpush1.msra.mxu0 0.0
        %2612 = vmatprep.subr.mxu0 0.0
        %2613 = vmatpush1.msra.mxu0 0.0
        %2614 = vmatprep.subr.mxu0 0.0
        %2615 = vmatpush1.msra.mxu0 0.0
        %2616 = vmatprep.subr.mxu0 0.0
        %2617 = vmatpush1.msra.mxu0 0.0
        %2618 = vmatprep.mubr.f32.mxu0 0.0
        %2619 = vmatmul.mubr.f32.gmra.mrb[0].mxu0 %v2552
        %v2620 = vpop.f32.mrb[0].mxu0
        %v2621 = vadd.f32 0.0, %v2620
        %v2622 = vpop.f32.mrb[0].mxu0
        %2623 = vdwg.mxu0
        %v2624 = vmul.f32 %v2621, %v2057
        %v2626 = vsel %vm1320, %v2550, 0
        %2628 = vmatprep.subr.mxu0 0.0
        %2629 = vmatpush1.msra.mxu0 %v1643
        %2630 = vmatprep.subr.mxu0 0.0
        %2631 = vmatpush1.msra.mxu0 %v1644
        %2632 = vmatprep.subr.mxu0 0.0
        %2633 = vmatpush1.msra.mxu0 0.0
        %2634 = vmatprep.subr.mxu0 0.0
        %2635 = vmatpush1.msra.mxu0 0.0
        %2636 = vmatprep.subr.mxu0 0.0
        %2637 = vmatpush1.msra.mxu0 0.0
        %2638 = vmatprep.subr.mxu0 0.0
        %2639 = vmatpush1.msra.mxu0 0.0
        %2640 = vmatprep.subr.mxu0 0.0
        %2641 = vmatpush1.msra.mxu0 0.0
        %2642 = vmatprep.subr.mxu0 0.0
        %2643 = vmatpush1.msra.mxu0 0.0
        %2644 = vmatprep.subr.mxu0 0.0
        %2645 = vmatpush1.msra.mxu0 0.0
        %2646 = vmatprep.subr.mxu0 0.0
        %2647 = vmatpush1.msra.mxu0 0.0
        %2648 = vmatprep.subr.mxu0 0.0
        %2649 = vmatpush1.msra.mxu0 0.0
        %2650 = vmatprep.subr.mxu0 0.0
        %2651 = vmatpush1.msra.mxu0 0.0
        %2652 = vmatprep.subr.mxu0 0.0
        %2653 = vmatpush1.msra.mxu0 0.0
        %2654 = vmatprep.subr.mxu0 0.0
        %2655 = vmatpush1.msra.mxu0 0.0
        %2656 = vmatprep.subr.mxu0 0.0
        %2657 = vmatpush1.msra.mxu0 0.0
        %2658 = vmatprep.subr.mxu0 0.0
        %2659 = vmatpush1.msra.mxu0 0.0
        %2660 = vmatprep.subr.mxu0 0.0
        %2661 = vmatpush1.msra.mxu0 0.0
        %2662 = vmatprep.subr.mxu0 0.0
        %2663 = vmatpush1.msra.mxu0 0.0
        %2664 = vmatprep.subr.mxu0 0.0
        %2665 = vmatpush1.msra.mxu0 0.0
        %2666 = vmatprep.subr.mxu0 0.0
        %2667 = vmatpush1.msra.mxu0 0.0
        %2668 = vmatprep.subr.mxu0 0.0
        %2669 = vmatpush1.msra.mxu0 0.0
        %2670 = vmatprep.subr.mxu0 0.0
        %2671 = vmatpush1.msra.mxu0 0.0
        %2672 = vmatprep.subr.mxu0 0.0
        %2673 = vmatpush1.msra.mxu0 0.0
        %2674 = vmatprep.subr.mxu0 0.0
        %2675 = vmatpush1.msra.mxu0 0.0
        %2676 = vmatprep.subr.mxu0 0.0
        %2677 = vmatpush1.msra.mxu0 0.0
        %2678 = vmatprep.subr.mxu0 0.0
        %2679 = vmatpush1.msra.mxu0 0.0
        %2680 = vmatprep.subr.mxu0 0.0
        %2681 = vmatpush1.msra.mxu0 0.0
        %2682 = vmatprep.subr.mxu0 0.0
        %2683 = vmatpush1.msra.mxu0 0.0
        %2684 = vmatprep.subr.mxu0 0.0
        %2685 = vmatpush1.msra.mxu0 0.0
        %2686 = vmatprep.subr.mxu0 0.0
        %2687 = vmatpush1.msra.mxu0 0.0
        %2688 = vmatprep.subr.mxu0 0.0
        %2689 = vmatpush1.msra.mxu0 0.0
        %2690 = vmatprep.subr.mxu0 0.0
        %2691 = vmatpush1.msra.mxu0 0.0
        %2692 = vmatprep.mubr.f32.mxu0 0.0
        %2693 = vmatmul.mubr.f32.gmra.mrb[0].mxu0 %v2626
        %v2694 = vpop.f32.mrb[0].mxu0
        %v2695 = vadd.f32 0.0, %v2694
        %v2696 = vpop.f32.mrb[0].mxu0
        %2697 = vdwg.mxu0
        %v2698 = vmul.f32 %v2695, %v2057
        %v2699 = vmul.f32 %v2624, %v2624
        %v2700 = vsub.f32 %v2698, %v2699
        %v2701 = vmax.f32 %v2700, 0.0
        %v2702 = vlaneseq
        %v2703 = vshrl.u32 %v2702, 7
        %v2704 = vsub.s32 0, %v2703
        %v2705 = vrot.slane %v2624, %v2704
        %v2706 = vsub.f32 %v2527, %v2705
        %v2707 = vadd.f32 %v2701, 1e-05
        %v2708 = vrsqrt.pop %v2707
        %v2709 = vlaneseq
        %v2710 = vshrl.u32 %v2709, 7
        %v2711 = vsub.s32 0, %v2710
        %v2712 = vrot.slane %v2708, %v2711
        %v2713 = vmul.f32 %v2706, %v2712
        %v2715 = vlaneseq
        %v2716 = vshrl.u32 %v2715, 7
        %v2717 = vsub.s32 0, %v2716
        %v2718 = vrot.slane %v2533, %v2717
        %v2720 = vmul.f32 %v2713, %v2718
        %v2722 = vlaneseq
        %v2723 = vshrl.u32 %v2722, 7
        %v2724 = vsub.s32 0, %v2723
        %v2725 = vrot.slane %v2535, %v2724
        %v2727 = vadd.f32 %v2720, %v2725
        %v2728 = vmax.f32 %v2727, 0.0
        %v2729 = vpack.c.bf16 %v2728, %v2728
        %s2730 = scalar_lea.vmem %s25, 8
        %v2731 = vld [vmem:[%s2730] sm:$0xf]
        %v2732 = vld [vmem:[%s2730 + $0x4] sm:$0xf]
        %v2735 = vunpack.c.l.b16 %v2731
        %v2736 = vunpack.c.l.b16 %v2732
        %v2737 = vpack.c.b16 %v2736, %v2735
        %v2740 = vsel %vm1320, %v2729, 0
        %2742 = vmatprep.subr.bf16.mxu0 0
        %2743 = vmatpush1.bf16.msra.mxu0 %v2737
        %2744 = vmatprep.subr.bf16.mxu0 0
        %2745 = vmatpush1.bf16.msra.mxu0 0
        %2746 = vmatprep.subr.bf16.mxu0 0
        %2747 = vmatpush1.bf16.msra.mxu0 0
        %2748 = vmatprep.subr.bf16.mxu0 0
        %2749 = vmatpush1.bf16.msra.mxu0 0
        %2750 = vmatprep.subr.bf16.mxu0 0
        %2751 = vmatpush1.bf16.msra.mxu0 0
        %2752 = vmatprep.subr.bf16.mxu0 0
        %2753 = vmatpush1.bf16.msra.mxu0 0
        %2754 = vmatprep.subr.bf16.mxu0 0
        %2755 = vmatpush1.bf16.msra.mxu0 0
        %2756 = vmatprep.subr.bf16.mxu0 0
        %2757 = vmatpush1.bf16.msra.mxu0 0
        %2758 = vmatprep.subr.bf16.mxu0 0
        %2759 = vmatpush1.bf16.msra.mxu0 0
        %2760 = vmatprep.subr.bf16.mxu0 0
        %2761 = vmatpush1.bf16.msra.mxu0 0
        %2762 = vmatprep.subr.bf16.mxu0 0
        %2763 = vmatpush1.bf16.msra.mxu0 0
        %2764 = vmatprep.subr.bf16.mxu0 0
        %2765 = vmatpush1.bf16.msra.mxu0 0
        %2766 = vmatprep.subr.bf16.mxu0 0
        %2767 = vmatpush1.bf16.msra.mxu0 0
        %2768 = vmatprep.subr.bf16.mxu0 0
        %2769 = vmatpush1.bf16.msra.mxu0 0
        %2770 = vmatprep.subr.bf16.mxu0 0
        %2771 = vmatpush1.bf16.msra.mxu0 0
        %2772 = vmatprep.subr.bf16.mxu0 0
        %2773 = vmatpush1.bf16.msra.mxu0 0
        %2774 = vmatprep.mubr.bf16.mxu0 0
        %2775 = vmatmul.mubr.bf16.gmra.mrb[0].mxu0 %v2740
        %v2776 = vpop.f32.mrb[0].mxu0
        %v2777 = vadd.f32 0.0, %v2776
        %v2778 = vpop.f32.mrb[0].mxu0
        %v2779 = vpop.f32.mrb[0].mxu0
        %v2780 = vpop.f32.mrb[0].mxu0
        %2781 = vdwg.mxu0
        %v2782 = vadd.f32 %v2215, %v2777
        %v2783 = vpack.c.bf16 %v2782, %v2782
        %v2784 = vld [vmem:[%s31] sm:$0xf]
        %v2785 = vld [vmem:[%s31 + $0x4] sm:$0xf]
        %v2786 = vld [vmem:[%s31 + $0x8] sm:$0xf]
        %v2787 = vld [vmem:[%s31 + $0xc] sm:$0xf]
        %v2788 = vld [vmem:[%s33] sm:$0x1]
        %v2790 = vlaneseq
        %v2791 = vshrl.u32 %v2790, 7
        %v2792 = vsub.s32 0, %v2791
        %v2793 = vrot.slane %v2788, %v2792
        %v2799 = vunpack.c.l.b16 %v2784
        %v2800 = vunpack.c.l.b16 %v2785
        %v2801 = vunpack.c.l.b16 %v2786
        %v2802 = vunpack.c.l.b16 %v2787
        %v2803 = vpack.c.b16 %v2800, %v2799
        %v2804 = vpack.c.b16 %v2802, %v2801
        %v2808 = vsel %vm1323, %v2783, 0
        %2810 = vmatprep.subr.bf16.mxu0 0
        %2811 = vmatpush1.bf16.msra.mxu0 %v2803
        %2812 = vmatprep.subr.bf16.mxu0 0
        %2813 = vmatpush1.bf16.msra.mxu0 %v2804
        %2814 = vmatprep.subr.bf16.mxu0 0
        %2815 = vmatpush1.bf16.msra.mxu0 0
        %2816 = vmatprep.subr.bf16.mxu0 0
        %2817 = vmatpush1.bf16.msra.mxu0 0
        %2818 = vmatprep.subr.bf16.mxu0 0
        %2819 = vmatpush1.bf16.msra.mxu0 0
        %2820 = vmatprep.subr.bf16.mxu0 0
        %2821 = vmatpush1.bf16.msra.mxu0 0
        %2822 = vmatprep.subr.bf16.mxu0 0
        %2823 = vmatpush1.bf16.msra.mxu0 0
        %2824 = vmatprep.subr.bf16.mxu0 0
        %2825 = vmatpush1.bf16.msra.mxu0 0
        %2826 = vmatprep.subr.bf16.mxu0 0
        %2827 = vmatpush1.bf16.msra.mxu0 0
        %2828 = vmatprep.subr.bf16.mxu0 0
        %2829 = vmatpush1.bf16.msra.mxu0 0
        %2830 = vmatprep.subr.bf16.mxu0 0
        %2831 = vmatpush1.bf16.msra.mxu0 0
        %2832 = vmatprep.subr.bf16.mxu0 0
        %2833 = vmatpush1.bf16.msra.mxu0 0
        %2834 = vmatprep.subr.bf16.mxu0 0
        %2835 = vmatpush1.bf16.msra.mxu0 0
        %2836 = vmatprep.subr.bf16.mxu0 0
        %2837 = vmatpush1.bf16.msra.mxu0 0
        %2838 = vmatprep.subr.bf16.mxu0 0
        %2839 = vmatpush1.bf16.msra.mxu0 0
        %2840 = vmatprep.subr.bf16.mxu0 0
        %2841 = vmatpush1.bf16.msra.mxu0 0
        %2842 = vmatprep.mubr.bf16.mxu0 0
        %2843 = vmatmul.mubr.bf16.gmra.mrb[0].mxu0 %v2808
        %v2844 = vpop.f32.mrb[0].mxu0
        %v2845 = vadd.f32 %v2793, %v2844
        %v2846 = vpop.f32.mrb[0].mxu0
        %v2847 = vpop.f32.mrb[0].mxu0
        %v2848 = vpop.f32.mrb[0].mxu0
        %2849 = vdwg.mxu0
        %v2850 = vld [vmem:[%s35] sm:$0xff]
        %v2851 = vld [vmem:[%s35 + $0x8] sm:$0xff]
        %v2852 = vld [vmem:[%s35 + $0x10] sm:$0xff]
        %v2853 = vld [vmem:[%s35 + $0x18] sm:$0xff]
        %v2854 = vmul.f32 %v2845, %v2845
        %v2855 = vsel %vm1968, %v2854, 0.0
        %2856 = vadd.xlane.f32.xlu0 %v2855
        %v2857 = vpop.xlane.xlu0 %2856
        %v2859 = vsel %vm1320, %v2845, 0
        %v2862 = vsel %vm1320, %v2850, 0
        %v2865 = vsel %vm1320, %v2851, 0
        %v2868 = vsel %vm1320, %v2852, 0
        %v2871 = vsel %vm1320, %v2853, 0
        %2873 = vmatprep.subr.mxu0 0.0
        %2874 = vmatpush1.xpose.msra.mxu0 %v2862
        %2875 = vmatprep.subr.mxu0 0.0
        %2876 = vmatpush1.xpose.msra.mxu0 %v2865
        %2877 = vmatprep.subr.mxu0 0.0
        %2878 = vmatpush1.xpose.msra.mxu0 %v2868
        %2879 = vmatprep.subr.mxu0 0.0
        %2880 = vmatpush1.xpose.msra.mxu0 %v2871
        %2881 = vmatprep.subr.mxu0 0.0
        %2882 = vmatpush1.xpose.msra.mxu0 0.0
        %2883 = vmatprep.subr.mxu0 0.0
        %2884 = vmatpush1.xpose.msra.mxu0 0.0
        %2885 = vmatprep.subr.mxu0 0.0
        %2886 = vmatpush1.xpose.msra.mxu0 0.0
        %2887 = vmatprep.subr.mxu0 0.0
        %2888 = vmatpush1.xpose.msra.mxu0 0.0
        %2889 = vmatprep.subr.mxu0 0.0
        %2890 = vmatpush1.xpose.msra.mxu0 0.0
        %2891 = vmatprep.subr.mxu0 0.0
        %2892 = vmatpush1.xpose.msra.mxu0 0.0
        %2893 = vmatprep.subr.mxu0 0.0
        %2894 = vmatpush1.xpose.msra.mxu0 0.0
        %2895 = vmatprep.subr.mxu0 0.0
        %2896 = vmatpush1.xpose.msra.mxu0 0.0
        %2897 = vmatprep.subr.mxu0 0.0
        %2898 = vmatpush1.xpose.msra.mxu0 0.0
        %2899 = vmatprep.subr.mxu0 0.0
        %2900 = vmatpush1.xpose.msra.mxu0 0.0
        %2901 = vmatprep.subr.mxu0 0.0
        %2902 = vmatpush1.xpose.msra.mxu0 0.0
        %2903 = vmatprep.subr.mxu0 0.0
        %2904 = vmatpush1.xpose.msra.mxu0 0.0
        %2905 = vmatprep.subr.mxu0 0.0
        %2906 = vmatpush1.xpose.msra.mxu0 0.0
        %2907 = vmatprep.subr.mxu0 0.0
        %2908 = vmatpush1.xpose.msra.mxu0 0.0
        %2909 = vmatprep.subr.mxu0 0.0
        %2910 = vmatpush1.xpose.msra.mxu0 0.0
        %2911 = vmatprep.subr.mxu0 0.0
        %2912 = vmatpush1.xpose.msra.mxu0 0.0
        %2913 = vmatprep.subr.mxu0 0.0
        %2914 = vmatpush1.xpose.msra.mxu0 0.0
        %2915 = vmatprep.subr.mxu0 0.0
        %2916 = vmatpush1.xpose.msra.mxu0 0.0
        %2917 = vmatprep.subr.mxu0 0.0
        %2918 = vmatpush1.xpose.msra.mxu0 0.0
        %2919 = vmatprep.subr.mxu0 0.0
        %2920 = vmatpush1.xpose.msra.mxu0 0.0
        %2921 = vmatprep.subr.mxu0 0.0
        %2922 = vmatpush1.xpose.msra.mxu0 0.0
        %2923 = vmatprep.subr.mxu0 0.0
        %2924 = vmatpush1.xpose.msra.mxu0 0.0
        %2925 = vmatprep.subr.mxu0 0.0
        %2926 = vmatpush1.xpose.msra.mxu0 0.0
        %2927 = vmatprep.subr.mxu0 0.0
        %2928 = vmatpush1.xpose.msra.mxu0 0.0
        %2929 = vmatprep.subr.mxu0 0.0
        %2930 = vmatpush1.xpose.msra.mxu0 0.0
        %2931 = vmatprep.subr.mxu0 0.0
        %2932 = vmatpush1.xpose.msra.mxu0 0.0
        %2933 = vmatprep.subr.mxu0 0.0
        %2934 = vmatpush1.xpose.msra.mxu0 0.0
        %2935 = vmatprep.subr.mxu0 0.0
        %2936 = vmatpush1.xpose.msra.mxu0 0.0
        %2937 = vmatprep.mubr.f32.mxu0 0.0
        %2938 = vmatmul.mubr.f32.gmra.mrb[0].mxu0 %v2859
        %v2939 = vpop.f32.mrb[0].mxu0
        %v2940 = vadd.f32 0.0, %v2939
        %v2941 = vpop.f32.mrb[0].mxu0
        %2942 = vdwg.mxu0
        %v2943 = vld [vmem:[%s37] sm:$0x1]
        %v2945 = vlaneseq
        %v2946 = vshrl.u32 %v2945, 7
        %v2947 = vsub.s32 0, %v2946
        %v2948 = vrot.slane %v2943, %v2947
        %v2950 = vadd.f32 %v2857, %v2948
        %v2951 = vmul.f32 %v2940, 2.0
        %v2952 = vsub.f32 %v2950, %v2951
        %v2953 = vsel %vm1647, %v2952, inf
        %2954 = vmin.xlane.f32.xlu0 %v2953
        %v2955 = vpop.xlane.xlu0 %2954
        %v2956 = vlaneseq
        %v2957 = vand.u32 %v2956, 127
        %v2958 = vcvt.s32.f32 %v2957
        %vm2959 = vcmp.eq.f32.partialorder %v2952, %v2955
        %v2960 = vsel %vm2959, %v2958, 32.0
        %v2961 = vsel %vm1647, %v2960, inf
        %2962 = vmin.xlane.f32.xlu0 %v2961
        %v2963 = vpop.xlane.xlu0 %2962
        %vm2964 = vcmp.eq.f32.partialorder %v2958, %v2963
        %v2965 = vsel %vm2964, 1, 0
        %v2966 = vcvt.s32.f32 %v2965
        %v2968 = vsel %vm1323, %v2966, 0
        %2970 = vmatprep.subr.mxu0 0.0
        %2971 = vmatpush1.msra.mxu0 %v2850
        %2972 = vmatprep.subr.mxu0 0.0
        %2973 = vmatpush1.msra.mxu0 %v2851
        %2974 = vmatprep.subr.mxu0 0.0
        %2975 = vmatpush1.msra.mxu0 %v2852
        %2976 = vmatprep.subr.mxu0 0.0
        %2977 = vmatpush1.msra.mxu0 %v2853
        %2978 = vmatprep.subr.mxu0 0.0
        %2979 = vmatpush1.msra.mxu0 0.0
        %2980 = vmatprep.subr.mxu0 0.0
        %2981 = vmatpush1.msra.mxu0 0.0
        %2982 = vmatprep.subr.mxu0 0.0
        %2983 = vmatpush1.msra.mxu0 0.0
        %2984 = vmatprep.subr.mxu0 0.0
        %2985 = vmatpush1.msra.mxu0 0.0
        %2986 = vmatprep.subr.mxu0 0.0
        %2987 = vmatpush1.msra.mxu0 0.0
        %2988 = vmatprep.subr.mxu0 0.0
        %2989 = vmatpush1.msra.mxu0 0.0
        %2990 = vmatprep.subr.mxu0 0.0
        %2991 = vmatpush1.msra.mxu0 0.0
        %2992 = vmatprep.subr.mxu0 0.0
        %2993 = vmatpush1.msra.mxu0 0.0
        %2994 = vmatprep.subr.mxu0 0.0
        %2995 = vmatpush1.msra.mxu0 0.0
        %2996 = vmatprep.subr.mxu0 0.0
        %2997 = vmatpush1.msra.mxu0 0.0
        %2998 = vmatprep.subr.mxu0 0.0
        %2999 = vmatpush1.msra.mxu0 0.0
        %3000 = vmatprep.subr.mxu0 0.0
        %3001 = vmatpush1.msra.mxu0 0.0
        %3002 = vmatprep.subr.mxu0 0.0
        %3003 = vmatpush1.msra.mxu0 0.0
        %3004 = vmatprep.subr.mxu0 0.0
        %3005 = vmatpush1.msra.mxu0 0.0
        %3006 = vmatprep.subr.mxu0 0.0
        %3007 = vmatpush1.msra.mxu0 0.0
        %3008 = vmatprep.subr.mxu0 0.0
        %3009 = vmatpush1.msra.mxu0 0.0
        %3010 = vmatprep.subr.mxu0 0.0
        %3011 = vmatpush1.msra.mxu0 0.0
        %3012 = vmatprep.subr.mxu0 0.0
        %3013 = vmatpush1.msra.mxu0 0.0
        %3014 = vmatprep.subr.mxu0 0.0
        %3015 = vmatpush1.msra.mxu0 0.0
        %3016 = vmatprep.subr.mxu0 0.0
        %3017 = vmatpush1.msra.mxu0 0.0
        %3018 = vmatprep.subr.mxu0 0.0
        %3019 = vmatpush1.msra.mxu0 0.0
        %3020 = vmatprep.subr.mxu0 0.0
        %3021 = vmatpush1.msra.mxu0 0.0
        %3022 = vmatprep.subr.mxu0 0.0
        %3023 = vmatpush1.msra.mxu0 0.0
        %3024 = vmatprep.subr.mxu0 0.0
        %3025 = vmatpush1.msra.mxu0 0.0
        %3026 = vmatprep.subr.mxu0 0.0
        %3027 = vmatpush1.msra.mxu0 0.0
        %3028 = vmatprep.subr.mxu0 0.0
        %3029 = vmatpush1.msra.mxu0 0.0
        %3030 = vmatprep.subr.mxu0 0.0
        %3031 = vmatpush1.msra.mxu0 0.0
        %3032 = vmatprep.subr.mxu0 0.0
        %3033 = vmatpush1.msra.mxu0 0.0
        %3034 = vmatprep.mubr.f32.mxu0 0.0
        %3035 = vmatmul.mubr.f32.gmra.mrb[0].mxu0 %v2968
        %v3036 = vpop.f32.mrb[0].mxu0
        %v3037 = vadd.f32 0.0, %v3036
        %v3038 = vpop.f32.mrb[0].mxu0
        %3039 = vdwg.mxu0
        %v3040 = vsub.f32 %v3037, %v2845
        %v3041 = vmul.f32 %v3040, %v3040
        %v3042 = vsel %vm1968, %v3041, 0.0
        %3043 = vadd.xlane.f32.xlu0 %v3042
        %v3044 = vpop.xlane.xlu0 %3043
        %v3045 = vsel %vm1500, %v3044, 0.0
        %v3046 = vrot.slane %v3045, 4
        %v3047 = vadd.f32 %v3045, %v3046
        %v3048 = vrot.slane %v3047, 2
        %v3049 = vadd.f32 %v3047, %v3048
        %v3050 = vrot.slane %v3049, 1
        %v3051 = vadd.f32 %v3049, %v3050
        %vm3052 = vcmask 0
        %3053 = vst.msk [vmem:[%s1194] sm:$0x1] %vm3052, %v3051
        %v3054 = vsel %vm1647, %v2966, 0.0
        %v3055 = vrot.slane %v3054, 4
        %v3056 = vadd.f32 %v3054, %v3055
        %v3057 = vrot.slane %v3056, 2
        %v3058 = vadd.f32 %v3056, %v3057
        %v3059 = vrot.slane %v3058, 1
        %v3060 = vadd.f32 %v3058, %v3059
        %vm3061 = vcmask 253952
        %3062 = vst.msk [vmem:[%s1197] sm:$0x1] %vm3061, %v3060
        %3063 = vst.msk [vmem:[%s1165] sm:$0xf] %vm1647, %v2966
        %3064 = vxpose.xlu0.b32.start [1/16] %v3037, 128
        %3065 = vxpose.xlu0.b32.cont [2/16] 0.0, 128
        %3066 = vxpose.xlu0.b32.cont [3/16] 0.0, 128
        %3067 = vxpose.xlu0.b32.cont [4/16] 0.0, 128
        %3068 = vxpose.xlu0.b32.cont [5/16] 0.0, 128
        %3069 = vxpose.xlu0.b32.cont [6/16] 0.0, 128
        %3070 = vxpose.xlu0.b32.cont [7/16] 0.0, 128
        %3071 = vxpose.xlu0.b32.cont [8/16] 0.0, 128
        %3072 = vxpose.xlu0.b32.cont [9/16] 0.0, 128
        %3073 = vxpose.xlu0.b32.cont [10/16] 0.0, 128
        %3074 = vxpose.xlu0.b32.cont [11/16] 0.0, 128
        %3075 = vxpose.xlu0.b32.cont [12/16] 0.0, 128
        %3076 = vxpose.xlu0.b32.cont [13/16] 0.0, 128
        %3077 = vxpose.xlu0.b32.cont [14/16] 0.0, 128
        %3078 = vxpose.xlu0.b32.cont [15/16] 0.0, 128
        %3079 = vxpose.xlu0.b32.end [16/16] 0.0, 128
        %v3080 = vpop.trf.xlu0
        %v3081 = vpop.trf.xlu0
        %v3082 = vpop.trf.xlu0
        %v3083 = vpop.trf.xlu0
        %v3084 = vpop.trf.xlu0
        %v3085 = vpop.trf.xlu0
        %v3086 = vpop.trf.xlu0
        %v3087 = vpop.trf.xlu0
        %v3088 = vpop.trf.xlu0
        %v3089 = vpop.trf.xlu0
        %v3090 = vpop.trf.xlu0
        %v3091 = vpop.trf.xlu0
        %v3092 = vpop.trf.xlu0
        %v3093 = vpop.trf.xlu0
        %v3094 = vpop.trf.xlu0
        %v3095 = vpop.trf.xlu0
        %vm3096 = vcmask 31744
        %3097 = vst.msk [vmem:[%s1191] sm:$0xff] %vm3096, %v3080
        %3098 = vst.msk [vmem:[%s1191 + $0x8] sm:$0xff] %vm3096, %v3081
        %v3099 = vsel %vm1968, %v3037, 0.0
        %v3100 = vrot.slane %v3099, 4
        %v3101 = vadd.f32 %v3099, %v3100
        %v3102 = vrot.slane %v3101, 2
        %v3103 = vadd.f32 %v3101, %v3102
        %v3104 = vrot.slane %v3103, 1
        %v3105 = vadd.f32 %v3103, %v3104
        %v3106 = vrcp.pop 4.0
        %v3107 = vmul.f32 %v3105, %v3106
        %v3108 = vld [vmem:[%s55] sm:$0xff]
        %v3109 = vld [vmem:[%s55 + $0x8] sm:$0xff]
        %v3110 = vld [vmem:[%s57] sm:$0x1]
        %v3112 = vsel %vm1320, %v3107, 0
        %3114 = vmatprep.subr.mxu0 0.0
        %3115 = vmatpush1.msra.mxu0 %v3108
        %3116 = vmatprep.subr.mxu0 0.0
        %3117 = vmatpush1.msra.mxu0 %v3109
        %3118 = vmatprep.subr.mxu0 0.0
        %3119 = vmatpush1.msra.mxu0 0.0
        %3120 = vmatprep.subr.mxu0 0.0
        %3121 = vmatpush1.msra.mxu0 0.0
        %3122 = vmatprep.subr.mxu0 0.0
        %3123 = vmatpush1.msra.mxu0 0.0
        %3124 = vmatprep.subr.mxu0 0.0
        %3125 = vmatpush1.msra.mxu0 0.0
        %3126 = vmatprep.subr.mxu0 0.0
        %3127 = vmatpush1.msra.mxu0 0.0
        %3128 = vmatprep.subr.mxu0 0.0
        %3129 = vmatpush1.msra.mxu0 0.0
        %3130 = vmatprep.subr.mxu0 0.0
        %3131 = vmatpush1.msra.mxu0 0.0
        %3132 = vmatprep.subr.mxu0 0.0
        %3133 = vmatpush1.msra.mxu0 0.0
        %3134 = vmatprep.subr.mxu0 0.0
        %3135 = vmatpush1.msra.mxu0 0.0
        %3136 = vmatprep.subr.mxu0 0.0
        %3137 = vmatpush1.msra.mxu0 0.0
        %3138 = vmatprep.subr.mxu0 0.0
        %3139 = vmatpush1.msra.mxu0 0.0
        %3140 = vmatprep.subr.mxu0 0.0
        %3141 = vmatpush1.msra.mxu0 0.0
        %3142 = vmatprep.subr.mxu0 0.0
        %3143 = vmatpush1.msra.mxu0 0.0
        %3144 = vmatprep.subr.mxu0 0.0
        %3145 = vmatpush1.msra.mxu0 0.0
        %3146 = vmatprep.subr.mxu0 0.0
        %3147 = vmatpush1.msra.mxu0 0.0
        %3148 = vmatprep.subr.mxu0 0.0
        %3149 = vmatpush1.msra.mxu0 0.0
        %3150 = vmatprep.subr.mxu0 0.0
        %3151 = vmatpush1.msra.mxu0 0.0
        %3152 = vmatprep.subr.mxu0 0.0
        %3153 = vmatpush1.msra.mxu0 0.0
        %3154 = vmatprep.subr.mxu0 0.0
        %3155 = vmatpush1.msra.mxu0 0.0
        %3156 = vmatprep.subr.mxu0 0.0
        %3157 = vmatpush1.msra.mxu0 0.0
        %3158 = vmatprep.subr.mxu0 0.0
        %3159 = vmatpush1.msra.mxu0 0.0
        %3160 = vmatprep.subr.mxu0 0.0
        %3161 = vmatpush1.msra.mxu0 0.0
        %3162 = vmatprep.subr.mxu0 0.0
        %3163 = vmatpush1.msra.mxu0 0.0
        %3164 = vmatprep.subr.mxu0 0.0
        %3165 = vmatpush1.msra.mxu0 0.0
        %3166 = vmatprep.subr.mxu0 0.0
        %3167 = vmatpush1.msra.mxu0 0.0
        %3168 = vmatprep.subr.mxu0 0.0
        %3169 = vmatpush1.msra.mxu0 0.0
        %3170 = vmatprep.subr.mxu0 0.0
        %3171 = vmatpush1.msra.mxu0 0.0
        %3172 = vmatprep.subr.mxu0 0.0
        %3173 = vmatpush1.msra.mxu0 0.0
        %3174 = vmatprep.subr.mxu0 0.0
        %3175 = vmatpush1.msra.mxu0 0.0
        %3176 = vmatprep.subr.mxu0 0.0
        %3177 = vmatpush1.msra.mxu0 0.0
        %3178 = vmatprep.mubr.f32.mxu0 0.0
        %3179 = vmatmul.mubr.f32.gmra.mrb[0].mxu0 %v3112
        %v3180 = vpop.f32.mrb[0].mxu0
        %v3181 = vadd.f32 %v3110, %v3180
        %v3182 = vpop.f32.mrb[0].mxu0
        %3183 = vdwg.mxu0
        %v3184 = vmax.f32 %v3181, 0.0
        %v3185 = vld [vmem:[%s59] sm:$0xff]
        %v3186 = vld [vmem:[%s59 + $0x8] sm:$0xff]
        %v3187 = vld [vmem:[%s59 + $0x10] sm:$0xff]
        %v3188 = vld [vmem:[%s59 + $0x18] sm:$0xff]
        %v3189 = vld [vmem:[%s59 + $0x20] sm:$0xff]
        %v3190 = vld [vmem:[%s59 + $0x28] sm:$0xff]
        %v3191 = vld [vmem:[%s59 + $0x30] sm:$0xff]
        %v3192 = vld [vmem:[%s59 + $0x38] sm:$0xff]
        %v3193 = vld [vmem:[%s59 + $0x40] sm:$0xff]
        %v3194 = vld [vmem:[%s59 + $0x48] sm:$0xff]
        %v3195 = vld [vmem:[%s59 + $0x50] sm:$0xff]
        %v3196 = vld [vmem:[%s59 + $0x58] sm:$0xff]
        %v3197 = vld [vmem:[%s59 + $0x60] sm:$0xff]
        %v3198 = vld [vmem:[%s59 + $0x68] sm:$0xff]
        %v3199 = vld [vmem:[%s59 + $0x70] sm:$0xff]
        %v3200 = vld [vmem:[%s59 + $0x78] sm:$0xff]
        %v3201 = vld [vmem:[%s61] sm:$0x1]
        %3202 = vmatprep.subr.mxu0 0.0
        %3203 = vmatpush1.msra.mxu0 %v3185
        %3204 = vmatprep.subr.mxu0 0.0
        %3205 = vmatpush1.msra.mxu0 %v3186
        %3206 = vmatprep.subr.mxu0 0.0
        %3207 = vmatpush1.msra.mxu0 %v3187
        %3208 = vmatprep.subr.mxu0 0.0
        %3209 = vmatpush1.msra.mxu0 %v3188
        %3210 = vmatprep.subr.mxu0 0.0
        %3211 = vmatpush1.msra.mxu0 %v3189
        %3212 = vmatprep.subr.mxu0 0.0
        %3213 = vmatpush1.msra.mxu0 %v3190
        %3214 = vmatprep.subr.mxu0 0.0
        %3215 = vmatpush1.msra.mxu0 %v3191
        %3216 = vmatprep.subr.mxu0 0.0
        %3217 = vmatpush1.msra.mxu0 %v3192
        %3218 = vmatprep.subr.mxu0 0.0
        %3219 = vmatpush1.msra.mxu0 %v3193
        %3220 = vmatprep.subr.mxu0 0.0
        %3221 = vmatpush1.msra.mxu0 %v3194
        %3222 = vmatprep.subr.mxu0 0.0
        %3223 = vmatpush1.msra.mxu0 %v3195
        %3224 = vmatprep.subr.mxu0 0.0
        %3225 = vmatpush1.msra.mxu0 %v3196
        %3226 = vmatprep.subr.mxu0 0.0
        %3227 = vmatpush1.msra.mxu0 %v3197
        %3228 = vmatprep.subr.mxu0 0.0
        %3229 = vmatpush1.msra.mxu0 %v3198
        %3230 = vmatprep.subr.mxu0 0.0
        %3231 = vmatpush1.msra.mxu0 %v3199
        %3232 = vmatprep.subr.mxu0 0.0
        %3233 = vmatpush1.msra.mxu0 %v3200
        %3234 = vmatprep.subr.mxu0 0.0
        %3235 = vmatpush1.msra.mxu0 0.0
        %3236 = vmatprep.subr.mxu0 0.0
        %3237 = vmatpush1.msra.mxu0 0.0
        %3238 = vmatprep.subr.mxu0 0.0
        %3239 = vmatpush1.msra.mxu0 0.0
        %3240 = vmatprep.subr.mxu0 0.0
        %3241 = vmatpush1.msra.mxu0 0.0
        %3242 = vmatprep.subr.mxu0 0.0
        %3243 = vmatpush1.msra.mxu0 0.0
        %3244 = vmatprep.subr.mxu0 0.0
        %3245 = vmatpush1.msra.mxu0 0.0
        %3246 = vmatprep.subr.mxu0 0.0
        %3247 = vmatpush1.msra.mxu0 0.0
        %3248 = vmatprep.subr.mxu0 0.0
        %3249 = vmatpush1.msra.mxu0 0.0
        %3250 = vmatprep.subr.mxu0 0.0
        %3251 = vmatpush1.msra.mxu0 0.0
        %3252 = vmatprep.subr.mxu0 0.0
        %3253 = vmatpush1.msra.mxu0 0.0
        %3254 = vmatprep.subr.mxu0 0.0
        %3255 = vmatpush1.msra.mxu0 0.0
        %3256 = vmatprep.subr.mxu0 0.0
        %3257 = vmatpush1.msra.mxu0 0.0
        %3258 = vmatprep.subr.mxu0 0.0
        %3259 = vmatpush1.msra.mxu0 0.0
        %3260 = vmatprep.subr.mxu0 0.0
        %3261 = vmatpush1.msra.mxu0 0.0
        %3262 = vmatprep.subr.mxu0 0.0
        %3263 = vmatpush1.msra.mxu0 0.0
        %3264 = vmatprep.subr.mxu0 0.0
        %3265 = vmatpush1.msra.mxu0 0.0
        %3266 = vmatprep.mubr.f32.mxu0 0.0
        %3267 = vmatmul.mubr.f32.gmra.mrb[0].mxu0 %v3184
        %v3268 = vpop.f32.mrb[0].mxu0
        %v3269 = vadd.f32 %v3201, %v3268
        %v3270 = vpop.f32.mrb[0].mxu0
        %3271 = vdwg.mxu0
        %v3272 = vmax.f32 %v3269, 0.0
        %v3273 = vld [vmem:[%s63] sm:$0xff]
        %v3274 = vld [vmem:[%s63 + $0x8] sm:$0xff]
        %v3275 = vld [vmem:[%s63 + $0x10] sm:$0xff]
        %v3276 = vld [vmem:[%s63 + $0x18] sm:$0xff]
        %v3277 = vld [vmem:[%s63 + $0x20] sm:$0xff]
        %v3278 = vld [vmem:[%s63 + $0x28] sm:$0xff]
        %v3279 = vld [vmem:[%s63 + $0x30] sm:$0xff]
        %v3280 = vld [vmem:[%s63 + $0x38] sm:$0xff]
        %v3281 = vld [vmem:[%s65] sm:$0x1]
        %v3283 = vsel %vm1329, %v3272, 0
        %3285 = vmatprep.subr.mxu0 0.0
        %3286 = vmatpush1.msra.mxu0 %v3273
        %3287 = vmatprep.subr.mxu0 0.0
        %3288 = vmatpush1.msra.mxu0 %v3274
        %3289 = vmatprep.subr.mxu0 0.0
        %3290 = vmatpush1.msra.mxu0 %v3275
        %3291 = vmatprep.subr.mxu0 0.0
        %3292 = vmatpush1.msra.mxu0 %v3276
        %3293 = vmatprep.subr.mxu0 0.0
        %3294 = vmatpush1.msra.mxu0 %v3277
        %3295 = vmatprep.subr.mxu0 0.0
        %3296 = vmatpush1.msra.mxu0 %v3278
        %3297 = vmatprep.subr.mxu0 0.0
        %3298 = vmatpush1.msra.mxu0 %v3279
        %3299 = vmatprep.subr.mxu0 0.0
        %3300 = vmatpush1.msra.mxu0 %v3280
        %3301 = vmatprep.subr.mxu0 0.0
        %3302 = vmatpush1.msra.mxu0 0.0
        %3303 = vmatprep.subr.mxu0 0.0
        %3304 = vmatpush1.msra.mxu0 0.0
        %3305 = vmatprep.subr.mxu0 0.0
        %3306 = vmatpush1.msra.mxu0 0.0
        %3307 = vmatprep.subr.mxu0 0.0
        %3308 = vmatpush1.msra.mxu0 0.0
        %3309 = vmatprep.subr.mxu0 0.0
        %3310 = vmatpush1.msra.mxu0 0.0
        %3311 = vmatprep.subr.mxu0 0.0
        %3312 = vmatpush1.msra.mxu0 0.0
        %3313 = vmatprep.subr.mxu0 0.0
        %3314 = vmatpush1.msra.mxu0 0.0
        %3315 = vmatprep.subr.mxu0 0.0
        %3316 = vmatpush1.msra.mxu0 0.0
        %3317 = vmatprep.subr.mxu0 0.0
        %3318 = vmatpush1.msra.mxu0 0.0
        %3319 = vmatprep.subr.mxu0 0.0
        %3320 = vmatpush1.msra.mxu0 0.0
        %3321 = vmatprep.subr.mxu0 0.0
        %3322 = vmatpush1.msra.mxu0 0.0
        %3323 = vmatprep.subr.mxu0 0.0
        %3324 = vmatpush1.msra.mxu0 0.0
        %3325 = vmatprep.subr.mxu0 0.0
        %3326 = vmatpush1.msra.mxu0 0.0
        %3327 = vmatprep.subr.mxu0 0.0
        %3328 = vmatpush1.msra.mxu0 0.0
        %3329 = vmatprep.subr.mxu0 0.0
        %3330 = vmatpush1.msra.mxu0 0.0
        %3331 = vmatprep.subr.mxu0 0.0
        %3332 = vmatpush1.msra.mxu0 0.0
        %3333 = vmatprep.subr.mxu0 0.0
        %3334 = vmatpush1.msra.mxu0 0.0
        %3335 = vmatprep.subr.mxu0 0.0
        %3336 = vmatpush1.msra.mxu0 0.0
        %3337 = vmatprep.subr.mxu0 0.0
        %3338 = vmatpush1.msra.mxu0 0.0
        %3339 = vmatprep.subr.mxu0 0.0
        %3340 = vmatpush1.msra.mxu0 0.0
        %3341 = vmatprep.subr.mxu0 0.0
        %3342 = vmatpush1.msra.mxu0 0.0
        %3343 = vmatprep.subr.mxu0 0.0
        %3344 = vmatpush1.msra.mxu0 0.0
        %3345 = vmatprep.subr.mxu0 0.0
        %3346 = vmatpush1.msra.mxu0 0.0
        %3347 = vmatprep.subr.mxu0 0.0
        %3348 = vmatpush1.msra.mxu0 0.0
        %3349 = vmatprep.mubr.f32.mxu0 0.0
        %3350 = vmatmul.mubr.f32.gmra.mrb[0].mxu0 %v3283
        %v3351 = vpop.f32.mrb[0].mxu0
        %v3352 = vadd.f32 %v3281, %v3351
        %v3353 = vpop.f32.mrb[0].mxu0
        %3354 = vdwg.mxu0
        %vm3355 = vcmask 24576
        %3356 = vst.msk [vmem:[%s1171] sm:$0x1] %vm3355, %v3352
        %3357 = vst.msk [vmem:[#allocation4] sm:$0x1] %vm3061, 0.0
        %3358 = vst.msk [vmem:[#allocation4 + $0x9] sm:$0x1] %vm3061, 0.0
        %v3359 = vpack.c.bf16 %v3037, %v3037
        %vm3360 = vcmask 1041408
        %v3363 = vsel %vm3360, %v3359, 0
        %v3364 = vld [vmem:[%s39] sm:$0xf]
        %v3365 = vld [vmem:[%s39 + $0x4] sm:$0xf]
        %v3366 = vld [vmem:[%s41] sm:$0xf]
        %v3367 = vld [vmem:[%s41 + $0x4] sm:$0xf]
        %v3368 = vld [vmem:[%s41 + $0x8] sm:$0xf]
        %v3369 = vld [vmem:[%s41 + $0xc] sm:$0xf]
        %v3370 = vld [vmem:[%s43] sm:$0x1]
        %v3372 = vlaneseq
        %v3373 = vshrl.u32 %v3372, 7
        %v3374 = vsub.s32 0, %v3373
        %v3375 = vrot.slane %v3370, %v3374
        %v3379 = vunpack.c.l.b16 %v3364
        %v3380 = vunpack.c.l.b16 %v3365
        %v3381 = vpack.c.b16 %v3380, %v3379
        %v3383 = vsel %vm1320, %v3363, 0
        %3385 = vmatprep.subr.bf16.mxu0 0
        %3386 = vmatpush1.bf16.msra.mxu0 %v3381
        %3387 = vmatprep.subr.bf16.mxu0 0
        %3388 = vmatpush1.bf16.msra.mxu0 0
        %3389 = vmatprep.subr.bf16.mxu0 0
        %3390 = vmatpush1.bf16.msra.mxu0 0
        %3391 = vmatprep.subr.bf16.mxu0 0
        %3392 = vmatpush1.bf16.msra.mxu0 0
        %3393 = vmatprep.subr.bf16.mxu0 0
        %3394 = vmatpush1.bf16.msra.mxu0 0
        %3395 = vmatprep.subr.bf16.mxu0 0
        %3396 = vmatpush1.bf16.msra.mxu0 0
        %3397 = vmatprep.subr.bf16.mxu0 0
        %3398 = vmatpush1.bf16.msra.mxu0 0
        %3399 = vmatprep.subr.bf16.mxu0 0
        %3400 = vmatpush1.bf16.msra.mxu0 0
        %3401 = vmatprep.subr.bf16.mxu0 0
        %3402 = vmatpush1.bf16.msra.mxu0 0
        %3403 = vmatprep.subr.bf16.mxu0 0
        %3404 = vmatpush1.bf16.msra.mxu0 0
        %3405 = vmatprep.subr.bf16.mxu0 0
        %3406 = vmatpush1.bf16.msra.mxu0 0
        %3407 = vmatprep.subr.bf16.mxu0 0
        %3408 = vmatpush1.bf16.msra.mxu0 0
        %3409 = vmatprep.subr.bf16.mxu0 0
        %3410 = vmatpush1.bf16.msra.mxu0 0
        %3411 = vmatprep.subr.bf16.mxu0 0
        %3412 = vmatpush1.bf16.msra.mxu0 0
        %3413 = vmatprep.subr.bf16.mxu0 0
        %3414 = vmatpush1.bf16.msra.mxu0 0
        %3415 = vmatprep.subr.bf16.mxu0 0
        %3416 = vmatpush1.bf16.msra.mxu0 0
        %3417 = vmatprep.mubr.bf16.mxu0 0
        %3418 = vmatmul.mubr.bf16.gmra.mrb[0].mxu0 %v3383
        %v3419 = vpop.f32.mrb[0].mxu0
        %v3420 = vadd.f32 %v3375, %v3419
        %v3421 = vpop.f32.mrb[0].mxu0
        %v3422 = vpop.f32.mrb[0].mxu0
        %v3423 = vpop.f32.mrb[0].mxu0
        %3424 = vdwg.mxu0
        %v3425 = vmax.f32 %v3420, 0.0
        %s3426 = scalar_lea.vmem [#allocation4], 1
        %3427 = vst [vmem:[%s3426] ss:$2 sm:$0xf] %v3425
        %v3428 = vshrl.u32 %v3363, 16
        %v3430 = vshll.u32 %v3363, 16
        %v3432 = vrot.slane %v3430, 1
        %v3433 = vor.u32 %v3428, %v3432
        %3434 = vrot.lane.b32.xlu0 %v3433, 16
        %v3435 = vpop.permute.xlu0 %3434
        %v3437 = vsel %vm1320, %v3363, %v3435
        %v3442 = vunpack.c.l.b16 %v3366
        %v3443 = vunpack.c.l.b16 %v3367
        %v3444 = vunpack.c.l.b16 %v3368
        %v3445 = vunpack.c.l.b16 %v3369
        %v3446 = vpack.c.b16 %v3443, %v3442
        %v3447 = vpack.c.b16 %v3445, %v3444
        %v3450 = vsel %vm1323, %v3437, 0
        %3452 = vmatprep.subr.bf16.mxu0 0
        %3453 = vmatpush1.bf16.msra.mxu0 %v3446
        %3454 = vmatprep.subr.bf16.mxu0 0
        %3455 = vmatpush1.bf16.msra.mxu0 %v3447
        %3456 = vmatprep.subr.bf16.mxu0 0
        %3457 = vmatpush1.bf16.msra.mxu0 0
        %3458 = vmatprep.subr.bf16.mxu0 0
        %3459 = vmatpush1.bf16.msra.mxu0 0
        %3460 = vmatprep.subr.bf16.mxu0 0
        %3461 = vmatpush1.bf16.msra.mxu0 0
        %3462 = vmatprep.subr.bf16.mxu0 0
        %3463 = vmatpush1.bf16.msra.mxu0 0
        %3464 = vmatprep.subr.bf16.mxu0 0
        %3465 = vmatpush1.bf16.msra.mxu0 0
        %3466 = vmatprep.subr.bf16.mxu0 0
        %3467 = vmatpush1.bf16.msra.mxu0 0
        %3468 = vmatprep.subr.bf16.mxu0 0
        %3469 = vmatpush1.bf16.msra.mxu0 0
        %3470 = vmatprep.subr.bf16.mxu0 0
        %3471 = vmatpush1.bf16.msra.mxu0 0
        %3472 = vmatprep.subr.bf16.mxu0 0
        %3473 = vmatpush1.bf16.msra.mxu0 0
        %3474 = vmatprep.subr.bf16.mxu0 0
        %3475 = vmatpush1.bf16.msra.mxu0 0
        %3476 = vmatprep.subr.bf16.mxu0 0
        %3477 = vmatpush1.bf16.msra.mxu0 0
        %3478 = vmatprep.subr.bf16.mxu0 0
        %3479 = vmatpush1.bf16.msra.mxu0 0
        %3480 = vmatprep.subr.bf16.mxu0 0
        %3481 = vmatpush1.bf16.msra.mxu0 0
        %3482 = vmatprep.subr.bf16.mxu0 0
        %3483 = vmatpush1.bf16.msra.mxu0 0
        %3484 = vmatprep.mubr.bf16.mxu0 0
        %3485 = vmatmul.mubr.bf16.gmra.mrb[0].mxu0 %v3450
        %v3486 = vpop.f32.mrb[0].mxu0
        %v3487 = vadd.f32 %v3375, %v3486
        %v3488 = vpop.f32.mrb[0].mxu0
        %v3489 = vpop.f32.mrb[0].mxu0
        %v3490 = vpop.f32.mrb[0].mxu0
        %3491 = vdwg.mxu0
        %v3492 = vmax.f32 %v3487, 0.0
        %s3493 = scalar_lea.vmem [#allocation4], 2
        %3494 = vst [vmem:[%s3493] ss:$2 sm:$0xf] %v3492
        %vm3495 = vcmask 124928
        %3496 = vst.msk [vmem:[#allocation5] sm:$0x7] %vm3495, 0.0
        %3497 = vst.msk [vmem:[#allocation5 + $0x13] sm:$0x7] %vm3495, 0.0
        %v3498 = vld [vmem:[#allocation4] sm:$0xff]
        %v3499 = vld [vmem:[#allocation4 + $0x8] sm:$0x3]
        %v3500 = vpack.c.bf16 %v3499, %v3498
        %v3501 = vld [vmem:[%s45] sm:$0xf]
        %v3502 = vld [vmem:[%s45 + $0x4] sm:$0xf]
        %v3503 = vld [vmem:[%s45 + $0x8] sm:$0xf]
        %v3504 = vld [vmem:[%s45 + $0xc] sm:$0xf]
        %v3505 = vld [vmem:[%s45 + $0x10] sm:$0xf]
        %v3506 = vld [vmem:[%s45 + $0x14] sm:$0xf]
        %v3507 = vld [vmem:[%s45 + $0x18] sm:$0xf]
        %v3508 = vld [vmem:[%s45 + $0x1c] sm:$0xf]
        %v3509 = vld [vmem:[%s45 + $0x20] sm:$0xf]
        %v3510 = vld [vmem:[%s45 + $0x24] sm:$0xf]
        %v3511 = vld [vmem:[%s45 + $0x28] sm:$0xf]
        %v3512 = vld [vmem:[%s45 + $0x2c] sm:$0xf]
        %v3513 = vld [vmem:[%s47] sm:$0xf]
        %v3514 = vld [vmem:[%s47 + $0x4] sm:$0xf]
        %v3515 = vld [vmem:[%s47 + $0x8] sm:$0xf]
        %v3516 = vld [vmem:[%s47 + $0xc] sm:$0xf]
        %v3517 = vld [vmem:[%s47 + $0x10] sm:$0xf]
        %v3518 = vld [vmem:[%s47 + $0x14] sm:$0xf]
        %v3519 = vld [vmem:[%s47 + $0x18] sm:$0xf]
        %v3520 = vld [vmem:[%s47 + $0x1c] sm:$0xf]
        %v3521 = vld [vmem:[%s49] sm:$0x1]
        %v3523 = vshrl.u32 %v3500, 16
        %v3525 = vshll.u32 %v3500, 16
        %v3527 = vrot.slane %v3525, 1
        %v3528 = vor.u32 %v3523, %v3527
        %3529 = vrot.lane.b32.xlu0 %v3528, 32
        %v3530 = vpop.permute.xlu0 %3529
        %v3532 = vrot.slane %v3500, 1
        %3533 = vrot.lane.b32.xlu0 %v3532, 64
        %v3534 = vpop.permute.xlu0 %3533
        %v3536 = vsel %vm1323, %v3500, %v3530
        %v3538 = vsel %vm1329, %v3536, %v3534
        %v3540 = vlaneseq
        %v3541 = vshrl.u32 %v3540, 7
        %v3542 = vsub.s32 0, %v3541
        %v3543 = vrot.slane %v3521, %v3542
        %v3557 = vunpack.c.l.b16 %v3501
        %v3558 = vunpack.c.l.b16 %v3502
        %v3559 = vunpack.c.l.b16 %v3503
        %v3560 = vunpack.c.l.b16 %v3504
        %v3561 = vunpack.c.l.b16 %v3505
        %v3562 = vunpack.c.l.b16 %v3506
        %v3563 = vunpack.c.l.b16 %v3507
        %v3564 = vunpack.c.l.b16 %v3508
        %v3565 = vunpack.c.l.b16 %v3509
        %v3566 = vunpack.c.l.b16 %v3510
        %v3567 = vunpack.c.l.b16 %v3511
        %v3568 = vunpack.c.l.b16 %v3512
        %v3569 = vpack.c.b16 %v3558, %v3557
        %v3570 = vpack.c.b16 %v3560, %v3559
        %v3571 = vpack.c.b16 %v3562, %v3561
        %v3572 = vpack.c.b16 %v3564, %v3563
        %v3573 = vpack.c.b16 %v3566, %v3565
        %v3574 = vpack.c.b16 %v3568, %v3567
        %v3581 = vsel %vm1335, %v3538, 0
        %3583 = vmatprep.subr.bf16.mxu0 0
        %3584 = vmatpush1.bf16.msra.mxu0 %v3569
        %3585 = vmatprep.subr.bf16.mxu0 0
        %3586 = vmatpush1.bf16.msra.mxu0 %v3570
        %3587 = vmatprep.subr.bf16.mxu0 0
        %3588 = vmatpush1.bf16.msra.mxu0 %v3571
        %3589 = vmatprep.subr.bf16.mxu0 0
        %3590 = vmatpush1.bf16.msra.mxu0 %v3572
        %3591 = vmatprep.subr.bf16.mxu0 0
        %3592 = vmatpush1.bf16.msra.mxu0 %v3573
        %3593 = vmatprep.subr.bf16.mxu0 0
        %3594 = vmatpush1.bf16.msra.mxu0 %v3574
        %3595 = vmatprep.subr.bf16.mxu0 0
        %3596 = vmatpush1.bf16.msra.mxu0 0
        %3597 = vmatprep.subr.bf16.mxu0 0
        %3598 = vmatpush1.bf16.msra.mxu0 0
        %3599 = vmatprep.subr.bf16.mxu0 0
        %3600 = vmatpush1.bf16.msra.mxu0 0
        %3601 = vmatprep.subr.bf16.mxu0 0
        %3602 = vmatpush1.bf16.msra.mxu0 0
        %3603 = vmatprep.subr.bf16.mxu0 0
        %3604 = vmatpush1.bf16.msra.mxu0 0
        %3605 = vmatprep.subr.bf16.mxu0 0
        %3606 = vmatpush1.bf16.msra.mxu0 0
        %3607 = vmatprep.subr.bf16.mxu0 0
        %3608 = vmatpush1.bf16.msra.mxu0 0
        %3609 = vmatprep.subr.bf16.mxu0 0
        %3610 = vmatpush1.bf16.msra.mxu0 0
        %3611 = vmatprep.subr.bf16.mxu0 0
        %3612 = vmatpush1.bf16.msra.mxu0 0
        %3613 = vmatprep.subr.bf16.mxu0 0
        %3614 = vmatpush1.bf16.msra.mxu0 0
        %3615 = vmatprep.mubr.bf16.mxu0 0
        %3616 = vmatmul.mubr.bf16.gmra.mrb[0].mxu0 %v3581
        %v3617 = vpop.f32.mrb[0].mxu0
        %v3618 = vadd.f32 %v3543, %v3617
        %v3619 = vpop.f32.mrb[0].mxu0
        %v3620 = vpop.f32.mrb[0].mxu0
        %v3621 = vpop.f32.mrb[0].mxu0
        %3622 = vdwg.mxu0
        %v3623 = vmax.f32 %v3618, 0.0
        %s3624 = scalar_lea.vmem [#allocation5], 3
        %3625 = vst [vmem:[%s3624] ss:$2 sm:$0xff] %v3623
        %v3626 = vshrl.u32 %v3536, 16
        %v3628 = vshll.u32 %v3536, 16
        %v3630 = vrot.slane %v3628, 1
        %v3631 = vor.u32 %v3626, %v3630
        %v3640 = vunpack.c.l.b16 %v3513
        %v3641 = vunpack.c.l.b16 %v3514
        %v3642 = vunpack.c.l.b16 %v3515
        %v3643 = vunpack.c.l.b16 %v3516
        %v3644 = vunpack.c.l.b16 %v3517
        %v3645 = vunpack.c.l.b16 %v3518
        %v3646 = vunpack.c.l.b16 %v3519
        %v3647 = vunpack.c.l.b16 %v3520
        %v3648 = vpack.c.b16 %v3641, %v3640
        %v3649 = vpack.c.b16 %v3643, %v3642
        %v3650 = vpack.c.b16 %v3645, %v3644
        %v3651 = vpack.c.b16 %v3647, %v3646
        %v3657 = vsel %vm1329, %v3631, 0
        %3659 = vmatprep.subr.bf16.mxu0 0
        %3660 = vmatpush1.bf16.msra.mxu0 %v3648
        %3661 = vmatprep.subr.bf16.mxu0 0
        %3662 = vmatpush1.bf16.msra.mxu0 %v3649
        %3663 = vmatprep.subr.bf16.mxu0 0
        %3664 = vmatpush1.bf16.msra.mxu0 %v3650
        %3665 = vmatprep.subr.bf16.mxu0 0
        %3666 = vmatpush1.bf16.msra.mxu0 %v3651
        %3667 = vmatprep.subr.bf16.mxu0 0
        %3668 = vmatpush1.bf16.msra.mxu0 0
        %3669 = vmatprep.subr.bf16.mxu0 0
        %3670 = vmatpush1.bf16.msra.mxu0 0
        %3671 = vmatprep.subr.bf16.mxu0 0
        %3672 = vmatpush1.bf16.msra.mxu0 0
        %3673 = vmatprep.subr.bf16.mxu0 0
        %3674 = vmatpush1.bf16.msra.mxu0 0
        %3675 = vmatprep.subr.bf16.mxu0 0
        %3676 = vmatpush1.bf16.msra.mxu0 0
        %3677 = vmatprep.subr.bf16.mxu0 0
        %3678 = vmatpush1.bf16.msra.mxu0 0
        %3679 = vmatprep.subr.bf16.mxu0 0
        %3680 = vmatpush1.bf16.msra.mxu0 0
        %3681 = vmatprep.subr.bf16.mxu0 0
        %3682 = vmatpush1.bf16.msra.mxu0 0
        %3683 = vmatprep.subr.bf16.mxu0 0
        %3684 = vmatpush1.bf16.msra.mxu0 0
        %3685 = vmatprep.subr.bf16.mxu0 0
        %3686 = vmatpush1.bf16.msra.mxu0 0
        %3687 = vmatprep.subr.bf16.mxu0 0
        %3688 = vmatpush1.bf16.msra.mxu0 0
        %3689 = vmatprep.subr.bf16.mxu0 0
        %3690 = vmatpush1.bf16.msra.mxu0 0
        %3691 = vmatprep.mubr.bf16.mxu0 0
        %3692 = vmatmul.mubr.bf16.gmra.mrb[0].mxu0 %v3657
        %v3693 = vpop.f32.mrb[0].mxu0
        %v3694 = vadd.f32 %v3543, %v3693
        %v3695 = vpop.f32.mrb[0].mxu0
        %v3696 = vpop.f32.mrb[0].mxu0
        %v3697 = vpop.f32.mrb[0].mxu0
        %3698 = vdwg.mxu0
        %v3699 = vmax.f32 %v3694, 0.0
        %s3700 = scalar_lea.vmem [#allocation5], 4
        %3701 = vst [vmem:[%s3700] ss:$2 sm:$0xff] %v3699
        %v3702 = vld [vmem:[#allocation5] sm:$0xff]
        %v3703 = vld [vmem:[#allocation5 + $0x8] sm:$0xff]
        %v3704 = vld [vmem:[#allocation5 + $0x10] sm:$0x3f]
        %v3705 = vpack.c.bf16 %v3703, %v3702
        %v3706 = vpack.c.bf16 %v3704, %v3704
        %v3708 = vshrl.u32 %v3705, 16
        %v3710 = vshll.u32 %v3705, 16
        %v3712 = vrot.slane %v3710, 1
        %v3713 = vor.u32 %v3708, %v3712
        %v3715 = vshll.u32 %v3706, 16
        %v3717 = vrot.slane %v3715, 1
        %v3718 = vsel %vm1263, %v3713, %v3717
        %3719 = vrot.lane.b32.xlu0 %v3718, 16
        %v3720 = vpop.permute.xlu0 %3719
        %v3723 = vrot.slane %v3705, 1
        %v3724 = vrot.slane %v3706, 1
        %v3725 = vsel %vm1280, %v3723, %v3724
        %3726 = vrot.lane.b32.xlu0 %v3725, 32
        %v3727 = vpop.permute.xlu0 %3726
        %v3728 = vrot.slane %v3708, 1
        %v3729 = vrot.slane %v3710, 2
        %v3730 = vor.u32 %v3728, %v3729
        %v3731 = vshrl.u32 %v3706, 16
        %v3733 = vrot.slane %v3731, 1
        %v3734 = vrot.slane %v3715, 2
        %v3735 = vor.u32 %v3733, %v3734
        %v3736 = vsel %vm1286, %v3730, %v3735
        %3737 = vrot.lane.b32.xlu0 %v3736, 48
        %v3738 = vpop.permute.xlu0 %3737
        %v3739 = vrot.slane %v3705, 2
        %v3740 = vrot.slane %v3706, 2
        %v3741 = vsel %vm1298, %v3739, %v3740
        %3742 = vrot.lane.b32.xlu0 %v3741, 64
        %v3743 = vpop.permute.xlu0 %3742
        %v3744 = vrot.slane %v3708, 2
        %v3745 = vrot.slane %v3710, 3
        %v3746 = vor.u32 %v3744, %v3745
        %v3747 = vrot.slane %v3731, 2
        %v3748 = vrot.slane %v3715, 3
        %v3749 = vor.u32 %v3747, %v3748
        %v3750 = vsel %vm1304, %v3746, %v3749
        %3751 = vrot.lane.b32.xlu0 %v3750, 80
        %v3752 = vpop.permute.xlu0 %3751
        %v3753 = vrot.slane %v3705, 3
        %v3754 = vrot.slane %v3706, 3
        %v3755 = vsel %vm1314, %v3753, %v3754
        %3756 = vrot.lane.b32.xlu0 %v3755, 96
        %v3757 = vpop.permute.xlu0 %3756
        %v3759 = vsel %vm1320, %v3705, %v3720
        %v3761 = vsel %vm1323, %v3759, %v3727
        %v3763 = vsel %vm1326, %v3761, %v3738
        %v3765 = vsel %vm1329, %v3763, %v3743
        %v3767 = vsel %vm1332, %v3765, %v3752
        %v3769 = vsel %vm1335, %v3767, %v3757
        %v3770 = vld [vmem:[%s51] sm:$0xf]
        %v3771 = vld [vmem:[%s51 + $0x4] sm:$0xf]
        %v3772 = vld [vmem:[%s51 + $0x8] sm:$0xf]
        %v3773 = vld [vmem:[%s51 + $0xc] sm:$0xf]
        %v3774 = vld [vmem:[%s51 + $0x10] sm:$0xf]
        %v3775 = vld [vmem:[%s51 + $0x14] sm:$0xf]
        %v3776 = vld [vmem:[%s51 + $0x18] sm:$0xf]
        %v3777 = vld [vmem:[%s51 + $0x1c] sm:$0xf]
        %v3778 = vld [vmem:[%s51 + $0x20] sm:$0xf]
        %v3779 = vld [vmem:[%s51 + $0x24] sm:$0xf]
        %v3780 = vld [vmem:[%s51 + $0x28] sm:$0xf]
        %v3781 = vld [vmem:[%s51 + $0x2c] sm:$0xf]
        %v3782 = vld [vmem:[%s51 + $0x30] sm:$0xf]
        %v3783 = vld [vmem:[%s51 + $0x34] sm:$0xf]
        %v3784 = vld [vmem:[%s53] sm:$0x1]
        %v3786 = vlaneseq
        %v3787 = vshrl.u32 %v3786, 7
        %v3788 = vsub.s32 0, %v3787
        %v3789 = vrot.slane %v3784, %v3788
        %v3805 = vunpack.c.l.b16 %v3770
        %v3806 = vunpack.c.l.b16 %v3771
        %v3807 = vunpack.c.l.b16 %v3772
        %v3808 = vunpack.c.l.b16 %v3773
        %v3809 = vunpack.c.l.b16 %v3774
        %v3810 = vunpack.c.l.b16 %v3775
        %v3811 = vunpack.c.l.b16 %v3776
        %v3812 = vunpack.c.l.b16 %v3777
        %v3813 = vunpack.c.l.b16 %v3778
        %v3814 = vunpack.c.l.b16 %v3779
        %v3815 = vunpack.c.l.b16 %v3780
        %v3816 = vunpack.c.l.b16 %v3781
        %v3817 = vunpack.c.l.b16 %v3782
        %v3818 = vunpack.c.l.b16 %v3783
        %v3819 = vpack.c.b16 %v3806, %v3805
        %v3820 = vpack.c.b16 %v3808, %v3807
        %v3821 = vpack.c.b16 %v3810, %v3809
        %v3822 = vpack.c.b16 %v3812, %v3811
        %v3823 = vpack.c.b16 %v3814, %v3813
        %v3824 = vpack.c.b16 %v3816, %v3815
        %v3825 = vpack.c.b16 %v3818, %v3817
        %v3833 = vsel %vm1386, %v3769, 0
        %3835 = vmatprep.subr.bf16.mxu0 0
        %3836 = vmatpush1.bf16.msra.mxu0 %v3819
        %3837 = vmatprep.subr.bf16.mxu0 0
        %3838 = vmatpush1.bf16.msra.mxu0 %v3820
        %3839 = vmatprep.subr.bf16.mxu0 0
        %3840 = vmatpush1.bf16.msra.mxu0 %v3821
        %3841 = vmatprep.subr.bf16.mxu0 0
        %3842 = vmatpush1.bf16.msra.mxu0 %v3822
        %3843 = vmatprep.subr.bf16.mxu0 0
        %3844 = vmatpush1.bf16.msra.mxu0 %v3823
        %3845 = vmatprep.subr.bf16.mxu0 0
        %3846 = vmatpush1.bf16.msra.mxu0 %v3824
        %3847 = vmatprep.subr.bf16.mxu0 0
        %3848 = vmatpush1.bf16.msra.mxu0 %v3825
        %3849 = vmatprep.subr.bf16.mxu0 0
        %3850 = vmatpush1.bf16.msra.mxu0 0
        %3851 = vmatprep.subr.bf16.mxu0 0
        %3852 = vmatpush1.bf16.msra.mxu0 0
        %3853 = vmatprep.subr.bf16.mxu0 0
        %3854 = vmatpush1.bf16.msra.mxu0 0
        %3855 = vmatprep.subr.bf16.mxu0 0
        %3856 = vmatpush1.bf16.msra.mxu0 0
        %3857 = vmatprep.subr.bf16.mxu0 0
        %3858 = vmatpush1.bf16.msra.mxu0 0
        %3859 = vmatprep.subr.bf16.mxu0 0
        %3860 = vmatpush1.bf16.msra.mxu0 0
        %3861 = vmatprep.subr.bf16.mxu0 0
        %3862 = vmatpush1.bf16.msra.mxu0 0
        %3863 = vmatprep.subr.bf16.mxu0 0
        %3864 = vmatpush1.bf16.msra.mxu0 0
        %3865 = vmatprep.subr.bf16.mxu0 0
        %3866 = vmatpush1.bf16.msra.mxu0 0
        %3867 = vmatprep.mubr.bf16.mxu0 0
        %3868 = vmatmul.mubr.bf16.gmra.mrb[0].mxu0 %v3833
        %v3869 = vpop.f32.mrb[0].mxu0
        %v3870 = vadd.f32 %v3789, %v3869
        %v3871 = vpop.f32.mrb[0].mxu0
        %v3872 = vpop.f32.mrb[0].mxu0
        %v3873 = vadd.f32 %v3789, %v3872
        %v3874 = vpop.f32.mrb[0].mxu0
        %3875 = vdwg.mxu0
        %3876 = vxpose.xlu0.b32.start [1/16] %v3870, 128
        %3877 = vxpose.xlu0.b32.cont [2/16] %v3873, 128
        %3878 = vxpose.xlu0.b32.cont [3/16] 0.0, 128
        %3879 = vxpose.xlu0.b32.cont [4/16] 0.0, 128
        %3880 = vxpose.xlu0.b32.cont [5/16] 0.0, 128
        %3881 = vxpose.xlu0.b32.cont [6/16] 0.0, 128
        %3882 = vxpose.xlu0.b32.cont [7/16] 0.0, 128
        %3883 = vxpose.xlu0.b32.cont [8/16] 0.0, 128
        %3884 = vxpose.xlu0.b32.cont [9/16] 0.0, 128
        %3885 = vxpose.xlu0.b32.cont [10/16] 0.0, 128
        %3886 = vxpose.xlu0.b32.cont [11/16] 0.0, 128
        %3887 = vxpose.xlu0.b32.cont [12/16] 0.0, 128
        %3888 = vxpose.xlu0.b32.cont [13/16] 0.0, 128
        %3889 = vxpose.xlu0.b32.cont [14/16] 0.0, 128
        %3890 = vxpose.xlu0.b32.cont [15/16] 0.0, 128
        %3891 = vxpose.xlu0.b32.end [16/16] 0.0, 128
        %v3892 = vpop.trf.xlu0
        %v3893 = vpop.trf.xlu0
        %v3894 = vpop.trf.xlu0
        %v3895 = vpop.trf.xlu0
        %v3896 = vpop.trf.xlu0
        %v3897 = vpop.trf.xlu0
        %v3898 = vpop.trf.xlu0
        %v3899 = vpop.trf.xlu0
        %v3900 = vpop.trf.xlu0
        %v3901 = vpop.trf.xlu0
        %v3902 = vpop.trf.xlu0
        %v3903 = vpop.trf.xlu0
        %v3904 = vpop.trf.xlu0
        %v3905 = vpop.trf.xlu0
        %v3906 = vpop.trf.xlu0
        %v3907 = vpop.trf.xlu0
        %3908 = vst.msk [vmem:[%s1151] sm:$0xff] %vm1320, %v3892
        %3909 = vst.msk [vmem:[%s1151 + $0x8] sm:$0xff] %vm1320, %v3893
        %s3910 = sand.u32 %s801, 1
        %s3911 = scalar_lea.sflag [#allocation7], %s3910
        %s3912 = sand.u32 %s801, 1
        %s3913 = smul.addr %s3912, 16
        %s3914 = scalar_lea.vmem [#allocation6], %s3913
        %p3915 = scmp.lt.s32.totalorder %s95, 1
        %s3916 = scalar_select %p3915, %s95, 1
        %s3917 = smul.addr %s3916, 2
        %s3918 = smul.addr %s3917, 8
        %s3919 = scalar_lea.vmem %s69, %s3918
        %s3920 = sand.u32 %s95, 1
        %s3921 = scalar_lea.sflag [#allocation9], %s3920
        %s3922 = sand.u32 %s853, 1
        %s3923 = smul.addr %s3922, 4
        %s3924 = scalar_lea.vmem [#allocation8], %s3923
        %s3925 = sand.u32 %s95, 1
        %s3926 = scalar_lea.sflag [#allocation9], %s3925
        %s3927 = sand.u32 %s879, 1
        %s3928 = scalar_lea.vmem [#allocation10], %s3927
        %p3929 = scmp.lt.s32.totalorder %s95, 1
        %s3930 = scalar_select %p3929, %s95, 1
        %s3931 = scalar_lea.vmem %s75, %s3930
        %p3932 = scmp.lt.s32.totalorder %s95, 1
        %s3933 = scalar_select %p3932, %s95, 1
        %s3934 = scalar_lea.vmem %s77, %s3933
        // Predicated region
        $region153: #{forward.1} parent=151 // pred_check
          %p3935 = pneg %p811
        $region154: #{forward.1} parent=151 // pred_check_branch
          %3937 = sbr.rel (%p3935) target = $region156
        $region155: #{forward.1} parent=151 // pred_region
          %s3939 = ssub.s32 256, 256
          %3940 = vsyncadd %s3911, %s3939
          %s3941 = smul.addr %s95, 2
          %s3942 = smul.addr %s3941, 128
          %s3943 = scalar_lea.hbm %s67, %s3942
          %s3944 = sshll.u32 %s3914, 4
          %s3945 = int_to_ptr.vmem [resolvable:$true] %s3944
          %3950 = dma.vmem_to_hbm [thread:$0]  %s3945, 256, %s3943, %s3911, 128, 128, 8
        $region156: #{forward.1} parent=151 // pred_fallthru
          _
        // Predicated region
        $region157: #{forward.1} parent=151 // pred_check
          %p3951 = pneg %p837
        $region158: #{forward.1} parent=151 // pred_check_branch
          %3953 = sbr.rel (%p3951) target = $region160
        $region159: #{forward.1} parent=151 // pred_region
          _
        $region160: #{forward.1} parent=151 // pred_fallthru
          _
        // Predicated region
        $region161: #{forward.1} parent=151 // pred_check
          %p3954 = pneg %p863
        $region162: #{forward.1} parent=151 // pred_check_branch
          %3956 = sbr.rel (%p3954) target = $region164
        $region163: #{forward.1} parent=151 // pred_region
          %s3958 = ssub.s32 64, 64
          %3959 = vsyncadd %s3921, %s3958
          %s3960 = smul.addr %s95, 64
          %s3961 = scalar_lea.hbm %s71, %s3960
          %s3963 = sshll.u32 %s3924, 4
          %s3964 = int_to_ptr.vmem [resolvable:$true] %s3963
          %3966 = dma.vmem_to_hbm [thread:$0]  %s3964, 64, %s3961, %s3921
        $region164: #{forward.1} parent=151 // pred_fallthru
          _
        // Predicated region
        $region165: #{forward.1} parent=151 // pred_check
          %p3967 = pneg %p889
        $region166: #{forward.1} parent=151 // pred_check_branch
          %3969 = sbr.rel (%p3967) target = $region168
        $region167: #{forward.1} parent=151 // pred_region
          %s3971 = ssub.s32 16, 16
          %3972 = vsyncadd %s3926, %s3971
          %s3973 = smul.addr %s95, 16
          %s3974 = scalar_lea.hbm %s73, %s3973
          %s3976 = sshll.u32 %s3928, 4
          %s3977 = int_to_ptr.vmem [resolvable:$true] %s3976
          %3979 = dma.vmem_to_hbm [thread:$0]  %s3977, 16, %s3974, %s3926
        $region168: #{forward.1} parent=151 // pred_fallthru
          _
        // Predicated region
        $region169: #{forward.1} parent=151 // pred_check
          %p3980 = pneg %p915
        $region170: #{forward.1} parent=151 // pred_check_branch
          %3982 = sbr.rel (%p3980) target = $region172
        $region171: #{forward.1} parent=151 // pred_region
          _
        $region172: #{forward.1} parent=151 // pred_fallthru
          _
        // Predicated region
        $region173: #{forward.1} parent=151 // pred_check
          %p3983 = pneg %p941
        $region174: #{forward.1} parent=151 // pred_check_branch
          %3985 = sbr.rel (%p3983) target = $region176
        $region175: #{forward.1} parent=151 // pred_region
          _
        $region176: #{forward.1} parent=151 // pred_fallthru
          _
      $region152: #{forward.1} parent=5 // pred_fallthru
        _
      %p3986 = scmp.le.s32.totalorder 2, %s90
      // Predicated region
      $region177: #{forward.1} parent=5 // pred_check
        %p3987 = pneg %p3986
      $region178: #{forward.1} parent=5 // pred_check_branch
        %3989 = sbr.rel (%p3987) target = $region180
      $region179: #{forward.1} parent=5 // pred_region
        %s3990 = ssub.s32 %s90, 2
        // Predicated region
        $region181: #{forward.1} parent=179 // pred_check
          %p3991 = pneg %p817
        $region182: #{forward.1} parent=179 // pred_check_branch
          %3993 = sbr.rel (%p3991) target = $region184
        $region183: #{forward.1} parent=179 // pred_region
          %s3994 = sand.u32 %s802, 1
          %s3995 = scalar_lea.sflag [#allocation7], %s3994
          %s3996 = sand.u32 %s802, 1
          %s3997 = smul.addr %s3996, 16
          %s3998 = scalar_lea.vmem [#allocation6], %s3997
          %3999 = dma.done %s3995, 256
        $region184: #{forward.1} parent=179 // pred_fallthru
          _
        // Predicated region
        $region185: #{forward.1} parent=179 // pred_check
          %p4000 = pneg %p843
        $region186: #{forward.1} parent=179 // pred_check_branch
          %4002 = sbr.rel (%p4000) target = $region188
        $region187: #{forward.1} parent=179 // pred_region
          %p4003 = scmp.lt.s32.totalorder %s96, 1
          %s4004 = scalar_select %p4003, %s96, 1
          %s4005 = smul.addr %s4004, 2
          %s4006 = smul.addr %s4005, 8
          %s4007 = scalar_lea.vmem %s69, %s4006
        $region188: #{forward.1} parent=179 // pred_fallthru
          _
        // Predicated region
        $region189: #{forward.1} parent=179 // pred_check
          %p4008 = pneg %p869
        $region190: #{forward.1} parent=179 // pred_check_branch
          %4010 = sbr.rel (%p4008) target = $region192
        $region191: #{forward.1} parent=179 // pred_region
          %s4011 = sand.u32 %s96, 1
          %s4012 = scalar_lea.sflag [#allocation9], %s4011
          %s4013 = sand.u32 %s854, 1
          %s4014 = smul.addr %s4013, 4
          %s4015 = scalar_lea.vmem [#allocation8], %s4014
          %4016 = dma.done %s4012, 64
        $region192: #{forward.1} parent=179 // pred_fallthru
          _
        // Predicated region
        $region193: #{forward.1} parent=179 // pred_check
          %p4017 = pneg %p895
        $region194: #{forward.1} parent=179 // pred_check_branch
          %4019 = sbr.rel (%p4017) target = $region196
        $region195: #{forward.1} parent=179 // pred_region
          %s4020 = sand.u32 %s96, 1
          %s4021 = scalar_lea.sflag [#allocation9], %s4020
          %s4022 = sand.u32 %s880, 1
          %s4023 = scalar_lea.vmem [#allocation10], %s4022
          %4024 = dma.done %s4021, 16
        $region196: #{forward.1} parent=179 // pred_fallthru
          _
        // Predicated region
        $region197: #{forward.1} parent=179 // pred_check
          %p4025 = pneg %p921
        $region198: #{forward.1} parent=179 // pred_check_branch
          %4027 = sbr.rel (%p4025) target = $region200
        $region199: #{forward.1} parent=179 // pred_region
          %p4028 = scmp.lt.s32.totalorder %s96, 1
          %s4029 = scalar_select %p4028, %s96, 1
          %s4030 = scalar_lea.vmem %s75, %s4029
        $region200: #{forward.1} parent=179 // pred_fallthru
          _
        // Predicated region
        $region201: #{forward.1} parent=179 // pred_check
          %p4031 = pneg %p947
        $region202: #{forward.1} parent=179 // pred_check_branch
          %4033 = sbr.rel (%p4031) target = $region204
        $region203: #{forward.1} parent=179 // pred_region
          %p4034 = scmp.lt.s32.totalorder %s96, 1
          %s4035 = scalar_select %p4034, %s96, 1
          %s4036 = scalar_lea.vmem %s77, %s4035
        $region204: #{forward.1} parent=179 // pred_fallthru
          _
      $region180: #{forward.1} parent=5 // pred_fallthru
        _
    $region6: #{forward.1} parent=1 // loop_footer
      %s94 = sadd.s32 1, %s90
    $region7: #{forward.1} parent=1 // loop_footer_branch
      %89 = sbr.rel target = $region3
    $region8: #{forward.1} parent=1 // loop_exit
      _
    %4037 = vsyncpa [#allocation7], 1
    %s4038 = scalar_lea.sflag [#allocation7], 1
    %4039 = vsyncpa %s4038, 1
    %4040 = vsyncpa [#allocation9], 1
    %s4041 = scalar_lea.sflag [#allocation9], 1
    %4042 = vsyncpa %s4041, 1

</llo_original>
